<compile_context>
chip_gen: v7x
topology: tpu7x:2x2x1
jax: 0.10.0
libtpu: 0.0.40
codegen_flags: <defaults>
</compile_context>

<pallas_src>
import functools

import jax
import jax.numpy as jnp
from jax.experimental import pallas as pl
from jax.experimental.pallas import tpu as pltpu


# ----------------------------- tiling helpers -----------------------------

def _pick_tile(dim, pref, align):
    """Largest divisor of `dim` that is <= pref and a multiple of `align`;
    falls back to the full dim (full-extent blocks are always legal)."""
    if dim <= pref:
        return dim
    t = (pref // align) * align
    while t >= align:
        if dim % t == 0:
            return t
        t -= align
    return dim


_MM_PARAMS = pltpu.CompilerParams(
    dimension_semantics=("parallel", "parallel", "arbitrary"),
    vmem_limit_bytes=48 * 1024 * 1024,   # safe on v7x (64 MiB physical VMEM)
)


# ----------------------------- matmul kernels -----------------------------

def _mm_kernel(x_ref, w_ref, o_ref, acc_ref):
    @pl.when(pl.program_id(2) == 0)
    def _():
        acc_ref[...] = jnp.zeros_like(acc_ref)
    acc_ref[...] += jnp.dot(x_ref[...], w_ref[...],
                            preferred_element_type=jnp.float32)

    @pl.when(pl.program_id(2) == pl.num_programs(2) - 1)
    def _():
        o_ref[...] = acc_ref[...].astype(o_ref.dtype)


def pallas_matmul(x, w, *, tm=256, tn=512, tk=512):
    """x: [M, K] @ w: [K, N] -> [M, N] f32.  bf16 operands, f32 accumulation."""
    M, K = x.shape
    K2, N = w.shape
    assert K == K2
    x = x.astype(jnp.bfloat16)
    w = w.astype(jnp.bfloat16)
    tm = _pick_tile(M, tm, 8)
    tn = _pick_tile(N, tn, 128)
    tk = _pick_tile(K, tk, 128)
    return pl.pallas_call(
        _mm_kernel,
        grid=(M // tm, N // tn, K // tk),
        in_specs=[pl.BlockSpec((tm, tk), lambda i, j, k: (i, k)),
                  pl.BlockSpec((tk, tn), lambda i, j, k: (k, j))],
        out_specs=pl.BlockSpec((tm, tn), lambda i, j, k: (i, j)),
        out_shape=jax.ShapeDtypeStruct((M, N), jnp.float32),
        scratch_shapes=[pltpu.VMEM((tm, tn), jnp.float32)],
        compiler_params=_MM_PARAMS,
    )(x, w)


def _mm2_kernel(x1_ref, x2_ref, w1_ref, w2_ref, o_ref, acc_ref):
    @pl.when(pl.program_id(2) == 0)
    def _():
        acc_ref[...] = jnp.zeros_like(acc_ref)
    acc_ref[...] += jnp.dot(x1_ref[...], w1_ref[...],
                            preferred_element_type=jnp.float32)
    acc_ref[...] += jnp.dot(x2_ref[...], w2_ref[...],
                            preferred_element_type=jnp.float32)

    @pl.when(pl.program_id(2) == pl.num_programs(2) - 1)
    def _():
        o_ref[...] = acc_ref[...].astype(o_ref.dtype)


def pallas_dual_matmul(x1, x2, w1, w2, *, tm=256, tn=512, tk=512):
    """x1@w1 + x2@w2 in one kernel (token-shift folded into w2)."""
    M, K = x1.shape
    _, N = w1.shape
    x1 = x1.astype(jnp.bfloat16)
    x2 = x2.astype(jnp.bfloat16)
    w1 = w1.astype(jnp.bfloat16)
    w2 = w2.astype(jnp.bfloat16)
    tm = _pick_tile(M, tm, 8)
    tn = _pick_tile(N, tn, 128)
    tk = _pick_tile(K, tk, 128)
    x_spec = pl.BlockSpec((tm, tk), lambda i, j, k: (i, k))
    w_spec = pl.BlockSpec((tk, tn), lambda i, j, k: (k, j))
    return pl.pallas_call(
        _mm2_kernel,
        grid=(M // tm, N // tn, K // tk),
        in_specs=[x_spec, x_spec, w_spec, w_spec],
        out_specs=pl.BlockSpec((tm, tn), lambda i, j, k: (i, j)),
        out_shape=jax.ShapeDtypeStruct((M, N), jnp.float32),
        scratch_shapes=[pltpu.VMEM((tm, tn), jnp.float32)],
        compiler_params=_MM_PARAMS,
    )(x1, x2, w1, w2)


# --------------------------- fused LoRA kernel -----------------------------

def _lora_kernel(x_ref, xx_ref, w1_ref, w1s_ref, w2_ref, o_ref, *, act):
    # h = act(x @ w1 + xx @ (mix*w1));  o = h @ w2.  All in one launch, the tiny
    # LoRA intermediate never round-trips through HBM.
    h = jnp.dot(x_ref[...], w1_ref[...], preferred_element_type=jnp.float32)
    h = h + jnp.dot(xx_ref[...], w1s_ref[...], preferred_element_type=jnp.float32)
    if act == "tanh":
        h = jnp.tanh(h)
    elif act == "sigmoid":
        h = jax.nn.sigmoid(h)
    o_ref[...] = jnp.dot(h.astype(w2_ref.dtype), w2_ref[...],
                         preferred_element_type=jnp.float32)


def pallas_lora(x, xx, w1, w1s, w2, act="none", *, tm=256):
    M, C = x.shape
    D = w1.shape[1]
    Co = w2.shape[1]
    x = x.astype(jnp.bfloat16)
    xx = xx.astype(jnp.bfloat16)
    w1 = w1.astype(jnp.bfloat16)
    w1s = w1s.astype(jnp.bfloat16)
    w2 = w2.astype(jnp.bfloat16)
    tm = _pick_tile(M, tm, 8)
    return pl.pallas_call(
        functools.partial(_lora_kernel, act=act),
        grid=(M // tm,),
        in_specs=[pl.BlockSpec((tm, C), lambda i: (i, 0)),
                  pl.BlockSpec((tm, C), lambda i: (i, 0)),
                  pl.BlockSpec((C, D), lambda i: (0, 0)),
                  pl.BlockSpec((C, D), lambda i: (0, 0)),
                  pl.BlockSpec((D, Co), lambda i: (0, 0))],
        out_specs=pl.BlockSpec((tm, Co), lambda i: (i, 0)),
        out_shape=jax.ShapeDtypeStruct((M, Co), jnp.float32),
        compiler_params=pltpu.CompilerParams(
            dimension_semantics=("parallel",),
            vmem_limit_bytes=48 * 1024 * 1024),
    )(x, xx, w1, w1s, w2)


# ------------------------------ norm kernels -------------------------------

def _ln_kernel(x_ref, g_ref, b_ref, o_ref, *, eps):
    x = x_ref[...].astype(jnp.float32)                 # (R, C)
    mean = jnp.mean(x, axis=-1, keepdims=True)
    var = jnp.mean(jnp.square(x - mean), axis=-1, keepdims=True)
    y = (x - mean) * jax.lax.rsqrt(var + eps)
    o_ref[...] = (y * g_ref[...] + b_ref[...]).astype(o_ref.dtype)


def layernorm(x, weight, bias, eps=1e-5, *, rows=256):
    """PyTorch nn.LayerNorm(C) over last dim of [..., C]."""
    shp = x.shape
    C = shp[-1]
    x2 = x.reshape(-1, C)
    M = x2.shape[0]
    tm = _pick_tile(M, rows, 8)
    out = pl.pallas_call(
        functools.partial(_ln_kernel, eps=eps),
        grid=(M // tm,),
        in_specs=[pl.BlockSpec((tm, C), lambda i: (i, 0)),
                  pl.BlockSpec((1, C), lambda i: (0, 0)),   # gamma: no HBM broadcast
                  pl.BlockSpec((1, C), lambda i: (0, 0))],  # beta
        out_specs=pl.BlockSpec((tm, C), lambda i: (i, 0)),
        out_shape=jax.ShapeDtypeStruct((M, C), jnp.float32),
        compiler_params=pltpu.CompilerParams(dimension_semantics=("parallel",)),
    )(x2, weight.reshape(1, C), bias.reshape(1, C))
    return out.reshape(shp)


def _gn_kernel(x_ref, g_ref, b_ref, o_ref, *, H, eps):
    # Lane-dense GroupNorm: data stays [R, C]; per-head stats via static head
    # slices, recombined with a lane concat so the final store is unmasked.
    x = x_ref[...].astype(jnp.float32)                 # (R, C)
    C = x.shape[-1]
    N = C // H
    parts = []
    for h in range(H):                                 # static unroll over heads
        xh = x[:, h * N:(h + 1) * N]
        mean = jnp.mean(xh, axis=-1, keepdims=True)
        var = jnp.mean(jnp.square(xh - mean), axis=-1, keepdims=True)
        parts.append((xh - mean) * jax.lax.rsqrt(var + eps))
    y = jnp.concatenate(parts, axis=-1)                # (R, C)
    o_ref[...] = (y * g_ref[...] + b_ref[...]).astype(o_ref.dtype)


def groupnorm_heads(x, weight, bias, H, eps, *, rows=256):
    """PyTorch nn.GroupNorm(H, C) on x: [M, C] with C = H*N."""
    M, C = x.shape
    tm = _pick_tile(M, rows, 8)
    return pl.pallas_call(
        functools.partial(_gn_kernel, H=H, eps=eps),
        grid=(M // tm,),
        in_specs=[pl.BlockSpec((tm, C), lambda i: (i, 0)),
                  pl.BlockSpec((1, C), lambda i: (0, 0)),
                  pl.BlockSpec((1, C), lambda i: (0, 0))],
        out_specs=pl.BlockSpec((tm, C), lambda i: (i, 0)),
        out_shape=jax.ShapeDtypeStruct((M, C), jnp.float32),
        compiler_params=pltpu.CompilerParams(dimension_semantics=("parallel",)),
    )(x, weight.reshape(1, C), bias.reshape(1, C))


# ------------------------------- WKV7 kernel -------------------------------

_WKV_UNROLL_T = 64  # fully unroll the serial loop for short sequences


def _wkv7_kernel(r_ref, w_ref, k_ref, v_ref, a_ref, b_ref, s0_ref,
                 out_ref, sout_ref):
    """One (batch, head) slice.  Seq refs: (1, T, N); state refs: (1, N, N)."""
    T = r_ref.shape[1]

    # Hoist the decay transform: one vectorized (T, N) EUP pass instead of T
    # tiny per-step exp calls inside the serial loop.
    w_all = jnp.exp(-jnp.exp(w_ref[0].astype(jnp.float32)))   # (T, N)
    r_all = r_ref[0].astype(jnp.float32)
    k_all = k_ref[0].astype(jnp.float32)
    v_all = v_ref[0].astype(jnp.float32)
    a_all = a_ref[0].astype(jnp.float32)
    b_all = b_ref[0].astype(jnp.float32)
    state = s0_ref[0].astype(jnp.float32)                     # (N, N) f32

    def one_step(state, rt, wt, kt, vt, at, bt):
        sa = jnp.sum(state * at, axis=1, keepdims=True)          # (N, 1)
        state = state * wt + sa * bt + jnp.transpose(vt) * kt    # (N, N)
        out = jnp.sum(state * rt, axis=1, keepdims=True)         # (N, 1)
        return state, jnp.transpose(out)                         # (1, N)

    if T <= _WKV_UNROLL_T:
        rows = []
        for t in range(T):                                        # static unroll
            state, row = one_step(state,
                                  r_all[t:t + 1, :], w_all[t:t + 1, :],
                                  k_all[t:t + 1, :], v_all[t:t + 1, :],
                                  a_all[t:t + 1, :], b_all[t:t + 1, :])
            rows.append(row)
        out_ref[0] = jnp.concatenate(rows, axis=0)                # one dense store
    else:
        def step(t, state):
            rt = r_ref[0, pl.ds(t, 1), :]
            wt = jnp.exp(-jnp.exp(w_ref[0, pl.ds(t, 1), :]))
            kt = k_ref[0, pl.ds(t, 1), :]
            vt = v_ref[0, pl.ds(t, 1), :]
            at = a_ref[0, pl.ds(t, 1), :]
            bt = b_ref[0, pl.ds(t, 1), :]
            state, row = one_step(state, rt, wt, kt, vt, at, bt)
            out_ref[0, pl.ds(t, 1), :] = row
            return state
        state = jax.lax.fori_loop(0, T, step, state)

    sout_ref[0] = state


def wkv7(r, w, k, v, a, b, state0):
    """RWKV7 recurrence.  r/w/k/v/a/b: [B, T, H, N]; state0: [B, H, N, N]."""
    B, T, H, N = r.shape
    BH = B * H

    def to_bh(z):
        return jnp.transpose(z, (0, 2, 1, 3)).reshape(BH, T, N).astype(jnp.float32)

    rs, ws, ks, vs, as_, bs = map(to_bh, (r, w, k, v, a, b))
    s0 = state0.reshape(BH, N, N).astype(jnp.float32)

    seq_spec = pl.BlockSpec((1, T, N), lambda i: (i, 0, 0))
    st_spec = pl.BlockSpec((1, N, N), lambda i: (i, 0, 0))

    out, s_out = pl.pallas_call(
        _wkv7_kernel,
        grid=(BH,),
        in_specs=[seq_spec] * 6 + [st_spec],
        out_specs=[seq_spec, st_spec],
        out_shape=[jax.ShapeDtypeStruct((BH, T, N), jnp.float32),
                   jax.ShapeDtypeStruct((BH, N, N), jnp.float32)],
        # (b, h) slices are fully independent -> megacore-shard on v7x.
        compiler_params=pltpu.CompilerParams(dimension_semantics=("parallel",)),
    )(rs, ws, ks, vs, as_, bs, s0)

    out = out.reshape(B, H, T, N).transpose(0, 2, 1, 3)        # [B, T, H, N]
    return out, s_out.reshape(B, H, N, N)


# ----------------------------- parameters ---------------------------------

def init_block_params(key, C, n_layer, layer_id, head_size):
    H = C // head_size
    N = head_size

    def d_lora(x):
        return max(32, int(round(x / 32) * 32))

    D_DECAY = d_lora(1.8 * (C ** 0.5))
    D_AAA = d_lora(1.8 * (C ** 0.5))
    D_MV = d_lora(1.3 * (C ** 0.5))
    D_GATE = d_lora(0.6 * (C ** 0.8))

    keys = iter(jax.random.split(key, 64))

    def nrm(shape, scale):
        return scale * jax.random.normal(next(keys), shape, jnp.float32)

    p = {}
    for name in ("ln0", "ln1", "ln2", "lnx"):
        p[name + "_w"] = jnp.ones((C,), jnp.float32)
        p[name + "_b"] = jnp.zeros((C,), jnp.float32)

    x_r = 0.5 + nrm((1, 1, C), 0.05)
    x_w = 0.5 + nrm((1, 1, C), 0.05)
    x_k = 0.5 + nrm((1, 1, C), 0.05)
    x_v = 0.5 + nrm((1, 1, C), 0.05)
    x_a = 0.5 + nrm((1, 1, C), 0.05)
    x_g = 0.5 + nrm((1, 1, C), 0.05)

    p["w0"] = -4.0 + nrm((1, 1, C), 0.3)
    w1 = nrm((C, D_DECAY), 0.05)
    w2 = nrm((D_DECAY, C), 0.05)
    p["a0"] = nrm((1, 1, C), 0.1)
    a1 = nrm((C, D_AAA), 0.05)
    a2 = nrm((D_AAA, C), 0.05)
    if layer_id > 0:
        p["v0"] = 1.0 + nrm((1, 1, C), 0.1)
        v1 = nrm((C, D_MV), 0.05)
        v2 = nrm((D_MV, C), 0.05)
    g1 = nrm((C, D_GATE), 0.05)
    g2 = nrm((D_GATE, C), 0.05)
    p["k_k"] = 0.85 + nrm((1, 1, C), 0.05)
    p["k_a"] = 1.0 + nrm((1, 1, C), 0.05)
    p["r_k"] = nrm((H, N), 0.1)
    Wr = nrm((C, C), C ** -0.5)
    Wk = nrm((C, C), C ** -0.5)
    Wv = nrm((C, C), C ** -0.5)
    Wo = nrm((C, C), C ** -0.5)
    p["c_x_k"] = 0.5 + nrm((1, 1, C), 0.05)
    Wck = nrm((C, 4 * C), C ** -0.5)
    Wcv = nrm((4 * C, C), (4 * C) ** -0.5)

    bf = lambda z: z.astype(jnp.bfloat16)

    # Fold token-shift scales into the weights once at init:
    #   (x + xx*mix) @ W  ==  x @ W + xx @ (mix[:, None] * W)
    def fold(mix, W):
        return mix.reshape(C, 1) * W

    p["W_rkv"] = bf(jnp.concatenate([Wr, Wk, Wv], axis=1))                 # (C, 3C)
    p["W_rkv_s"] = bf(jnp.concatenate([fold(x_r, Wr), fold(x_k, Wk),
                                       fold(x_v, Wv)], axis=1))            # (C, 3C)
    p["w1"], p["w1_s"], p["w2"] = bf(w1), bf(fold(x_w, w1)), bf(w2)
    p["a1"], p["a1_s"], p["a2"] = bf(a1), bf(fold(x_a, a1)), bf(a2)
    p["g1"], p["g1_s"], p["g2"] = bf(g1), bf(fold(x_g, g1)), bf(g2)
    if layer_id > 0:
        p["v1"], p["v1_s"], p["v2"] = bf(v1), bf(fold(x_v, v1)), bf(v2)
    p["Wo"] = bf(Wo)
    p["Wck"] = bf(Wck)
    p["Wcv"] = bf(Wcv)
    return p


# ----------------------------- Block forward ------------------------------

def rwkv7_block_forward(params, x, v_first, time_mix_state, channel_mix_state,
                        *, layer_id, head_size, head_size_divisor):
    B, T, C = x.shape
    H = C // head_size
    N = head_size
    M = B * T

    if layer_id == 0:
        x = layernorm(x, params["ln0_w"], params["ln0_b"])

    x_ln1 = layernorm(x, params["ln1_w"], params["ln1_b"])

    # ---------------- time mix (RWKV_Tmix_x070) ----------------
    shift_state, wkv_state = time_mix_state                     # [B,C], [B,H,N,N]
    xprev = jnp.concatenate([shift_state[:, None, :], x_ln1[:, :-1, :]], axis=1)
    xx = xprev - x_ln1

    xf = x_ln1.reshape(M, C)
    dxf = xx.reshape(M, C)

    # r | k | v in one wide dual matmul (token-shift folded into the weights).
    rkv = pallas_dual_matmul(xf, dxf, params["W_rkv"], params["W_rkv_s"])   # (M,3C)
    r = rkv[:, :C]
    k = rkv[:, C:2 * C]
    v = rkv[:, 2 * C:]

    w0 = params["w0"].reshape(1, C)
    a0 = params["a0"].reshape(1, C)

    w_lora = pallas_lora(xf, dxf, params["w1"], params["w1_s"], params["w2"],
                         act="tanh")
    w = -jax.nn.softplus(-(w0 + w_lora)) - 0.5                              # (M,C)
    a = jax.nn.sigmoid(a0 + pallas_lora(xf, dxf, params["a1"], params["a1_s"],
                                        params["a2"], act="none"))
    g = pallas_lora(xf, dxf, params["g1"], params["g1_s"], params["g2"],
                    act="sigmoid")

    if layer_id == 0:
        v_first = v.reshape(B, T, C)
    else:
        v_mix = jax.nn.sigmoid(
            params["v0"].reshape(1, C) +
            pallas_lora(xf, dxf, params["v1"], params["v1_s"], params["v2"],
                        act="none"))
        v = v + (v_first.reshape(M, C) - v) * v_mix

    k_k = params["k_k"].reshape(1, C)
    k_a = params["k_a"].reshape(1, C)
    kk = (k * k_k).reshape(M, H, N)
    kk = kk / jnp.maximum(
        jnp.sqrt(jnp.sum(kk * kk, axis=-1, keepdims=True)), 1e-12)   # F.normalize
    kk = kk.reshape(M, C)
    k_mod = k * (1.0 + (a - 1.0) * k_a)

    def heads(z):
        return z.reshape(B, T, H, N)

    wkv_out, new_wkv_state = wkv7(heads(r), heads(w), heads(k_mod), heads(v),
                                  heads(-kk), heads(kk * a), wkv_state)

    eps_gn = 1e-5 * (head_size_divisor ** 2)
    out = groupnorm_heads(wkv_out.reshape(M, C),
                          params["lnx_w"], params["lnx_b"], H, eps_gn)

    rk = heads(r) * heads(k_mod) * params["r_k"][None, None, :, :]   # [B,T,H,N]
    out = out.reshape(B, T, C) + (jnp.sum(rk, axis=-1, keepdims=True)
                                  * heads(v)).reshape(B, T, C)
    x_attn = pallas_matmul(out.reshape(M, C) * g, params["Wo"]).reshape(B, T, C)

    new_time_state = (x_ln1[:, -1, :], new_wkv_state)
    # TODO(synk): nn.Dropout (drop0/drop1) omitted — module is run with dropout=0.0.
    x = x + x_attn

    # ---------------- channel mix (RWKV_CMix_x070) ----------------
    x_ln2 = layernorm(x, params["ln2_w"], params["ln2_b"])
    c_shift = channel_mix_state                                  # [B, C]
    cprev = jnp.concatenate([c_shift[:, None, :], x_ln2[:, :-1, :]], axis=1)
    kc = x_ln2 + (cprev - x_ln2) * params["c_x_k"]
    h = pallas_matmul(kc.reshape(M, C), params["Wck"])
    h = jnp.square(jax.nn.relu(h))
    ffn_out = pallas_matmul(h, params["Wcv"]).reshape(B, T, C)
    new_channel_state = x_ln2[:, -1, :]

    x = x + ffn_out
    return x, v_first, new_time_state, new_channel_state


# --------------------------------- main ------------------------------------

if __name__ == "__main__":
    B, T, C = 2, 8, 128           # batch, seq, n_embd
    head_size = 64
    head_size_divisor = 8
    layer_id = 0
    n_layer = 2
    H = C // head_size
    N = head_size

    key = jax.random.PRNGKey(0)
    kp, kx = jax.random.split(key)
    params = init_block_params(kp, C, n_layer, layer_id, head_size)

    x = jax.random.normal(kx, (B, T, C), jnp.float32)
    v_first = None                                  # layer 0: produced by this block
    time_mix_state = (jnp.zeros((B, C), jnp.float32),
                      jnp.zeros((B, H, N, N), jnp.float32))
    channel_mix_state = jnp.zeros((B, C), jnp.float32)

    fwd = jax.jit(functools.partial(
        rwkv7_block_forward,
        layer_id=layer_id, head_size=head_size,
        head_size_divisor=head_size_divisor))

    out, v_first_out, new_time_state, new_channel_state = fwd(
        params, x, v_first, time_mix_state, channel_mix_state)

    jax.block_until_ready((out, v_first_out, new_time_state, new_channel_state))

    assert out.shape == (B, T, C)
    assert v_first_out.shape == (B, T, C)
    assert new_time_state[0].shape == (B, C)
    assert new_time_state[1].shape == (B, H, N, N)
    assert new_channel_state.shape == (B, C)
    print("KERNEL_OK")
</pallas_src>

<mosaic_0001>
module attributes {stable_mosaic.version = 11 : i64} {
  func.func @_ln_kernel(%arg0: i32, %arg1: memref<16x128xf32, #tpu.memory_space<vmem>>, %arg2: memref<1x128xf32, #tpu.memory_space<vmem>>, %arg3: memref<1x128xf32, #tpu.memory_space<vmem>>, %arg4: memref<16x128xf32, #tpu.memory_space<vmem>>) attributes {dimension_semantics = [#tpu.dimension_semantics<parallel>], iteration_bounds = array<i64: 1>, scalar_prefetch = 0 : i64, scratch_operands = 0 : i64, tpu.core_type = #tpu.core_type<tc>, window_params = [{transform_indices = @transform_0, window_bounds = array<i64: 16, 128>}, {pipeline_mode = #tpu.pipeline_mode<synchronous>, transform_indices = @transform_1, window_bounds = array<i64: 1, 128>}, {pipeline_mode = #tpu.pipeline_mode<synchronous>, transform_indices = @transform_2, window_bounds = array<i64: 1, 128>}, {transform_indices = @transform_3, window_bounds = array<i64: 16, 128>}]} {
    %c0 = arith.constant 0 : index
    %c0_0 = arith.constant 0 : index
    %0 = vector.load %arg1[%c0, %c0_0] : memref<16x128xf32, #tpu.memory_space<vmem>>, vector<16x128xf32>
    %cst = arith.constant dense<0.000000e+00> : vector<16xf32>
    %1 = vector.multi_reduction <add>, %0, %cst [1] : vector<16x128xf32> to vector<16xf32>
    %2 = vector.shape_cast %1 : vector<16xf32> to vector<16x1xf32>
    %cst_1 = arith.constant 1.280000e+02 : f32
    %3 = vector.broadcast %cst_1 : f32 to vector<16x1xf32>
    %4 = arith.divf %2, %3 : vector<16x1xf32>
    %5 = vector.broadcast %4 : vector<16x1xf32> to vector<16x128xf32>
    %6 = arith.subf %0, %5 : vector<16x128xf32>
    %7 = arith.mulf %6, %6 : vector<16x128xf32>
    %cst_2 = arith.constant dense<0.000000e+00> : vector<16xf32>
    %8 = vector.multi_reduction <add>, %7, %cst_2 [1] : vector<16x128xf32> to vector<16xf32>
    %9 = vector.shape_cast %8 : vector<16xf32> to vector<16x1xf32>
    %cst_3 = arith.constant 1.280000e+02 : f32
    %10 = vector.broadcast %cst_3 : f32 to vector<16x1xf32>
    %11 = arith.divf %9, %10 : vector<16x1xf32>
    %12 = vector.broadcast %4 : vector<16x1xf32> to vector<16x128xf32>
    %13 = arith.subf %0, %12 : vector<16x128xf32>
    %cst_4 = arith.constant 9.99999974E-6 : f32
    %14 = vector.broadcast %cst_4 : f32 to vector<16x1xf32>
    %15 = arith.addf %11, %14 : vector<16x1xf32>
    %16 = math.rsqrt %15 : vector<16x1xf32>
    %17 = vector.broadcast %16 : vector<16x1xf32> to vector<16x128xf32>
    %18 = arith.mulf %13, %17 : vector<16x128xf32>
    %c0_5 = arith.constant 0 : index
    %c0_6 = arith.constant 0 : index
    %19 = vector.load %arg2[%c0_5, %c0_6] : memref<1x128xf32, #tpu.memory_space<vmem>>, vector<1x128xf32>
    %20 = vector.broadcast %19 : vector<1x128xf32> to vector<16x128xf32>
    %21 = arith.mulf %18, %20 : vector<16x128xf32>
    %c0_7 = arith.constant 0 : index
    %c0_8 = arith.constant 0 : index
    %22 = vector.load %arg3[%c0_7, %c0_8] : memref<1x128xf32, #tpu.memory_space<vmem>>, vector<1x128xf32>
    %23 = vector.broadcast %22 : vector<1x128xf32> to vector<16x128xf32>
    %24 = arith.addf %21, %23 : vector<16x128xf32>
    %c0_9 = arith.constant 0 : index
    %c0_10 = arith.constant 0 : index
    %25 = vector.load %arg4[%c0_9, %c0_10] : memref<16x128xf32, #tpu.memory_space<vmem>>, vector<16x128xf32>
    tpu.vector_store %arg4[%c0_9, %c0_10], %24 {strides = array<i32>} : memref<16x128xf32, #tpu.memory_space<vmem>>, vector<16x128xf32>,
    return
  }
  func.func @transform_0(%arg0: i32) -> (i32, i32) {
    %c0_i32 = arith.constant 0 : i32
    %c0_i32_0 = arith.constant 0 : i32
    return %arg0, %c0_i32 : i32, i32
  }
  func.func @transform_1(%arg0: i32) -> (i32, i32) {
    %c0_i32 = arith.constant 0 : i32
    %c0_i32_0 = arith.constant 0 : i32
    %c0_i32_1 = arith.constant 0 : i32
    return %c0_i32, %c0_i32_0 : i32, i32
  }
  func.func @transform_2(%arg0: i32) -> (i32, i32) {
    %c0_i32 = arith.constant 0 : i32
    %c0_i32_0 = arith.constant 0 : i32
    %c0_i32_1 = arith.constant 0 : i32
    return %c0_i32, %c0_i32_0 : i32, i32
  }
  func.func @transform_3(%arg0: i32) -> (i32, i32) {
    %c0_i32 = arith.constant 0 : i32
    %c0_i32_0 = arith.constant 0 : i32
    return %arg0, %c0_i32 : i32, i32
  }
}

module attributes {stable_mosaic.version = 11 : i64} {
  func.func @_mm2_kernel(%arg0: i32, %arg1: i32, %arg2: i32, %arg3: memref<16x128xbf16, #tpu.memory_space<vmem>>, %arg4: memref<16x128xbf16, #tpu.memory_space<vmem>>, %arg5: memref<128x384xbf16, #tpu.memory_space<vmem>>, %arg6: memref<128x384xbf16, #tpu.memory_space<vmem>>, %arg7: memref<16x384xf32, #tpu.memory_space<vmem>>, %arg8: memref<16x384xf32, #tpu.memory_space<vmem>>) attributes {dimension_semantics = [#tpu.dimension_semantics<parallel>, #tpu.dimension_semantics<parallel>, #tpu.dimension_semantics<arbitrary>], iteration_bounds = array<i64: 1, 1, 1>, scalar_prefetch = 0 : i64, scratch_operands = 1 : i64, tpu.core_type = #tpu.core_type<tc>, window_params = [{transform_indices = @transform_0, window_bounds = array<i64: 16, 128>}, {transform_indices = @transform_1, window_bounds = array<i64: 16, 128>}, {transform_indices = @transform_2, window_bounds = array<i64: 128, 384>}, {transform_indices = @transform_3, window_bounds = array<i64: 128, 384>}, {transform_indices = @transform_4, window_bounds = array<i64: 16, 384>}]} {
    %c0_i32 = arith.constant 0 : i32
    %0 = arith.cmpi eq, %arg2, %c0_i32 : i32
    %1 = arith.extui %0 : i1 to i32
    %c0_i32_0 = arith.constant 0 : i32
    %2 = arith.cmpi ne, %1, %c0_i32_0 : i32
    scf.if %2 {
      %cst_19 = arith.constant 0.000000e+00 : f32
      %18 = vector.broadcast %cst_19 : f32 to vector<16x384xf32>
      %c0_20 = arith.constant 0 : index
      %c0_21 = arith.constant 0 : index
      %19 = vector.load %arg8[%c0_20, %c0_21] : memref<16x384xf32, #tpu.memory_space<vmem>>, vector<16x384xf32>
      tpu.vector_store %arg8[%c0_20, %c0_21], %18 {strides = array<i32>} : memref<16x384xf32, #tpu.memory_space<vmem>>, vector<16x384xf32>,
    } else {
    }
    %c0 = arith.constant 0 : index
    %c0_1 = arith.constant 0 : index
    %3 = vector.load %arg8[%c0, %c0_1] : memref<16x384xf32, #tpu.memory_space<vmem>>, vector<16x384xf32>
    %c0_2 = arith.constant 0 : index
    %c0_3 = arith.constant 0 : index
    %4 = vector.load %arg3[%c0_2, %c0_3] : memref<16x128xbf16, #tpu.memory_space<vmem>>, vector<16x128xbf16>
    %c0_4 = arith.constant 0 : index
    %c0_5 = arith.constant 0 : index
    %5 = vector.load %arg5[%c0_4, %c0_5] : memref<128x384xbf16, #tpu.memory_space<vmem>>, vector<128x384xbf16>
    %cst = arith.constant dense<0.000000e+00> : vector<16x384xf32>
    %6 = tpu.matmul %4, %5, %cst {dimension_numbers = #tpu.dot_dimension_numbers<[1], [0], [0], [1], [0, 0, 1, 1], [], []>} : vector<16x128xbf16>, vector<128x384xbf16>, vector<16x384xf32> -> vector<16x384xf32>
    %7 = arith.addf %3, %6 : vector<16x384xf32>
    %c0_6 = arith.constant 0 : index
    %c0_7 = arith.constant 0 : index
    %8 = vector.load %arg8[%c0_6, %c0_7] : memref<16x384xf32, #tpu.memory_space<vmem>>, vector<16x384xf32>
    tpu.vector_store %arg8[%c0_6, %c0_7], %7 {strides = array<i32>} : memref<16x384xf32, #tpu.memory_space<vmem>>, vector<16x384xf32>,
    %c0_8 = arith.constant 0 : index
    %c0_9 = arith.constant 0 : index
    %9 = vector.load %arg8[%c0_8, %c0_9] : memref<16x384xf32, #tpu.memory_space<vmem>>, vector<16x384xf32>
    %c0_10 = arith.constant 0 : index
    %c0_11 = arith.constant 0 : index
    %10 = vector.load %arg4[%c0_10, %c0_11] : memref<16x128xbf16, #tpu.memory_space<vmem>>, vector<16x128xbf16>
    %c0_12 = arith.constant 0 : index
    %c0_13 = arith.constant 0 : index
    %11 = vector.load %arg6[%c0_12, %c0_13] : memref<128x384xbf16, #tpu.memory_space<vmem>>, vector<128x384xbf16>
    %cst_14 = arith.constant dense<0.000000e+00> : vector<16x384xf32>
    %12 = tpu.matmul %10, %11, %cst_14 {dimension_numbers = #tpu.dot_dimension_numbers<[1], [0], [0], [1], [0, 0, 1, 1], [], []>} : vector<16x128xbf16>, vector<128x384xbf16>, vector<16x384xf32> -> vector<16x384xf32>
    %13 = arith.addf %9, %12 : vector<16x384xf32>
    %c0_15 = arith.constant 0 : index
    %c0_16 = arith.constant 0 : index
    %14 = vector.load %arg8[%c0_15, %c0_16] : memref<16x384xf32, #tpu.memory_space<vmem>>, vector<16x384xf32>
    tpu.vector_store %arg8[%c0_15, %c0_16], %13 {strides = array<i32>} : memref<16x384xf32, #tpu.memory_space<vmem>>, vector<16x384xf32>,
    %c0_i32_17 = arith.constant 0 : i32
    %15 = arith.cmpi eq, %arg2, %c0_i32_17 : i32
    %16 = arith.extui %15 : i1 to i32
    %c0_i32_18 = arith.constant 0 : i32
    %17 = arith.cmpi ne, %16, %c0_i32_18 : i32
    scf.if %17 {
      %c0_19 = arith.constant 0 : index
      %c0_20 = arith.constant 0 : index
      %18 = vector.load %arg8[%c0_19, %c0_20] : memref<16x384xf32, #tpu.memory_space<vmem>>, vector<16x384xf32>
      %c0_21 = arith.constant 0 : index
      %c0_22 = arith.constant 0 : index
      %19 = vector.load %arg7[%c0_21, %c0_22] : memref<16x384xf32, #tpu.memory_space<vmem>>, vector<16x384xf32>
      tpu.vector_store %arg7[%c0_21, %c0_22], %18 {strides = array<i32>} : memref<16x384xf32, #tpu.memory_space<vmem>>, vector<16x384xf32>,
    } else {
    }
    return
  }
  func.func @transform_0(%arg0: i32, %arg1: i32, %arg2: i32) -> (i32, i32) {
    %c0_i32 = arith.constant 0 : i32
    return %arg0, %arg2 : i32, i32
  }
  func.func @transform_1(%arg0: i32, %arg1: i32, %arg2: i32) -> (i32, i32) {
    %c0_i32 = arith.constant 0 : i32
    return %arg0, %arg2 : i32, i32
  }
  func.func @transform_2(%arg0: i32, %arg1: i32, %arg2: i32) -> (i32, i32) {
    %c0_i32 = arith.constant 0 : i32
    return %arg2, %arg1 : i32, i32
  }
  func.func @transform_3(%arg0: i32, %arg1: i32, %arg2: i32) -> (i32, i32) {
    %c0_i32 = arith.constant 0 : i32
    return %arg2, %arg1 : i32, i32
  }
  func.func @transform_4(%arg0: i32, %arg1: i32, %arg2: i32) -> (i32, i32) {
    %c0_i32 = arith.constant 0 : i32
    return %arg0, %arg1 : i32, i32
  }
}

module attributes {stable_mosaic.version = 11 : i64} {
  func.func @_lora_kernel(%arg0: i32, %arg1: memref<16x128xbf16, #tpu.memory_space<vmem>>, %arg2: memref<16x128xbf16, #tpu.memory_space<vmem>>, %arg3: memref<128x32xbf16, #tpu.memory_space<vmem>>, %arg4: memref<128x32xbf16, #tpu.memory_space<vmem>>, %arg5: memref<32x128xbf16, #tpu.memory_space<vmem>>, %arg6: memref<16x128xf32, #tpu.memory_space<vmem>>) attributes {dimension_semantics = [#tpu.dimension_semantics<parallel>], iteration_bounds = array<i64: 1>, scalar_prefetch = 0 : i64, scratch_operands = 0 : i64, tpu.core_type = #tpu.core_type<tc>, window_params = [{transform_indices = @transform_0, window_bounds = array<i64: 16, 128>}, {transform_indices = @transform_1, window_bounds = array<i64: 16, 128>}, {pipeline_mode = #tpu.pipeline_mode<synchronous>, transform_indices = @transform_2, window_bounds = array<i64: 128, 32>}, {pipeline_mode = #tpu.pipeline_mode<synchronous>, transform_indices = @transform_3, window_bounds = array<i64: 128, 32>}, {pipeline_mode = #tpu.pipeline_mode<synchronous>, transform_indices = @transform_4, window_bounds = array<i64: 32, 128>}, {transform_indices = @transform_5, window_bounds = array<i64: 16, 128>}]} {
    %c0 = arith.constant 0 : index
    %c0_0 = arith.constant 0 : index
    %0 = vector.load %arg1[%c0, %c0_0] : memref<16x128xbf16, #tpu.memory_space<vmem>>, vector<16x128xbf16>
    %c0_1 = arith.constant 0 : index
    %c0_2 = arith.constant 0 : index
    %1 = vector.load %arg3[%c0_1, %c0_2] : memref<128x32xbf16, #tpu.memory_space<vmem>>, vector<128x32xbf16>
    %cst = arith.constant dense<0.000000e+00> : vector<16x32xf32>
    %2 = tpu.matmul %0, %1, %cst {dimension_numbers = #tpu.dot_dimension_numbers<[1], [0], [0], [1], [0, 0, 1, 1], [], []>} : vector<16x128xbf16>, vector<128x32xbf16>, vector<16x32xf32> -> vector<16x32xf32>
    %c0_3 = arith.constant 0 : index
    %c0_4 = arith.constant 0 : index
    %3 = vector.load %arg2[%c0_3, %c0_4] : memref<16x128xbf16, #tpu.memory_space<vmem>>, vector<16x128xbf16>
    %c0_5 = arith.constant 0 : index
    %c0_6 = arith.constant 0 : index
    %4 = vector.load %arg4[%c0_5, %c0_6] : memref<128x32xbf16, #tpu.memory_space<vmem>>, vector<128x32xbf16>
    %cst_7 = arith.constant dense<0.000000e+00> : vector<16x32xf32>
    %5 = tpu.matmul %3, %4, %cst_7 {dimension_numbers = #tpu.dot_dimension_numbers<[1], [0], [0], [1], [0, 0, 1, 1], [], []>} : vector<16x128xbf16>, vector<128x32xbf16>, vector<16x32xf32> -> vector<16x32xf32>
    %6 = arith.addf %2, %5 : vector<16x32xf32>
    %7 = math.tanh %6 : vector<16x32xf32>
    %8 = arith.truncf %7 : vector<16x32xf32> to vector<16x32xbf16>
    %c0_8 = arith.constant 0 : index
    %c0_9 = arith.constant 0 : index
    %9 = vector.load %arg5[%c0_8, %c0_9] : memref<32x128xbf16, #tpu.memory_space<vmem>>, vector<32x128xbf16>
    %cst_10 = arith.constant dense<0.000000e+00> : vector<16x128xf32>
    %10 = tpu.matmul %8, %9, %cst_10 {dimension_numbers = #tpu.dot_dimension_numbers<[1], [0], [0], [1], [0, 0, 1, 1], [], []>} : vector<16x32xbf16>, vector<32x128xbf16>, vector<16x128xf32> -> vector<16x128xf32>
    %c0_11 = arith.constant 0 : index
    %c0_12 = arith.constant 0 : index
    %11 = vector.load %arg6[%c0_11, %c0_12] : memref<16x128xf32, #tpu.memory_space<vmem>>, vector<16x128xf32>
    tpu.vector_store %arg6[%c0_11, %c0_12], %10 {strides = array<i32>} : memref<16x128xf32, #tpu.memory_space<vmem>>, vector<16x128xf32>,
    return
  }
  func.func @transform_0(%arg0: i32) -> (i32, i32) {
    %c0_i32 = arith.constant 0 : i32
    %c0_i32_0 = arith.constant 0 : i32
    return %arg0, %c0_i32 : i32, i32
  }
  func.func @transform_1(%arg0: i32) -> (i32, i32) {
    %c0_i32 = arith.constant 0 : i32
    %c0_i32_0 = arith.constant 0 : i32
    return %arg0, %c0_i32 : i32, i32
  }
  func.func @transform_2(%arg0: i32) -> (i32, i32) {
    %c0_i32 = arith.constant 0 : i32
    %c0_i32_0 = arith.constant 0 : i32
    %c0_i32_1 = arith.constant 0 : i32
    return %c0_i32, %c0_i32_0 : i32, i32
  }
  func.func @transform_3(%arg0: i32) -> (i32, i32) {
    %c0_i32 = arith.constant 0 : i32
    %c0_i32_0 = arith.constant 0 : i32
    %c0_i32_1 = arith.constant 0 : i32
    return %c0_i32, %c0_i32_0 : i32, i32
  }
  func.func @transform_4(%arg0: i32) -> (i32, i32) {
    %c0_i32 = arith.constant 0 : i32
    %c0_i32_0 = arith.constant 0 : i32
    %c0_i32_1 = arith.constant 0 : i32
    return %c0_i32, %c0_i32_0 : i32, i32
  }
  func.func @transform_5(%arg0: i32) -> (i32, i32) {
    %c0_i32 = arith.constant 0 : i32
    %c0_i32_0 = arith.constant 0 : i32
    return %arg0, %c0_i32 : i32, i32
  }
}

module attributes {stable_mosaic.version = 11 : i64} {
  func.func @_lora_kernel(%arg0: i32, %arg1: memref<16x128xbf16, #tpu.memory_space<vmem>>, %arg2: memref<16x128xbf16, #tpu.memory_space<vmem>>, %arg3: memref<128x32xbf16, #tpu.memory_space<vmem>>, %arg4: memref<128x32xbf16, #tpu.memory_space<vmem>>, %arg5: memref<32x128xbf16, #tpu.memory_space<vmem>>, %arg6: memref<16x128xf32, #tpu.memory_space<vmem>>) attributes {dimension_semantics = [#tpu.dimension_semantics<parallel>], iteration_bounds = array<i64: 1>, scalar_prefetch = 0 : i64, scratch_operands = 0 : i64, tpu.core_type = #tpu.core_type<tc>, window_params = [{transform_indices = @transform_0, window_bounds = array<i64: 16, 128>}, {transform_indices = @transform_1, window_bounds = array<i64: 16, 128>}, {pipeline_mode = #tpu.pipeline_mode<synchronous>, transform_indices = @transform_2, window_bounds = array<i64: 128, 32>}, {pipeline_mode = #tpu.pipeline_mode<synchronous>, transform_indices = @transform_3, window_bounds = array<i64: 128, 32>}, {pipeline_mode = #tpu.pipeline_mode<synchronous>, transform_indices = @transform_4, window_bounds = array<i64: 32, 128>}, {transform_indices = @transform_5, window_bounds = array<i64: 16, 128>}]} {
    %c0 = arith.constant 0 : index
    %c0_0 = arith.constant 0 : index
    %0 = vector.load %arg1[%c0, %c0_0] : memref<16x128xbf16, #tpu.memory_space<vmem>>, vector<16x128xbf16>
    %c0_1 = arith.constant 0 : index
    %c0_2 = arith.constant 0 : index
    %1 = vector.load %arg3[%c0_1, %c0_2] : memref<128x32xbf16, #tpu.memory_space<vmem>>, vector<128x32xbf16>
    %cst = arith.constant dense<0.000000e+00> : vector<16x32xf32>
    %2 = tpu.matmul %0, %1, %cst {dimension_numbers = #tpu.dot_dimension_numbers<[1], [0], [0], [1], [0, 0, 1, 1], [], []>} : vector<16x128xbf16>, vector<128x32xbf16>, vector<16x32xf32> -> vector<16x32xf32>
    %c0_3 = arith.constant 0 : index
    %c0_4 = arith.constant 0 : index
    %3 = vector.load %arg2[%c0_3, %c0_4] : memref<16x128xbf16, #tpu.memory_space<vmem>>, vector<16x128xbf16>
    %c0_5 = arith.constant 0 : index
    %c0_6 = arith.constant 0 : index
    %4 = vector.load %arg4[%c0_5, %c0_6] : memref<128x32xbf16, #tpu.memory_space<vmem>>, vector<128x32xbf16>
    %cst_7 = arith.constant dense<0.000000e+00> : vector<16x32xf32>
    %5 = tpu.matmul %3, %4, %cst_7 {dimension_numbers = #tpu.dot_dimension_numbers<[1], [0], [0], [1], [0, 0, 1, 1], [], []>} : vector<16x128xbf16>, vector<128x32xbf16>, vector<16x32xf32> -> vector<16x32xf32>
    %6 = arith.addf %2, %5 : vector<16x32xf32>
    %7 = arith.truncf %6 : vector<16x32xf32> to vector<16x32xbf16>
    %c0_8 = arith.constant 0 : index
    %c0_9 = arith.constant 0 : index
    %8 = vector.load %arg5[%c0_8, %c0_9] : memref<32x128xbf16, #tpu.memory_space<vmem>>, vector<32x128xbf16>
    %cst_10 = arith.constant dense<0.000000e+00> : vector<16x128xf32>
    %9 = tpu.matmul %7, %8, %cst_10 {dimension_numbers = #tpu.dot_dimension_numbers<[1], [0], [0], [1], [0, 0, 1, 1], [], []>} : vector<16x32xbf16>, vector<32x128xbf16>, vector<16x128xf32> -> vector<16x128xf32>
    %c0_11 = arith.constant 0 : index
    %c0_12 = arith.constant 0 : index
    %10 = vector.load %arg6[%c0_11, %c0_12] : memref<16x128xf32, #tpu.memory_space<vmem>>, vector<16x128xf32>
    tpu.vector_store %arg6[%c0_11, %c0_12], %9 {strides = array<i32>} : memref<16x128xf32, #tpu.memory_space<vmem>>, vector<16x128xf32>,
    return
  }
  func.func @transform_0(%arg0: i32) -> (i32, i32) {
    %c0_i32 = arith.constant 0 : i32
    %c0_i32_0 = arith.constant 0 : i32
    return %arg0, %c0_i32 : i32, i32
  }
  func.func @transform_1(%arg0: i32) -> (i32, i32) {
    %c0_i32 = arith.constant 0 : i32
    %c0_i32_0 = arith.constant 0 : i32
    return %arg0, %c0_i32 : i32, i32
  }
  func.func @transform_2(%arg0: i32) -> (i32, i32) {
    %c0_i32 = arith.constant 0 : i32
    %c0_i32_0 = arith.constant 0 : i32
    %c0_i32_1 = arith.constant 0 : i32
    return %c0_i32, %c0_i32_0 : i32, i32
  }
  func.func @transform_3(%arg0: i32) -> (i32, i32) {
    %c0_i32 = arith.constant 0 : i32
    %c0_i32_0 = arith.constant 0 : i32
    %c0_i32_1 = arith.constant 0 : i32
    return %c0_i32, %c0_i32_0 : i32, i32
  }
  func.func @transform_4(%arg0: i32) -> (i32, i32) {
    %c0_i32 = arith.constant 0 : i32
    %c0_i32_0 = arith.constant 0 : i32
    %c0_i32_1 = arith.constant 0 : i32
    return %c0_i32, %c0_i32_0 : i32, i32
  }
  func.func @transform_5(%arg0: i32) -> (i32, i32) {
    %c0_i32 = arith.constant 0 : i32
    %c0_i32_0 = arith.constant 0 : i32
    return %arg0, %c0_i32 : i32, i32
  }
}

module attributes {stable_mosaic.version = 11 : i64} {
  func.func @_lora_kernel(%arg0: i32, %arg1: memref<16x128xbf16, #tpu.memory_space<vmem>>, %arg2: memref<16x128xbf16, #tpu.memory_space<vmem>>, %arg3: memref<128x32xbf16, #tpu.memory_space<vmem>>, %arg4: memref<128x32xbf16, #tpu.memory_space<vmem>>, %arg5: memref<32x128xbf16, #tpu.memory_space<vmem>>, %arg6: memref<16x128xf32, #tpu.memory_space<vmem>>) attributes {dimension_semantics = [#tpu.dimension_semantics<parallel>], iteration_bounds = array<i64: 1>, scalar_prefetch = 0 : i64, scratch_operands = 0 : i64, tpu.core_type = #tpu.core_type<tc>, window_params = [{transform_indices = @transform_0, window_bounds = array<i64: 16, 128>}, {transform_indices = @transform_1, window_bounds = array<i64: 16, 128>}, {pipeline_mode = #tpu.pipeline_mode<synchronous>, transform_indices = @transform_2, window_bounds = array<i64: 128, 32>}, {pipeline_mode = #tpu.pipeline_mode<synchronous>, transform_indices = @transform_3, window_bounds = array<i64: 128, 32>}, {pipeline_mode = #tpu.pipeline_mode<synchronous>, transform_indices = @transform_4, window_bounds = array<i64: 32, 128>}, {transform_indices = @transform_5, window_bounds = array<i64: 16, 128>}]} {
    %c0 = arith.constant 0 : index
    %c0_0 = arith.constant 0 : index
    %0 = vector.load %arg1[%c0, %c0_0] : memref<16x128xbf16, #tpu.memory_space<vmem>>, vector<16x128xbf16>
    %c0_1 = arith.constant 0 : index
    %c0_2 = arith.constant 0 : index
    %1 = vector.load %arg3[%c0_1, %c0_2] : memref<128x32xbf16, #tpu.memory_space<vmem>>, vector<128x32xbf16>
    %cst = arith.constant dense<0.000000e+00> : vector<16x32xf32>
    %2 = tpu.matmul %0, %1, %cst {dimension_numbers = #tpu.dot_dimension_numbers<[1], [0], [0], [1], [0, 0, 1, 1], [], []>} : vector<16x128xbf16>, vector<128x32xbf16>, vector<16x32xf32> -> vector<16x32xf32>
    %c0_3 = arith.constant 0 : index
    %c0_4 = arith.constant 0 : index
    %3 = vector.load %arg2[%c0_3, %c0_4] : memref<16x128xbf16, #tpu.memory_space<vmem>>, vector<16x128xbf16>
    %c0_5 = arith.constant 0 : index
    %c0_6 = arith.constant 0 : index
    %4 = vector.load %arg4[%c0_5, %c0_6] : memref<128x32xbf16, #tpu.memory_space<vmem>>, vector<128x32xbf16>
    %cst_7 = arith.constant dense<0.000000e+00> : vector<16x32xf32>
    %5 = tpu.matmul %3, %4, %cst_7 {dimension_numbers = #tpu.dot_dimension_numbers<[1], [0], [0], [1], [0, 0, 1, 1], [], []>} : vector<16x128xbf16>, vector<128x32xbf16>, vector<16x32xf32> -> vector<16x32xf32>
    %6 = arith.addf %2, %5 : vector<16x32xf32>
    %7 = arith.negf %6 : vector<16x32xf32>
    %8 = math.exp %7 : vector<16x32xf32>
    %cst_8 = arith.constant 1.000000e+00 : f32
    %9 = vector.broadcast %cst_8 : f32 to vector<16x32xf32>
    %10 = arith.addf %9, %8 : vector<16x32xf32>
    %11 = arith.divf %9, %10 : vector<16x32xf32>
    %12 = arith.truncf %11 : vector<16x32xf32> to vector<16x32xbf16>
    %c0_9 = arith.constant 0 : index
    %c0_10 = arith.constant 0 : index
    %13 = vector.load %arg5[%c0_9, %c0_10] : memref<32x128xbf16, #tpu.memory_space<vmem>>, vector<32x128xbf16>
    %cst_11 = arith.constant dense<0.000000e+00> : vector<16x128xf32>
    %14 = tpu.matmul %12, %13, %cst_11 {dimension_numbers = #tpu.dot_dimension_numbers<[1], [0], [0], [1], [0, 0, 1, 1], [], []>} : vector<16x32xbf16>, vector<32x128xbf16>, vector<16x128xf32> -> vector<16x128xf32>
    %c0_12 = arith.constant 0 : index
    %c0_13 = arith.constant 0 : index
    %15 = vector.load %arg6[%c0_12, %c0_13] : memref<16x128xf32, #tpu.memory_space<vmem>>, vector<16x128xf32>
    tpu.vector_store %arg6[%c0_12, %c0_13], %14 {strides = array<i32>} : memref<16x128xf32, #tpu.memory_space<vmem>>, vector<16x128xf32>,
    return
  }
  func.func @transform_0(%arg0: i32) -> (i32, i32) {
    %c0_i32 = arith.constant 0 : i32
    %c0_i32_0 = arith.constant 0 : i32
    return %arg0, %c0_i32 : i32, i32
  }
  func.func @transform_1(%arg0: i32) -> (i32, i32) {
    %c0_i32 = arith.constant 0 : i32
    %c0_i32_0 = arith.constant 0 : i32
    return %arg0, %c0_i32 : i32, i32
  }
  func.func @transform_2(%arg0: i32) -> (i32, i32) {
    %c0_i32 = arith.constant 0 : i32
    %c0_i32_0 = arith.constant 0 : i32
    %c0_i32_1 = arith.constant 0 : i32
    return %c0_i32, %c0_i32_0 : i32, i32
  }
  func.func @transform_3(%arg0: i32) -> (i32, i32) {
    %c0_i32 = arith.constant 0 : i32
    %c0_i32_0 = arith.constant 0 : i32
    %c0_i32_1 = arith.constant 0 : i32
    return %c0_i32, %c0_i32_0 : i32, i32
  }
  func.func @transform_4(%arg0: i32) -> (i32, i32) {
    %c0_i32 = arith.constant 0 : i32
    %c0_i32_0 = arith.constant 0 : i32
    %c0_i32_1 = arith.constant 0 : i32
    return %c0_i32, %c0_i32_0 : i32, i32
  }
  func.func @transform_5(%arg0: i32) -> (i32, i32) {
    %c0_i32 = arith.constant 0 : i32
    %c0_i32_0 = arith.constant 0 : i32
    return %arg0, %c0_i32 : i32, i32
  }
}

module attributes {stable_mosaic.version = 11 : i64} {
  func.func @_gn_kernel(%arg0: i32, %arg1: memref<16x128xf32, #tpu.memory_space<vmem>>, %arg2: memref<1x128xf32, #tpu.memory_space<vmem>>, %arg3: memref<1x128xf32, #tpu.memory_space<vmem>>, %arg4: memref<16x128xf32, #tpu.memory_space<vmem>>) attributes {dimension_semantics = [#tpu.dimension_semantics<parallel>], iteration_bounds = array<i64: 1>, scalar_prefetch = 0 : i64, scratch_operands = 0 : i64, tpu.core_type = #tpu.core_type<tc>, window_params = [{transform_indices = @transform_0, window_bounds = array<i64: 16, 128>}, {pipeline_mode = #tpu.pipeline_mode<synchronous>, transform_indices = @transform_1, window_bounds = array<i64: 1, 128>}, {pipeline_mode = #tpu.pipeline_mode<synchronous>, transform_indices = @transform_2, window_bounds = array<i64: 1, 128>}, {transform_indices = @transform_3, window_bounds = array<i64: 16, 128>}]} {
    %c0 = arith.constant 0 : index
    %c0_0 = arith.constant 0 : index
    %0 = vector.load %arg1[%c0, %c0_0] : memref<16x128xf32, #tpu.memory_space<vmem>>, vector<16x128xf32>
    %1 = vector.extract_strided_slice %0 {offsets = [0, 0], sizes = [16, 64], strides = [1, 1]} : vector<16x128xf32> to vector<16x64xf32>
    %cst = arith.constant dense<0.000000e+00> : vector<16xf32>
    %2 = vector.multi_reduction <add>, %1, %cst [1] : vector<16x64xf32> to vector<16xf32>
    %3 = vector.shape_cast %2 : vector<16xf32> to vector<16x1xf32>
    %cst_1 = arith.constant 6.400000e+01 : f32
    %4 = vector.broadcast %cst_1 : f32 to vector<16x1xf32>
    %5 = arith.divf %3, %4 : vector<16x1xf32>
    %6 = vector.broadcast %5 : vector<16x1xf32> to vector<16x64xf32>
    %7 = arith.subf %1, %6 : vector<16x64xf32>
    %8 = arith.mulf %7, %7 : vector<16x64xf32>
    %cst_2 = arith.constant dense<0.000000e+00> : vector<16xf32>
    %9 = vector.multi_reduction <add>, %8, %cst_2 [1] : vector<16x64xf32> to vector<16xf32>
    %10 = vector.shape_cast %9 : vector<16xf32> to vector<16x1xf32>
    %cst_3 = arith.constant 6.400000e+01 : f32
    %11 = vector.broadcast %cst_3 : f32 to vector<16x1xf32>
    %12 = arith.divf %10, %11 : vector<16x1xf32>
    %13 = vector.broadcast %5 : vector<16x1xf32> to vector<16x64xf32>
    %14 = arith.subf %1, %13 : vector<16x64xf32>
    %cst_4 = arith.constant 6.400000e-04 : f32
    %15 = vector.broadcast %cst_4 : f32 to vector<16x1xf32>
    %16 = arith.addf %12, %15 : vector<16x1xf32>
    %17 = math.rsqrt %16 : vector<16x1xf32>
    %18 = vector.broadcast %17 : vector<16x1xf32> to vector<16x64xf32>
    %19 = arith.mulf %14, %18 : vector<16x64xf32>
    %20 = vector.extract_strided_slice %0 {offsets = [0, 64], sizes = [16, 64], strides = [1, 1]} : vector<16x128xf32> to vector<16x64xf32>
    %cst_5 = arith.constant dense<0.000000e+00> : vector<16xf32>
    %21 = vector.multi_reduction <add>, %20, %cst_5 [1] : vector<16x64xf32> to vector<16xf32>
    %22 = vector.shape_cast %21 : vector<16xf32> to vector<16x1xf32>
    %cst_6 = arith.constant 6.400000e+01 : f32
    %23 = vector.broadcast %cst_6 : f32 to vector<16x1xf32>
    %24 = arith.divf %22, %23 : vector<16x1xf32>
    %25 = vector.broadcast %24 : vector<16x1xf32> to vector<16x64xf32>
    %26 = arith.subf %20, %25 : vector<16x64xf32>
    %27 = arith.mulf %26, %26 : vector<16x64xf32>
    %cst_7 = arith.constant dense<0.000000e+00> : vector<16xf32>
    %28 = vector.multi_reduction <add>, %27, %cst_7 [1] : vector<16x64xf32> to vector<16xf32>
    %29 = vector.shape_cast %28 : vector<16xf32> to vector<16x1xf32>
    %cst_8 = arith.constant 6.400000e+01 : f32
    %30 = vector.broadcast %cst_8 : f32 to vector<16x1xf32>
    %31 = arith.divf %29, %30 : vector<16x1xf32>
    %32 = vector.broadcast %24 : vector<16x1xf32> to vector<16x64xf32>
    %33 = arith.subf %20, %32 : vector<16x64xf32>
    %cst_9 = arith.constant 6.400000e-04 : f32
    %34 = vector.broadcast %cst_9 : f32 to vector<16x1xf32>
    %35 = arith.addf %31, %34 : vector<16x1xf32>
    %36 = math.rsqrt %35 : vector<16x1xf32>
    %37 = vector.broadcast %36 : vector<16x1xf32> to vector<16x64xf32>
    %38 = arith.mulf %33, %37 : vector<16x64xf32>
    %39 = tpu.concatenate %19, %38 in 1 : vector<16x64xf32>, vector<16x64xf32> -> vector<16x128xf32>
    %c0_10 = arith.constant 0 : index
    %c0_11 = arith.constant 0 : index
    %40 = vector.load %arg2[%c0_10, %c0_11] : memref<1x128xf32, #tpu.memory_space<vmem>>, vector<1x128xf32>
    %41 = vector.broadcast %40 : vector<1x128xf32> to vector<16x128xf32>
    %42 = arith.mulf %39, %41 : vector<16x128xf32>
    %c0_12 = arith.constant 0 : index
    %c0_13 = arith.constant 0 : index
    %43 = vector.load %arg3[%c0_12, %c0_13] : memref<1x128xf32, #tpu.memory_space<vmem>>, vector<1x128xf32>
    %44 = vector.broadcast %43 : vector<1x128xf32> to vector<16x128xf32>
    %45 = arith.addf %42, %44 : vector<16x128xf32>
    %c0_14 = arith.constant 0 : index
    %c0_15 = arith.constant 0 : index
    %46 = vector.load %arg4[%c0_14, %c0_15] : memref<16x128xf32, #tpu.memory_space<vmem>>, vector<16x128xf32>
    tpu.vector_store %arg4[%c0_14, %c0_15], %45 {strides = array<i32>} : memref<16x128xf32, #tpu.memory_space<vmem>>, vector<16x128xf32>,
    return
  }
  func.func @transform_0(%arg0: i32) -> (i32, i32) {
    %c0_i32 = arith.constant 0 : i32
    %c0_i32_0 = arith.constant 0 : i32
    return %arg0, %c0_i32 : i32, i32
  }
  func.func @transform_1(%arg0: i32) -> (i32, i32) {
    %c0_i32 = arith.constant 0 : i32
    %c0_i32_0 = arith.constant 0 : i32
    %c0_i32_1 = arith.constant 0 : i32
    return %c0_i32, %c0_i32_0 : i32, i32
  }
  func.func @transform_2(%arg0: i32) -> (i32, i32) {
    %c0_i32 = arith.constant 0 : i32
    %c0_i32_0 = arith.constant 0 : i32
    %c0_i32_1 = arith.constant 0 : i32
    return %c0_i32, %c0_i32_0 : i32, i32
  }
  func.func @transform_3(%arg0: i32) -> (i32, i32) {
    %c0_i32 = arith.constant 0 : i32
    %c0_i32_0 = arith.constant 0 : i32
    return %arg0, %c0_i32 : i32, i32
  }
}

module attributes {stable_mosaic.version = 11 : i64} {
  func.func @_mm_kernel(%arg0: i32, %arg1: i32, %arg2: i32, %arg3: memref<16x128xbf16, #tpu.memory_space<vmem>>, %arg4: memref<128x128xbf16, #tpu.memory_space<vmem>>, %arg5: memref<16x128xf32, #tpu.memory_space<vmem>>, %arg6: memref<16x128xf32, #tpu.memory_space<vmem>>) attributes {dimension_semantics = [#tpu.dimension_semantics<parallel>, #tpu.dimension_semantics<parallel>, #tpu.dimension_semantics<arbitrary>], iteration_bounds = array<i64: 1, 1, 1>, scalar_prefetch = 0 : i64, scratch_operands = 1 : i64, tpu.core_type = #tpu.core_type<tc>, window_params = [{transform_indices = @transform_0, window_bounds = array<i64: 16, 128>}, {transform_indices = @transform_1, window_bounds = array<i64: 128, 128>}, {transform_indices = @transform_2, window_bounds = array<i64: 16, 128>}]} {
    %c0_i32 = arith.constant 0 : i32
    %0 = arith.cmpi eq, %arg2, %c0_i32 : i32
    %1 = arith.extui %0 : i1 to i32
    %c0_i32_0 = arith.constant 0 : i32
    %2 = arith.cmpi ne, %1, %c0_i32_0 : i32
    scf.if %2 {
      %cst_10 = arith.constant 0.000000e+00 : f32
      %12 = vector.broadcast %cst_10 : f32 to vector<16x128xf32>
      %c0_11 = arith.constant 0 : index
      %c0_12 = arith.constant 0 : index
      %13 = vector.load %arg6[%c0_11, %c0_12] : memref<16x128xf32, #tpu.memory_space<vmem>>, vector<16x128xf32>
      tpu.vector_store %arg6[%c0_11, %c0_12], %12 {strides = array<i32>} : memref<16x128xf32, #tpu.memory_space<vmem>>, vector<16x128xf32>,
    } else {
    }
    %c0 = arith.constant 0 : index
    %c0_1 = arith.constant 0 : index
    %3 = vector.load %arg6[%c0, %c0_1] : memref<16x128xf32, #tpu.memory_space<vmem>>, vector<16x128xf32>
    %c0_2 = arith.constant 0 : index
    %c0_3 = arith.constant 0 : index
    %4 = vector.load %arg3[%c0_2, %c0_3] : memref<16x128xbf16, #tpu.memory_space<vmem>>, vector<16x128xbf16>
    %c0_4 = arith.constant 0 : index
    %c0_5 = arith.constant 0 : index
    %5 = vector.load %arg4[%c0_4, %c0_5] : memref<128x128xbf16, #tpu.memory_space<vmem>>, vector<128x128xbf16>
    %cst = arith.constant dense<0.000000e+00> : vector<16x128xf32>
    %6 = tpu.matmul %4, %5, %cst {dimension_numbers = #tpu.dot_dimension_numbers<[1], [0], [0], [1], [0, 0, 1, 1], [], []>} : vector<16x128xbf16>, vector<128x128xbf16>, vector<16x128xf32> -> vector<16x128xf32>
    %7 = arith.addf %3, %6 : vector<16x128xf32>
    %c0_6 = arith.constant 0 : index
    %c0_7 = arith.constant 0 : index
    %8 = vector.load %arg6[%c0_6, %c0_7] : memref<16x128xf32, #tpu.memory_space<vmem>>, vector<16x128xf32>
    tpu.vector_store %arg6[%c0_6, %c0_7], %7 {strides = array<i32>} : memref<16x128xf32, #tpu.memory_space<vmem>>, vector<16x128xf32>,
    %c0_i32_8 = arith.constant 0 : i32
    %9 = arith.cmpi eq, %arg2, %c0_i32_8 : i32
    %10 = arith.extui %9 : i1 to i32
    %c0_i32_9 = arith.constant 0 : i32
    %11 = arith.cmpi ne, %10, %c0_i32_9 : i32
    scf.if %11 {
      %c0_10 = arith.constant 0 : index
      %c0_11 = arith.constant 0 : index
      %12 = vector.load %arg6[%c0_10, %c0_11] : memref<16x128xf32, #tpu.memory_space<vmem>>, vector<16x128xf32>
      %c0_12 = arith.constant 0 : index
      %c0_13 = arith.constant 0 : index
      %13 = vector.load %arg5[%c0_12, %c0_13] : memref<16x128xf32, #tpu.memory_space<vmem>>, vector<16x128xf32>
      tpu.vector_store %arg5[%c0_12, %c0_13], %12 {strides = array<i32>} : memref<16x128xf32, #tpu.memory_space<vmem>>, vector<16x128xf32>,
    } else {
    }
    return
  }
  func.func @transform_0(%arg0: i32, %arg1: i32, %arg2: i32) -> (i32, i32) {
    %c0_i32 = arith.constant 0 : i32
    return %arg0, %arg2 : i32, i32
  }
  func.func @transform_1(%arg0: i32, %arg1: i32, %arg2: i32) -> (i32, i32) {
    %c0_i32 = arith.constant 0 : i32
    return %arg2, %arg1 : i32, i32
  }
  func.func @transform_2(%arg0: i32, %arg1: i32, %arg2: i32) -> (i32, i32) {
    %c0_i32 = arith.constant 0 : i32
    return %arg0, %arg1 : i32, i32
  }
}

module attributes {stable_mosaic.version = 11 : i64} {
  func.func @_wkv7_kernel(%arg0: i32, %arg1: memref<1x8x64xf32, #tpu.memory_space<vmem>>, %arg2: memref<1x8x64xf32, #tpu.memory_space<vmem>>, %arg3: memref<1x8x64xf32, #tpu.memory_space<vmem>>, %arg4: memref<1x8x64xf32, #tpu.memory_space<vmem>>, %arg5: memref<1x8x64xf32, #tpu.memory_space<vmem>>, %arg6: memref<1x8x64xf32, #tpu.memory_space<vmem>>, %arg7: memref<1x64x64xf32, #tpu.memory_space<vmem>>, %arg8: memref<1x8x64xf32, #tpu.memory_space<vmem>>, %arg9: memref<1x64x64xf32, #tpu.memory_space<vmem>>) attributes {dimension_semantics = [#tpu.dimension_semantics<parallel>], iteration_bounds = array<i64: 4>, scalar_prefetch = 0 : i64, scratch_operands = 0 : i64, tpu.core_type = #tpu.core_type<tc>, window_params = [{transform_indices = @transform_0, window_bounds = array<i64: 1, 8, 64>}, {transform_indices = @transform_1, window_bounds = array<i64: 1, 8, 64>}, {transform_indices = @transform_2, window_bounds = array<i64: 1, 8, 64>}, {transform_indices = @transform_3, window_bounds = array<i64: 1, 8, 64>}, {transform_indices = @transform_4, window_bounds = array<i64: 1, 8, 64>}, {transform_indices = @transform_5, window_bounds = array<i64: 1, 8, 64>}, {transform_indices = @transform_6, window_bounds = array<i64: 1, 64, 64>}, {transform_indices = @transform_7, window_bounds = array<i64: 1, 8, 64>}, {transform_indices = @transform_8, window_bounds = array<i64: 1, 64, 64>}]} {
    %c0 = arith.constant 0 : index
    %c0_0 = arith.constant 0 : index
    %c0_1 = arith.constant 0 : index
    %0 = vector.load %arg2[%c0, %c0_0, %c0_1] : memref<1x8x64xf32, #tpu.memory_space<vmem>>, vector<1x8x64xf32>
    %1 = vector.shape_cast %0 : vector<1x8x64xf32> to vector<8x64xf32>
    %2 = math.exp %1 : vector<8x64xf32>
    %cst = arith.constant 0.000000e+00 : f32
    %3 = vector.broadcast %cst : f32 to vector<8x64xf32>
    %4 = arith.subf %3, %2 : vector<8x64xf32>
    %5 = math.exp %4 : vector<8x64xf32>
    %c0_2 = arith.constant 0 : index
    %c0_3 = arith.constant 0 : index
    %c0_4 = arith.constant 0 : index
    %6 = vector.load %arg1[%c0_2, %c0_3, %c0_4] : memref<1x8x64xf32, #tpu.memory_space<vmem>>, vector<1x8x64xf32>
    %7 = vector.shape_cast %6 : vector<1x8x64xf32> to vector<8x64xf32>
    %c0_5 = arith.constant 0 : index
    %c0_6 = arith.constant 0 : index
    %c0_7 = arith.constant 0 : index
    %8 = vector.load %arg3[%c0_5, %c0_6, %c0_7] : memref<1x8x64xf32, #tpu.memory_space<vmem>>, vector<1x8x64xf32>
    %9 = vector.shape_cast %8 : vector<1x8x64xf32> to vector<8x64xf32>
    %c0_8 = arith.constant 0 : index
    %c0_9 = arith.constant 0 : index
    %c0_10 = arith.constant 0 : index
    %10 = vector.load %arg4[%c0_8, %c0_9, %c0_10] : memref<1x8x64xf32, #tpu.memory_space<vmem>>, vector<1x8x64xf32>
    %11 = vector.shape_cast %10 : vector<1x8x64xf32> to vector<8x64xf32>
    %c0_11 = arith.constant 0 : index
    %c0_12 = arith.constant 0 : index
    %c0_13 = arith.constant 0 : index
    %12 = vector.load %arg5[%c0_11, %c0_12, %c0_13] : memref<1x8x64xf32, #tpu.memory_space<vmem>>, vector<1x8x64xf32>
    %13 = vector.shape_cast %12 : vector<1x8x64xf32> to vector<8x64xf32>
    %c0_14 = arith.constant 0 : index
    %c0_15 = arith.constant 0 : index
    %c0_16 = arith.constant 0 : index
    %14 = vector.load %arg6[%c0_14, %c0_15, %c0_16] : memref<1x8x64xf32, #tpu.memory_space<vmem>>, vector<1x8x64xf32>
    %15 = vector.shape_cast %14 : vector<1x8x64xf32> to vector<8x64xf32>
    %c0_17 = arith.constant 0 : index
    %c0_18 = arith.constant 0 : index
    %c0_19 = arith.constant 0 : index
    %16 = vector.load %arg7[%c0_17, %c0_18, %c0_19] : memref<1x64x64xf32, #tpu.memory_space<vmem>>, vector<1x64x64xf32>
    %17 = vector.shape_cast %16 : vector<1x64x64xf32> to vector<64x64xf32>
    %18 = vector.extract_strided_slice %7 {offsets = [0, 0], sizes = [1, 64], strides = [1, 1]} : vector<8x64xf32> to vector<1x64xf32>
    %19 = vector.extract_strided_slice %5 {offsets = [0, 0], sizes = [1, 64], strides = [1, 1]} : vector<8x64xf32> to vector<1x64xf32>
    %20 = vector.extract_strided_slice %9 {offsets = [0, 0], sizes = [1, 64], strides = [1, 1]} : vector<8x64xf32> to vector<1x64xf32>
    %21 = vector.extract_strided_slice %11 {offsets = [0, 0], sizes = [1, 64], strides = [1, 1]} : vector<8x64xf32> to vector<1x64xf32>
    %22 = vector.extract_strided_slice %13 {offsets = [0, 0], sizes = [1, 64], strides = [1, 1]} : vector<8x64xf32> to vector<1x64xf32>
    %23 = vector.extract_strided_slice %15 {offsets = [0, 0], sizes = [1, 64], strides = [1, 1]} : vector<8x64xf32> to vector<1x64xf32>
    %24 = vector.broadcast %22 : vector<1x64xf32> to vector<64x64xf32>
    %25 = arith.mulf %17, %24 : vector<64x64xf32>
    %cst_20 = arith.constant dense<0.000000e+00> : vector<64xf32>
    %26 = vector.multi_reduction <add>, %25, %cst_20 [1] : vector<64x64xf32> to vector<64xf32>
    %27 = vector.shape_cast %26 : vector<64xf32> to vector<64x1xf32>
    %28 = vector.broadcast %19 : vector<1x64xf32> to vector<64x64xf32>
    %29 = arith.mulf %17, %28 : vector<64x64xf32>
    %30 = vector.broadcast %27 : vector<64x1xf32> to vector<64x64xf32>
    %31 = vector.broadcast %23 : vector<1x64xf32> to vector<64x64xf32>
    %32 = arith.mulf %30, %31 : vector<64x64xf32>
    %33 = arith.addf %29, %32 : vector<64x64xf32>
    %34 = tpu.transpose %21, [1, 0] : vector<1x64xf32> -> vector<64x1xf32>
    %35 = vector.broadcast %34 : vector<64x1xf32> to vector<64x64xf32>
    %36 = vector.broadcast %20 : vector<1x64xf32> to vector<64x64xf32>
    %37 = arith.mulf %35, %36 : vector<64x64xf32>
    %38 = arith.addf %33, %37 : vector<64x64xf32>
    %39 = vector.broadcast %18 : vector<1x64xf32> to vector<64x64xf32>
    %40 = arith.mulf %38, %39 : vector<64x64xf32>
    %cst_21 = arith.constant dense<0.000000e+00> : vector<64xf32>
    %41 = vector.multi_reduction <add>, %40, %cst_21 [1] : vector<64x64xf32> to vector<64xf32>
    %42 = vector.shape_cast %41 : vector<64xf32> to vector<64x1xf32>
    %43 = tpu.transpose %42, [1, 0] : vector<64x1xf32> -> vector<1x64xf32>
    %44 = vector.extract_strided_slice %7 {offsets = [1, 0], sizes = [1, 64], strides = [1, 1]} : vector<8x64xf32> to vector<1x64xf32>
    %45 = vector.extract_strided_slice %5 {offsets = [1, 0], sizes = [1, 64], strides = [1, 1]} : vector<8x64xf32> to vector<1x64xf32>
    %46 = vector.extract_strided_slice %9 {offsets = [1, 0], sizes = [1, 64], strides = [1, 1]} : vector<8x64xf32> to vector<1x64xf32>
    %47 = vector.extract_strided_slice %11 {offsets = [1, 0], sizes = [1, 64], strides = [1, 1]} : vector<8x64xf32> to vector<1x64xf32>
    %48 = vector.extract_strided_slice %13 {offsets = [1, 0], sizes = [1, 64], strides = [1, 1]} : vector<8x64xf32> to vector<1x64xf32>
    %49 = vector.extract_strided_slice %15 {offsets = [1, 0], sizes = [1, 64], strides = [1, 1]} : vector<8x64xf32> to vector<1x64xf32>
    %50 = vector.broadcast %48 : vector<1x64xf32> to vector<64x64xf32>
    %51 = arith.mulf %38, %50 : vector<64x64xf32>
    %cst_22 = arith.constant dense<0.000000e+00> : vector<64xf32>
    %52 = vector.multi_reduction <add>, %51, %cst_22 [1] : vector<64x64xf32> to vector<64xf32>
    %53 = vector.shape_cast %52 : vector<64xf32> to vector<64x1xf32>
    %54 = vector.broadcast %45 : vector<1x64xf32> to vector<64x64xf32>
    %55 = arith.mulf %38, %54 : vector<64x64xf32>
    %56 = vector.broadcast %53 : vector<64x1xf32> to vector<64x64xf32>
    %57 = vector.broadcast %49 : vector<1x64xf32> to vector<64x64xf32>
    %58 = arith.mulf %56, %57 : vector<64x64xf32>
    %59 = arith.addf %55, %58 : vector<64x64xf32>
    %60 = tpu.transpose %47, [1, 0] : vector<1x64xf32> -> vector<64x1xf32>
    %61 = vector.broadcast %60 : vector<64x1xf32> to vector<64x64xf32>
    %62 = vector.broadcast %46 : vector<1x64xf32> to vector<64x64xf32>
    %63 = arith.mulf %61, %62 : vector<64x64xf32>
    %64 = arith.addf %59, %63 : vector<64x64xf32>
    %65 = vector.broadcast %44 : vector<1x64xf32> to vector<64x64xf32>
    %66 = arith.mulf %64, %65 : vector<64x64xf32>
    %cst_23 = arith.constant dense<0.000000e+00> : vector<64xf32>
    %67 = vector.multi_reduction <add>, %66, %cst_23 [1] : vector<64x64xf32> to vector<64xf32>
    %68 = vector.shape_cast %67 : vector<64xf32> to vector<64x1xf32>
    %69 = tpu.transpose %68, [1, 0] : vector<64x1xf32> -> vector<1x64xf32>
    %70 = vector.extract_strided_slice %7 {offsets = [2, 0], sizes = [1, 64], strides = [1, 1]} : vector<8x64xf32> to vector<1x64xf32>
    %71 = vector.extract_strided_slice %5 {offsets = [2, 0], sizes = [1, 64], strides = [1, 1]} : vector<8x64xf32> to vector<1x64xf32>
    %72 = vector.extract_strided_slice %9 {offsets = [2, 0], sizes = [1, 64], strides = [1, 1]} : vector<8x64xf32> to vector<1x64xf32>
    %73 = vector.extract_strided_slice %11 {offsets = [2, 0], sizes = [1, 64], strides = [1, 1]} : vector<8x64xf32> to vector<1x64xf32>
    %74 = vector.extract_strided_slice %13 {offsets = [2, 0], sizes = [1, 64], strides = [1, 1]} : vector<8x64xf32> to vector<1x64xf32>
    %75 = vector.extract_strided_slice %15 {offsets = [2, 0], sizes = [1, 64], strides = [1, 1]} : vector<8x64xf32> to vector<1x64xf32>
    %76 = vector.broadcast %74 : vector<1x64xf32> to vector<64x64xf32>
    %77 = arith.mulf %64, %76 : vector<64x64xf32>
    %cst_24 = arith.constant dense<0.000000e+00> : vector<64xf32>
    %78 = vector.multi_reduction <add>, %77, %cst_24 [1] : vector<64x64xf32> to vector<64xf32>
    %79 = vector.shape_cast %78 : vector<64xf32> to vector<64x1xf32>
    %80 = vector.broadcast %71 : vector<1x64xf32> to vector<64x64xf32>
    %81 = arith.mulf %64, %80 : vector<64x64xf32>
    %82 = vector.broadcast %79 : vector<64x1xf32> to vector<64x64xf32>
    %83 = vector.broadcast %75 : vector<1x64xf32> to vector<64x64xf32>
    %84 = arith.mulf %82, %83 : vector<64x64xf32>
    %85 = arith.addf %81, %84 : vector<64x64xf32>
    %86 = tpu.transpose %73, [1, 0] : vector<1x64xf32> -> vector<64x1xf32>
    %87 = vector.broadcast %86 : vector<64x1xf32> to vector<64x64xf32>
    %88 = vector.broadcast %72 : vector<1x64xf32> to vector<64x64xf32>
    %89 = arith.mulf %87, %88 : vector<64x64xf32>
    %90 = arith.addf %85, %89 : vector<64x64xf32>
    %91 = vector.broadcast %70 : vector<1x64xf32> to vector<64x64xf32>
    %92 = arith.mulf %90, %91 : vector<64x64xf32>
    %cst_25 = arith.constant dense<0.000000e+00> : vector<64xf32>
    %93 = vector.multi_reduction <add>, %92, %cst_25 [1] : vector<64x64xf32> to vector<64xf32>
    %94 = vector.shape_cast %93 : vector<64xf32> to vector<64x1xf32>
    %95 = tpu.transpose %94, [1, 0] : vector<64x1xf32> -> vector<1x64xf32>
    %96 = vector.extract_strided_slice %7 {offsets = [3, 0], sizes = [1, 64], strides = [1, 1]} : vector<8x64xf32> to vector<1x64xf32>
    %97 = vector.extract_strided_slice %5 {offsets = [3, 0], sizes = [1, 64], strides = [1, 1]} : vector<8x64xf32> to vector<1x64xf32>
    %98 = vector.extract_strided_slice %9 {offsets = [3, 0], sizes = [1, 64], strides = [1, 1]} : vector<8x64xf32> to vector<1x64xf32>
    %99 = vector.extract_strided_slice %11 {offsets = [3, 0], sizes = [1, 64], strides = [1, 1]} : vector<8x64xf32> to vector<1x64xf32>
    %100 = vector.extract_strided_slice %13 {offsets = [3, 0], sizes = [1, 64], strides = [1, 1]} : vector<8x64xf32> to vector<1x64xf32>
    %101 = vector.extract_strided_slice %15 {offsets = [3, 0], sizes = [1, 64], strides = [1, 1]} : vector<8x64xf32> to vector<1x64xf32>
    %102 = vector.broadcast %100 : vector<1x64xf32> to vector<64x64xf32>
    %103 = arith.mulf %90, %102 : vector<64x64xf32>
    %cst_26 = arith.constant dense<0.000000e+00> : vector<64xf32>
    %104 = vector.multi_reduction <add>, %103, %cst_26 [1] : vector<64x64xf32> to vector<64xf32>
    %105 = vector.shape_cast %104 : vector<64xf32> to vector<64x1xf32>
    %106 = vector.broadcast %97 : vector<1x64xf32> to vector<64x64xf32>
    %107 = arith.mulf %90, %106 : vector<64x64xf32>
    %108 = vector.broadcast %105 : vector<64x1xf32> to vector<64x64xf32>
    %109 = vector.broadcast %101 : vector<1x64xf32> to vector<64x64xf32>
    %110 = arith.mulf %108, %109 : vector<64x64xf32>
    %111 = arith.addf %107, %110 : vector<64x64xf32>
    %112 = tpu.transpose %99, [1, 0] : vector<1x64xf32> -> vector<64x1xf32>
    %113 = vector.broadcast %112 : vector<64x1xf32> to vector<64x64xf32>
    %114 = vector.broadcast %98 : vector<1x64xf32> to vector<64x64xf32>
    %115 = arith.mulf %113, %114 : vector<64x64xf32>
    %116 = arith.addf %111, %115 : vector<64x64xf32>
    %117 = vector.broadcast %96 : vector<1x64xf32> to vector<64x64xf32>
    %118 = arith.mulf %116, %117 : vector<64x64xf32>
    %cst_27 = arith.constant dense<0.000000e+00> : vector<64xf32>
    %119 = vector.multi_reduction <add>, %118, %cst_27 [1] : vector<64x64xf32> to vector<64xf32>
    %120 = vector.shape_cast %119 : vector<64xf32> to vector<64x1xf32>
    %121 = tpu.transpose %120, [1, 0] : vector<64x1xf32> -> vector<1x64xf32>
    %122 = vector.extract_strided_slice %7 {offsets = [4, 0], sizes = [1, 64], strides = [1, 1]} : vector<8x64xf32> to vector<1x64xf32>
    %123 = vector.extract_strided_slice %5 {offsets = [4, 0], sizes = [1, 64], strides = [1, 1]} : vector<8x64xf32> to vector<1x64xf32>
    %124 = vector.extract_strided_slice %9 {offsets = [4, 0], sizes = [1, 64], strides = [1, 1]} : vector<8x64xf32> to vector<1x64xf32>
    %125 = vector.extract_strided_slice %11 {offsets = [4, 0], sizes = [1, 64], strides = [1, 1]} : vector<8x64xf32> to vector<1x64xf32>
    %126 = vector.extract_strided_slice %13 {offsets = [4, 0], sizes = [1, 64], strides = [1, 1]} : vector<8x64xf32> to vector<1x64xf32>
    %127 = vector.extract_strided_slice %15 {offsets = [4, 0], sizes = [1, 64], strides = [1, 1]} : vector<8x64xf32> to vector<1x64xf32>
    %128 = vector.broadcast %126 : vector<1x64xf32> to vector<64x64xf32>
    %129 = arith.mulf %116, %128 : vector<64x64xf32>
    %cst_28 = arith.constant dense<0.000000e+00> : vector<64xf32>
    %130 = vector.multi_reduction <add>, %129, %cst_28 [1] : vector<64x64xf32> to vector<64xf32>
    %131 = vector.shape_cast %130 : vector<64xf32> to vector<64x1xf32>
    %132 = vector.broadcast %123 : vector<1x64xf32> to vector<64x64xf32>
    %133 = arith.mulf %116, %132 : vector<64x64xf32>
    %134 = vector.broadcast %131 : vector<64x1xf32> to vector<64x64xf32>
    %135 = vector.broadcast %127 : vector<1x64xf32> to vector<64x64xf32>
    %136 = arith.mulf %134, %135 : vector<64x64xf32>
    %137 = arith.addf %133, %136 : vector<64x64xf32>
    %138 = tpu.transpose %125, [1, 0] : vector<1x64xf32> -> vector<64x1xf32>
    %139 = vector.broadcast %138 : vector<64x1xf32> to vector<64x64xf32>
    %140 = vector.broadcast %124 : vector<1x64xf32> to vector<64x64xf32>
    %141 = arith.mulf %139, %140 : vector<64x64xf32>
    %142 = arith.addf %137, %141 : vector<64x64xf32>
    %143 = vector.broadcast %122 : vector<1x64xf32> to vector<64x64xf32>
    %144 = arith.mulf %142, %143 : vector<64x64xf32>
    %cst_29 = arith.constant dense<0.000000e+00> : vector<64xf32>
    %145 = vector.multi_reduction <add>, %144, %cst_29 [1] : vector<64x64xf32> to vector<64xf32>
    %146 = vector.shape_cast %145 : vector<64xf32> to vector<64x1xf32>
    %147 = tpu.transpose %146, [1, 0] : vector<64x1xf32> -> vector<1x64xf32>
    %148 = vector.extract_strided_slice %7 {offsets = [5, 0], sizes = [1, 64], strides = [1, 1]} : vector<8x64xf32> to vector<1x64xf32>
    %149 = vector.extract_strided_slice %5 {offsets = [5, 0], sizes = [1, 64], strides = [1, 1]} : vector<8x64xf32> to vector<1x64xf32>
    %150 = vector.extract_strided_slice %9 {offsets = [5, 0], sizes = [1, 64], strides = [1, 1]} : vector<8x64xf32> to vector<1x64xf32>
    %151 = vector.extract_strided_slice %11 {offsets = [5, 0], sizes = [1, 64], strides = [1, 1]} : vector<8x64xf32> to vector<1x64xf32>
    %152 = vector.extract_strided_slice %13 {offsets = [5, 0], sizes = [1, 64], strides = [1, 1]} : vector<8x64xf32> to vector<1x64xf32>
    %153 = vector.extract_strided_slice %15 {offsets = [5, 0], sizes = [1, 64], strides = [1, 1]} : vector<8x64xf32> to vector<1x64xf32>
    %154 = vector.broadcast %152 : vector<1x64xf32> to vector<64x64xf32>
    %155 = arith.mulf %142, %154 : vector<64x64xf32>
    %cst_30 = arith.constant dense<0.000000e+00> : vector<64xf32>
    %156 = vector.multi_reduction <add>, %155, %cst_30 [1] : vector<64x64xf32> to vector<64xf32>
    %157 = vector.shape_cast %156 : vector<64xf32> to vector<64x1xf32>
    %158 = vector.broadcast %149 : vector<1x64xf32> to vector<64x64xf32>
    %159 = arith.mulf %142, %158 : vector<64x64xf32>
    %160 = vector.broadcast %157 : vector<64x1xf32> to vector<64x64xf32>
    %161 = vector.broadcast %153 : vector<1x64xf32> to vector<64x64xf32>
    %162 = arith.mulf %160, %161 : vector<64x64xf32>
    %163 = arith.addf %159, %162 : vector<64x64xf32>
    %164 = tpu.transpose %151, [1, 0] : vector<1x64xf32> -> vector<64x1xf32>
    %165 = vector.broadcast %164 : vector<64x1xf32> to vector<64x64xf32>
    %166 = vector.broadcast %150 : vector<1x64xf32> to vector<64x64xf32>
    %167 = arith.mulf %165, %166 : vector<64x64xf32>
    %168 = arith.addf %163, %167 : vector<64x64xf32>
    %169 = vector.broadcast %148 : vector<1x64xf32> to vector<64x64xf32>
    %170 = arith.mulf %168, %169 : vector<64x64xf32>
    %cst_31 = arith.constant dense<0.000000e+00> : vector<64xf32>
    %171 = vector.multi_reduction <add>, %170, %cst_31 [1] : vector<64x64xf32> to vector<64xf32>
    %172 = vector.shape_cast %171 : vector<64xf32> to vector<64x1xf32>
    %173 = tpu.transpose %172, [1, 0] : vector<64x1xf32> -> vector<1x64xf32>
    %174 = vector.extract_strided_slice %7 {offsets = [6, 0], sizes = [1, 64], strides = [1, 1]} : vector<8x64xf32> to vector<1x64xf32>
    %175 = vector.extract_strided_slice %5 {offsets = [6, 0], sizes = [1, 64], strides = [1, 1]} : vector<8x64xf32> to vector<1x64xf32>
    %176 = vector.extract_strided_slice %9 {offsets = [6, 0], sizes = [1, 64], strides = [1, 1]} : vector<8x64xf32> to vector<1x64xf32>
    %177 = vector.extract_strided_slice %11 {offsets = [6, 0], sizes = [1, 64], strides = [1, 1]} : vector<8x64xf32> to vector<1x64xf32>
    %178 = vector.extract_strided_slice %13 {offsets = [6, 0], sizes = [1, 64], strides = [1, 1]} : vector<8x64xf32> to vector<1x64xf32>
    %179 = vector.extract_strided_slice %15 {offsets = [6, 0], sizes = [1, 64], strides = [1, 1]} : vector<8x64xf32> to vector<1x64xf32>
    %180 = vector.broadcast %178 : vector<1x64xf32> to vector<64x64xf32>
    %181 = arith.mulf %168, %180 : vector<64x64xf32>
    %cst_32 = arith.constant dense<0.000000e+00> : vector<64xf32>
    %182 = vector.multi_reduction <add>, %181, %cst_32 [1] : vector<64x64xf32> to vector<64xf32>
    %183 = vector.shape_cast %182 : vector<64xf32> to vector<64x1xf32>
    %184 = vector.broadcast %175 : vector<1x64xf32> to vector<64x64xf32>
    %185 = arith.mulf %168, %184 : vector<64x64xf32>
    %186 = vector.broadcast %183 : vector<64x1xf32> to vector<64x64xf32>
    %187 = vector.broadcast %179 : vector<1x64xf32> to vector<64x64xf32>
    %188 = arith.mulf %186, %187 : vector<64x64xf32>
    %189 = arith.addf %185, %188 : vector<64x64xf32>
    %190 = tpu.transpose %177, [1, 0] : vector<1x64xf32> -> vector<64x1xf32>
    %191 = vector.broadcast %190 : vector<64x1xf32> to vector<64x64xf32>
    %192 = vector.broadcast %176 : vector<1x64xf32> to vector<64x64xf32>
    %193 = arith.mulf %191, %192 : vector<64x64xf32>
    %194 = arith.addf %189, %193 : vector<64x64xf32>
    %195 = vector.broadcast %174 : vector<1x64xf32> to vector<64x64xf32>
    %196 = arith.mulf %194, %195 : vector<64x64xf32>
    %cst_33 = arith.constant dense<0.000000e+00> : vector<64xf32>
    %197 = vector.multi_reduction <add>, %196, %cst_33 [1] : vector<64x64xf32> to vector<64xf32>
    %198 = vector.shape_cast %197 : vector<64xf32> to vector<64x1xf32>
    %199 = tpu.transpose %198, [1, 0] : vector<64x1xf32> -> vector<1x64xf32>
    %200 = vector.extract_strided_slice %7 {offsets = [7, 0], sizes = [1, 64], strides = [1, 1]} : vector<8x64xf32> to vector<1x64xf32>
    %201 = vector.extract_strided_slice %5 {offsets = [7, 0], sizes = [1, 64], strides = [1, 1]} : vector<8x64xf32> to vector<1x64xf32>
    %202 = vector.extract_strided_slice %9 {offsets = [7, 0], sizes = [1, 64], strides = [1, 1]} : vector<8x64xf32> to vector<1x64xf32>
    %203 = vector.extract_strided_slice %11 {offsets = [7, 0], sizes = [1, 64], strides = [1, 1]} : vector<8x64xf32> to vector<1x64xf32>
    %204 = vector.extract_strided_slice %13 {offsets = [7, 0], sizes = [1, 64], strides = [1, 1]} : vector<8x64xf32> to vector<1x64xf32>
    %205 = vector.extract_strided_slice %15 {offsets = [7, 0], sizes = [1, 64], strides = [1, 1]} : vector<8x64xf32> to vector<1x64xf32>
    %206 = vector.broadcast %204 : vector<1x64xf32> to vector<64x64xf32>
    %207 = arith.mulf %194, %206 : vector<64x64xf32>
    %cst_34 = arith.constant dense<0.000000e+00> : vector<64xf32>
    %208 = vector.multi_reduction <add>, %207, %cst_34 [1] : vector<64x64xf32> to vector<64xf32>
    %209 = vector.shape_cast %208 : vector<64xf32> to vector<64x1xf32>
    %210 = vector.broadcast %201 : vector<1x64xf32> to vector<64x64xf32>
    %211 = arith.mulf %194, %210 : vector<64x64xf32>
    %212 = vector.broadcast %209 : vector<64x1xf32> to vector<64x64xf32>
    %213 = vector.broadcast %205 : vector<1x64xf32> to vector<64x64xf32>
    %214 = arith.mulf %212, %213 : vector<64x64xf32>
    %215 = arith.addf %211, %214 : vector<64x64xf32>
    %216 = tpu.transpose %203, [1, 0] : vector<1x64xf32> -> vector<64x1xf32>
    %217 = vector.broadcast %216 : vector<64x1xf32> to vector<64x64xf32>
    %218 = vector.broadcast %202 : vector<1x64xf32> to vector<64x64xf32>
    %219 = arith.mulf %217, %218 : vector<64x64xf32>
    %220 = arith.addf %215, %219 : vector<64x64xf32>
    %221 = vector.broadcast %200 : vector<1x64xf32> to vector<64x64xf32>
    %222 = arith.mulf %220, %221 : vector<64x64xf32>
    %cst_35 = arith.constant dense<0.000000e+00> : vector<64xf32>
    %223 = vector.multi_reduction <add>, %222, %cst_35 [1] : vector<64x64xf32> to vector<64xf32>
    %224 = vector.shape_cast %223 : vector<64xf32> to vector<64x1xf32>
    %225 = tpu.transpose %224, [1, 0] : vector<64x1xf32> -> vector<1x64xf32>
    %226 = tpu.concatenate %43, %69, %95, %121, %147, %173, %199, %225 in 0 : vector<1x64xf32>, vector<1x64xf32>, vector<1x64xf32>, vector<1x64xf32>, vector<1x64xf32>, vector<1x64xf32>, vector<1x64xf32>, vector<1x64xf32> -> vector<8x64xf32>
    %c0_36 = arith.constant 0 : index
    %c0_37 = arith.constant 0 : index
    %c0_38 = arith.constant 0 : index
    %227 = vector.load %arg8[%c0_36, %c0_37, %c0_38] : memref<1x8x64xf32, #tpu.memory_space<vmem>>, vector<1x8x64xf32>
    %228 = vector.shape_cast %227 : vector<1x8x64xf32> to vector<8x64xf32>
    %229 = vector.shape_cast %226 : vector<8x64xf32> to vector<1x8x64xf32>
    tpu.vector_store %arg8[%c0_36, %c0_37, %c0_38], %229 {strides = array<i32>} : memref<1x8x64xf32, #tpu.memory_space<vmem>>, vector<1x8x64xf32>,
    %c0_39 = arith.constant 0 : index
    %c0_40 = arith.constant 0 : index
    %c0_41 = arith.constant 0 : index
    %230 = vector.load %arg9[%c0_39, %c0_40, %c0_41] : memref<1x64x64xf32, #tpu.memory_space<vmem>>, vector<1x64x64xf32>
    %231 = vector.shape_cast %230 : vector<1x64x64xf32> to vector<64x64xf32>
    %232 = vector.shape_cast %220 : vector<64x64xf32> to vector<1x64x64xf32>
    tpu.vector_store %arg9[%c0_39, %c0_40, %c0_41], %232 {strides = array<i32>} : memref<1x64x64xf32, #tpu.memory_space<vmem>>, vector<1x64x64xf32>,
    return
  }
  func.func @transform_0(%arg0: i32) -> (i32, i32, i32) {
    %c0_i32 = arith.constant 0 : i32
    %c0_i32_0 = arith.constant 0 : i32
    %c0_i32_1 = arith.constant 0 : i32
    return %arg0, %c0_i32, %c0_i32_0 : i32, i32, i32
  }
  func.func @transform_1(%arg0: i32) -> (i32, i32, i32) {
    %c0_i32 = arith.constant 0 : i32
    %c0_i32_0 = arith.constant 0 : i32
    %c0_i32_1 = arith.constant 0 : i32
    return %arg0, %c0_i32, %c0_i32_0 : i32, i32, i32
  }
  func.func @transform_2(%arg0: i32) -> (i32, i32, i32) {
    %c0_i32 = arith.constant 0 : i32
    %c0_i32_0 = arith.constant 0 : i32
    %c0_i32_1 = arith.constant 0 : i32
    return %arg0, %c0_i32, %c0_i32_0 : i32, i32, i32
  }
  func.func @transform_3(%arg0: i32) -> (i32, i32, i32) {
    %c0_i32 = arith.constant 0 : i32
    %c0_i32_0 = arith.constant 0 : i32
    %c0_i32_1 = arith.constant 0 : i32
    return %arg0, %c0_i32, %c0_i32_0 : i32, i32, i32
  }
  func.func @transform_4(%arg0: i32) -> (i32, i32, i32) {
    %c0_i32 = arith.constant 0 : i32
    %c0_i32_0 = arith.constant 0 : i32
    %c0_i32_1 = arith.constant 0 : i32
    return %arg0, %c0_i32, %c0_i32_0 : i32, i32, i32
  }
  func.func @transform_5(%arg0: i32) -> (i32, i32, i32) {
    %c0_i32 = arith.constant 0 : i32
    %c0_i32_0 = arith.constant 0 : i32
    %c0_i32_1 = arith.constant 0 : i32
    return %arg0, %c0_i32, %c0_i32_0 : i32, i32, i32
  }
  func.func @transform_6(%arg0: i32) -> (i32, i32, i32) {
    %c0_i32 = arith.constant 0 : i32
    %c0_i32_0 = arith.constant 0 : i32
    %c0_i32_1 = arith.constant 0 : i32
    return %arg0, %c0_i32, %c0_i32_0 : i32, i32, i32
  }
  func.func @transform_7(%arg0: i32) -> (i32, i32, i32) {
    %c0_i32 = arith.constant 0 : i32
    %c0_i32_0 = arith.constant 0 : i32
    %c0_i32_1 = arith.constant 0 : i32
    return %arg0, %c0_i32, %c0_i32_0 : i32, i32, i32
  }
  func.func @transform_8(%arg0: i32) -> (i32, i32, i32) {
    %c0_i32 = arith.constant 0 : i32
    %c0_i32_0 = arith.constant 0 : i32
    %c0_i32_1 = arith.constant 0 : i32
    return %arg0, %c0_i32, %c0_i32_0 : i32, i32, i32
  }
}

module attributes {stable_mosaic.version = 11 : i64} {
  func.func @_mm_kernel(%arg0: i32, %arg1: i32, %arg2: i32, %arg3: memref<16x128xbf16, #tpu.memory_space<vmem>>, %arg4: memref<128x512xbf16, #tpu.memory_space<vmem>>, %arg5: memref<16x512xf32, #tpu.memory_space<vmem>>, %arg6: memref<16x512xf32, #tpu.memory_space<vmem>>) attributes {dimension_semantics = [#tpu.dimension_semantics<parallel>, #tpu.dimension_semantics<parallel>, #tpu.dimension_semantics<arbitrary>], iteration_bounds = array<i64: 1, 1, 1>, scalar_prefetch = 0 : i64, scratch_operands = 1 : i64, tpu.core_type = #tpu.core_type<tc>, window_params = [{transform_indices = @transform_0, window_bounds = array<i64: 16, 128>}, {transform_indices = @transform_1, window_bounds = array<i64: 128, 512>}, {transform_indices = @transform_2, window_bounds = array<i64: 16, 512>}]} {
    %c0_i32 = arith.constant 0 : i32
    %0 = arith.cmpi eq, %arg2, %c0_i32 : i32
    %1 = arith.extui %0 : i1 to i32
    %c0_i32_0 = arith.constant 0 : i32
    %2 = arith.cmpi ne, %1, %c0_i32_0 : i32
    scf.if %2 {
      %cst_10 = arith.constant 0.000000e+00 : f32
      %12 = vector.broadcast %cst_10 : f32 to vector<16x512xf32>
      %c0_11 = arith.constant 0 : index
      %c0_12 = arith.constant 0 : index
      %13 = vector.load %arg6[%c0_11, %c0_12] : memref<16x512xf32, #tpu.memory_space<vmem>>, vector<16x512xf32>
      tpu.vector_store %arg6[%c0_11, %c0_12], %12 {strides = array<i32>} : memref<16x512xf32, #tpu.memory_space<vmem>>, vector<16x512xf32>,
    } else {
    }
    %c0 = arith.constant 0 : index
    %c0_1 = arith.constant 0 : index
    %3 = vector.load %arg6[%c0, %c0_1] : memref<16x512xf32, #tpu.memory_space<vmem>>, vector<16x512xf32>
    %c0_2 = arith.constant 0 : index
    %c0_3 = arith.constant 0 : index
    %4 = vector.load %arg3[%c0_2, %c0_3] : memref<16x128xbf16, #tpu.memory_space<vmem>>, vector<16x128xbf16>
    %c0_4 = arith.constant 0 : index
    %c0_5 = arith.constant 0 : index
    %5 = vector.load %arg4[%c0_4, %c0_5] : memref<128x512xbf16, #tpu.memory_space<vmem>>, vector<128x512xbf16>
    %cst = arith.constant dense<0.000000e+00> : vector<16x512xf32>
    %6 = tpu.matmul %4, %5, %cst {dimension_numbers = #tpu.dot_dimension_numbers<[1], [0], [0], [1], [0, 0, 1, 1], [], []>} : vector<16x128xbf16>, vector<128x512xbf16>, vector<16x512xf32> -> vector<16x512xf32>
    %7 = arith.addf %3, %6 : vector<16x512xf32>
    %c0_6 = arith.constant 0 : index
    %c0_7 = arith.constant 0 : index
    %8 = vector.load %arg6[%c0_6, %c0_7] : memref<16x512xf32, #tpu.memory_space<vmem>>, vector<16x512xf32>
    tpu.vector_store %arg6[%c0_6, %c0_7], %7 {strides = array<i32>} : memref<16x512xf32, #tpu.memory_space<vmem>>, vector<16x512xf32>,
    %c0_i32_8 = arith.constant 0 : i32
    %9 = arith.cmpi eq, %arg2, %c0_i32_8 : i32
    %10 = arith.extui %9 : i1 to i32
    %c0_i32_9 = arith.constant 0 : i32
    %11 = arith.cmpi ne, %10, %c0_i32_9 : i32
    scf.if %11 {
      %c0_10 = arith.constant 0 : index
      %c0_11 = arith.constant 0 : index
      %12 = vector.load %arg6[%c0_10, %c0_11] : memref<16x512xf32, #tpu.memory_space<vmem>>, vector<16x512xf32>
      %c0_12 = arith.constant 0 : index
      %c0_13 = arith.constant 0 : index
      %13 = vector.load %arg5[%c0_12, %c0_13] : memref<16x512xf32, #tpu.memory_space<vmem>>, vector<16x512xf32>
      tpu.vector_store %arg5[%c0_12, %c0_13], %12 {strides = array<i32>} : memref<16x512xf32, #tpu.memory_space<vmem>>, vector<16x512xf32>,
    } else {
    }
    return
  }
  func.func @transform_0(%arg0: i32, %arg1: i32, %arg2: i32) -> (i32, i32) {
    %c0_i32 = arith.constant 0 : i32
    return %arg0, %arg2 : i32, i32
  }
  func.func @transform_1(%arg0: i32, %arg1: i32, %arg2: i32) -> (i32, i32) {
    %c0_i32 = arith.constant 0 : i32
    return %arg2, %arg1 : i32, i32
  }
  func.func @transform_2(%arg0: i32, %arg1: i32, %arg2: i32) -> (i32, i32) {
    %c0_i32 = arith.constant 0 : i32
    return %arg0, %arg1 : i32, i32
  }
}

module attributes {stable_mosaic.version = 11 : i64} {
  func.func @_mm_kernel(%arg0: i32, %arg1: i32, %arg2: i32, %arg3: memref<16x512xbf16, #tpu.memory_space<vmem>>, %arg4: memref<512x128xbf16, #tpu.memory_space<vmem>>, %arg5: memref<16x128xf32, #tpu.memory_space<vmem>>, %arg6: memref<16x128xf32, #tpu.memory_space<vmem>>) attributes {dimension_semantics = [#tpu.dimension_semantics<parallel>, #tpu.dimension_semantics<parallel>, #tpu.dimension_semantics<arbitrary>], iteration_bounds = array<i64: 1, 1, 1>, scalar_prefetch = 0 : i64, scratch_operands = 1 : i64, tpu.core_type = #tpu.core_type<tc>, window_params = [{transform_indices = @transform_0, window_bounds = array<i64: 16, 512>}, {transform_indices = @transform_1, window_bounds = array<i64: 512, 128>}, {transform_indices = @transform_2, window_bounds = array<i64: 16, 128>}]} {
    %c0_i32 = arith.constant 0 : i32
    %0 = arith.cmpi eq, %arg2, %c0_i32 : i32
    %1 = arith.extui %0 : i1 to i32
    %c0_i32_0 = arith.constant 0 : i32
    %2 = arith.cmpi ne, %1, %c0_i32_0 : i32
    scf.if %2 {
      %cst_10 = arith.constant 0.000000e+00 : f32
      %12 = vector.broadcast %cst_10 : f32 to vector<16x128xf32>
      %c0_11 = arith.constant 0 : index
      %c0_12 = arith.constant 0 : index
      %13 = vector.load %arg6[%c0_11, %c0_12] : memref<16x128xf32, #tpu.memory_space<vmem>>, vector<16x128xf32>
      tpu.vector_store %arg6[%c0_11, %c0_12], %12 {strides = array<i32>} : memref<16x128xf32, #tpu.memory_space<vmem>>, vector<16x128xf32>,
    } else {
    }
    %c0 = arith.constant 0 : index
    %c0_1 = arith.constant 0 : index
    %3 = vector.load %arg6[%c0, %c0_1] : memref<16x128xf32, #tpu.memory_space<vmem>>, vector<16x128xf32>
    %c0_2 = arith.constant 0 : index
    %c0_3 = arith.constant 0 : index
    %4 = vector.load %arg3[%c0_2, %c0_3] : memref<16x512xbf16, #tpu.memory_space<vmem>>, vector<16x512xbf16>
    %c0_4 = arith.constant 0 : index
    %c0_5 = arith.constant 0 : index
    %5 = vector.load %arg4[%c0_4, %c0_5] : memref<512x128xbf16, #tpu.memory_space<vmem>>, vector<512x128xbf16>
    %cst = arith.constant dense<0.000000e+00> : vector<16x128xf32>
    %6 = tpu.matmul %4, %5, %cst {dimension_numbers = #tpu.dot_dimension_numbers<[1], [0], [0], [1], [0, 0, 1, 1], [], []>} : vector<16x512xbf16>, vector<512x128xbf16>, vector<16x128xf32> -> vector<16x128xf32>
    %7 = arith.addf %3, %6 : vector<16x128xf32>
    %c0_6 = arith.constant 0 : index
    %c0_7 = arith.constant 0 : index
    %8 = vector.load %arg6[%c0_6, %c0_7] : memref<16x128xf32, #tpu.memory_space<vmem>>, vector<16x128xf32>
    tpu.vector_store %arg6[%c0_6, %c0_7], %7 {strides = array<i32>} : memref<16x128xf32, #tpu.memory_space<vmem>>, vector<16x128xf32>,
    %c0_i32_8 = arith.constant 0 : i32
    %9 = arith.cmpi eq, %arg2, %c0_i32_8 : i32
    %10 = arith.extui %9 : i1 to i32
    %c0_i32_9 = arith.constant 0 : i32
    %11 = arith.cmpi ne, %10, %c0_i32_9 : i32
    scf.if %11 {
      %c0_10 = arith.constant 0 : index
      %c0_11 = arith.constant 0 : index
      %12 = vector.load %arg6[%c0_10, %c0_11] : memref<16x128xf32, #tpu.memory_space<vmem>>, vector<16x128xf32>
      %c0_12 = arith.constant 0 : index
      %c0_13 = arith.constant 0 : index
      %13 = vector.load %arg5[%c0_12, %c0_13] : memref<16x128xf32, #tpu.memory_space<vmem>>, vector<16x128xf32>
      tpu.vector_store %arg5[%c0_12, %c0_13], %12 {strides = array<i32>} : memref<16x128xf32, #tpu.memory_space<vmem>>, vector<16x128xf32>,
    } else {
    }
    return
  }
  func.func @transform_0(%arg0: i32, %arg1: i32, %arg2: i32) -> (i32, i32) {
    %c0_i32 = arith.constant 0 : i32
    return %arg0, %arg2 : i32, i32
  }
  func.func @transform_1(%arg0: i32, %arg1: i32, %arg2: i32) -> (i32, i32) {
    %c0_i32 = arith.constant 0 : i32
    return %arg2, %arg1 : i32, i32
  }
  func.func @transform_2(%arg0: i32, %arg1: i32, %arg2: i32) -> (i32, i32) {
    %c0_i32 = arith.constant 0 : i32
    return %arg0, %arg1 : i32, i32
  }
}

</mosaic_0001>

<llo_original>
// kernel: rwkv7_block_forward.12
$region0: #{rwkv7_block_forward.12}
  #allocation0 [shape = 'u32[]', space=smem, size = 0x4, offset = 0x4, fixed_abs, tag = 'smem constant byte address 0x4 - core index']
  #allocation1 [shape = 'u32[144,128]{1,0:T(1,128)}', space=vmem, size = 0x12000, scoped, tag = 'internal scratch']
  %s0 = inlined_call_operand.vmem [shape: f32[16,128], index: 0, kind: input, shape index: {}]
  %s1 = inlined_call_operand.vmem [shape: f32[1,128], index: 1, kind: input, shape index: {}]
  %s2 = inlined_call_operand.vmem [shape: f32[1,128], index: 2, kind: input, shape index: {}]
  %s3 = inlined_call_operand.vmem [shape: f32[16,128], index: 3, kind: output, shape index: {}]
  %s4 = sld [smem:[#allocation0]]
  $region22: #{rwkv7_block_forward.12} parent=0
    _
  %s6 = ssub.s32 1, %s4
  %s7 = scalar_select 0, %s6, %s4
  // Predicated region
  $region2: #{rwkv7_block_forward.12} parent=0 // pred_check
    _
  $region3: #{rwkv7_block_forward.12} parent=0 // pred_check_branch
    %9 = sbr.rel (0) target = $region5
  $region4: #{rwkv7_block_forward.12} parent=0 // pred_region
    _
  $region5: #{rwkv7_block_forward.12} parent=0 // pred_fallthru
    _
  // Predicated region
  $region6: #{rwkv7_block_forward.12} parent=0 // pred_check
    _
  $region7: #{rwkv7_block_forward.12} parent=0 // pred_check_branch
    %11 = sbr.rel (0) target = $region9
  $region8: #{rwkv7_block_forward.12} parent=0 // pred_region
    _
  $region9: #{rwkv7_block_forward.12} parent=0 // pred_fallthru
    _
  // Predicated region
  $region10: #{rwkv7_block_forward.12} parent=0 // pred_check
    _
  $region11: #{rwkv7_block_forward.12} parent=0 // pred_check_branch
    %13 = sbr.rel (0) target = $region13
  $region12: #{rwkv7_block_forward.12} parent=0 // pred_region
    _
  $region13: #{rwkv7_block_forward.12} parent=0 // pred_fallthru
    _
  %v14 = vld [vmem:[%s0] sm:$0xff]
  %v15 = vld [vmem:[%s0 + $0x8] sm:$0xff]
  %16 = vadd.xlane.f32.xlu0 %v14
  %v17 = vpop.xlane.xlu0 %16
  %18 = vadd.xlane.f32.xlu0 %v15
  %v19 = vpop.xlane.xlu0 %18
  %v20 = vrcp.pop 128.0
  %v21 = vmul.f32 %v17, %v20
  %v22 = vmul.f32 %v19, %v20
  %v23 = vsub.f32 %v14, %v21
  %v24 = vsub.f32 %v15, %v22
  %v25 = vmul.f32 %v23, %v23
  %v26 = vmul.f32 %v24, %v24
  %27 = vadd.xlane.f32.xlu0 %v25
  %v28 = vpop.xlane.xlu0 %27
  %29 = vadd.xlane.f32.xlu0 %v26
  %v30 = vpop.xlane.xlu0 %29
  %v31 = vmul.f32 %v28, %v20
  %v32 = vmul.f32 %v30, %v20
  %v33 = vadd.f32 %v31, 1e-05
  %v34 = vadd.f32 %v32, 1e-05
  %v35 = vrsqrt.pop %v33
  %v36 = vrsqrt.pop %v34
  %v37 = vmul.f32 %v23, %v35
  %v38 = vmul.f32 %v24, %v36
  %v39 = vld [vmem:[%s1] sm:$0x1]
  %v41 = vlaneseq
  %v42 = vshrl.u32 %v41, 7
  %v43 = vsub.s32 0, %v42
  %v44 = vrot.slane %v39, %v43
  %v46 = vmul.f32 %v37, %v44
  %v47 = vmul.f32 %v38, %v44
  %v48 = vld [vmem:[%s2] sm:$0x1]
  %v50 = vlaneseq
  %v51 = vshrl.u32 %v50, 7
  %v52 = vsub.s32 0, %v51
  %v53 = vrot.slane %v48, %v52
  %v55 = vadd.f32 %v46, %v53
  %v56 = vadd.f32 %v47, %v53
  %57 = vst [vmem:[%s3] sm:$0xff] %v55
  %58 = vst [vmem:[%s3 + $0x8] sm:$0xff] %v56
  // Predicated region
  $region14: #{rwkv7_block_forward.12} parent=0 // pred_check
    _
  $region15: #{rwkv7_block_forward.12} parent=0 // pred_check_branch
    %60 = sbr.rel (0) target = $region17
  $region16: #{rwkv7_block_forward.12} parent=0 // pred_region
    _
  $region17: #{rwkv7_block_forward.12} parent=0 // pred_fallthru
    _
  // Predicated region
  $region18: #{rwkv7_block_forward.12} parent=0 // pred_check
    _
  $region19: #{rwkv7_block_forward.12} parent=0 // pred_check_branch
    %62 = sbr.rel (0) target = $region21
  $region20: #{rwkv7_block_forward.12} parent=0 // pred_region
    _
  $region21: #{rwkv7_block_forward.12} parent=0 // pred_fallthru
    _

// kernel: rwkv7_block_forward.14
$region0: #{rwkv7_block_forward.14}
  #allocation0 [shape = 'u32[]', space=smem, size = 0x4, offset = 0x4, fixed_abs, tag = 'smem constant byte address 0x4 - core index']
  #allocation1 [shape = 'u32[144,128]{1,0:T(1,128)}', space=vmem, size = 0x12000, scoped, tag = 'internal scratch']
  #allocation2 [shape = 'f32[16,384]{1,0:T(8,128)}', space=vmem, size = 0x6000, scoped, tag = 'scratch operand']
  %s0 = inlined_call_operand.vmem [shape: bf16[16,128], index: 0, kind: input, shape index: {}]
  %s1 = inlined_call_operand.vmem [shape: bf16[16,128], index: 1, kind: input, shape index: {}]
  %s2 = inlined_call_operand.vmem [shape: bf16[128,384], index: 2, kind: input, shape index: {}]
  %s3 = inlined_call_operand.hbm [shape: bf16[128,384], index: 3, kind: input, shape index: {}]
  %s4 = inlined_call_operand.vmem [shape: f32[16,384], index: 4, kind: output, shape index: {}]
  %s5 = sld [smem:[#allocation0]]
  $region38: #{rwkv7_block_forward.14} parent=0
    _
  %s7 = ssub.s32 1, %s5
  %s8 = scalar_select 0, %s7, %s5
  $region1: #{rwkv7_block_forward.14} parent=0
    #allocation3 [shape = 'u8[98304]{0}', space=vmem, size = 0x18000, scoped, tag = 'input window, operand 3, single buffered']
    #allocation4 [shape = 's32[1]{0}', space=sflag, size = 0x4, scoped, tag = 'scoped memory for rwkv7_block_forward.14']
    %9 = vsyncpa [#allocation4], 0
    // Predicated region
    $region2: #{rwkv7_block_forward.14} parent=1 // pred_check
      _
    $region3: #{rwkv7_block_forward.14} parent=1 // pred_check_branch
      %11 = sbr.rel (0) target = $region5
    $region4: #{rwkv7_block_forward.14} parent=1 // pred_region
      _
    $region5: #{rwkv7_block_forward.14} parent=1 // pred_fallthru
      _
    // Predicated region
    $region6: #{rwkv7_block_forward.14} parent=1 // pred_check
      _
    $region7: #{rwkv7_block_forward.14} parent=1 // pred_check_branch
      %13 = sbr.rel (0) target = $region9
    $region8: #{rwkv7_block_forward.14} parent=1 // pred_region
      _
    $region9: #{rwkv7_block_forward.14} parent=1 // pred_fallthru
      _
    // Predicated region
    $region10: #{rwkv7_block_forward.14} parent=1 // pred_check
      _
    $region11: #{rwkv7_block_forward.14} parent=1 // pred_check_branch
      %15 = sbr.rel (0) target = $region13
    $region12: #{rwkv7_block_forward.14} parent=1 // pred_region
      _
    $region13: #{rwkv7_block_forward.14} parent=1 // pred_fallthru
      _
    // Predicated region
    $region14: #{rwkv7_block_forward.14} parent=1 // pred_check
      _
    $region15: #{rwkv7_block_forward.14} parent=1 // pred_check_branch
      %17 = sbr.rel (0) target = $region17
    $region16: #{rwkv7_block_forward.14} parent=1 // pred_region
      %s19 = ssub.s32 3072, 3072
      %20 = vsyncadd [#allocation4], %s19
      %s21 = sshll.u32 [#allocation3], 4
      %s22 = int_to_ptr.vmem [resolvable:$true] %s21
      %27 = dma.hbm_to_vmem [thread:$0]  %s3, 3072, %s22, [#allocation4], 192, 192, 12
    $region17: #{rwkv7_block_forward.14} parent=1 // pred_fallthru
      _
    // Predicated region
    $region18: #{rwkv7_block_forward.14} parent=1 // pred_check
      _
    $region19: #{rwkv7_block_forward.14} parent=1 // pred_check_branch
      %29 = sbr.rel (0) target = $region21
    $region20: #{rwkv7_block_forward.14} parent=1 // pred_region
      %30 = dma.done [#allocation4], 3072
    $region21: #{rwkv7_block_forward.14} parent=1 // pred_fallthru
      _
    %p32 = scmp.eq.s32.totalorder 0, 0
    // Predicated region
    $region22: #{rwkv7_block_forward.14} parent=1 // pred_check
      %p33 = pneg %p32
    $region23: #{rwkv7_block_forward.14} parent=1 // pred_check_branch
      %35 = sbr.rel (%p33) target = $region25
    $region24: #{rwkv7_block_forward.14} parent=1 // pred_region
      %36 = vst [vmem:[#allocation2] sm:$0xff] 0.0
      %37 = vst [vmem:[#allocation2 + $0x8] sm:$0xff] 0.0
      %38 = vst [vmem:[#allocation2 + $0x10] sm:$0xff] 0.0
      %39 = vst [vmem:[#allocation2 + $0x18] sm:$0xff] 0.0
      %40 = vst [vmem:[#allocation2 + $0x20] sm:$0xff] 0.0
      %41 = vst [vmem:[#allocation2 + $0x28] sm:$0xff] 0.0
    $region25: #{rwkv7_block_forward.14} parent=1 // pred_fallthru
      _
    %v42 = vld [vmem:[#allocation2] sm:$0xff]
    %v43 = vld [vmem:[#allocation2 + $0x8] sm:$0xff]
    %v44 = vld [vmem:[#allocation2 + $0x10] sm:$0xff]
    %v45 = vld [vmem:[#allocation2 + $0x18] sm:$0xff]
    %v46 = vld [vmem:[#allocation2 + $0x20] sm:$0xff]
    %v47 = vld [vmem:[#allocation2 + $0x28] sm:$0xff]
    %v48 = vld [vmem:[%s0] sm:$0xf]
    %v49 = vld [vmem:[%s0 + $0x4] sm:$0xf]
    %v50 = vld [vmem:[%s2] sm:$0xff]
    %v51 = vld [vmem:[%s2 + $0x8] sm:$0xf]
    %v52 = vld [vmem:[%s2 + $0xc] sm:$0xff]
    %v53 = vld [vmem:[%s2 + $0x14] sm:$0xf]
    %v54 = vld [vmem:[%s2 + $0x18] sm:$0xff]
    %v55 = vld [vmem:[%s2 + $0x20] sm:$0xf]
    %v56 = vld [vmem:[%s2 + $0x24] sm:$0xff]
    %v57 = vld [vmem:[%s2 + $0x2c] sm:$0xf]
    %v58 = vld [vmem:[%s2 + $0x30] sm:$0xff]
    %v59 = vld [vmem:[%s2 + $0x38] sm:$0xf]
    %v60 = vld [vmem:[%s2 + $0x3c] sm:$0xff]
    %v61 = vld [vmem:[%s2 + $0x44] sm:$0xf]
    %v62 = vld [vmem:[%s2 + $0x48] sm:$0xff]
    %v63 = vld [vmem:[%s2 + $0x50] sm:$0xf]
    %v64 = vld [vmem:[%s2 + $0x54] sm:$0xff]
    %v65 = vld [vmem:[%s2 + $0x5c] sm:$0xf]
    %v66 = vld [vmem:[%s2 + $0x60] sm:$0xff]
    %v67 = vld [vmem:[%s2 + $0x68] sm:$0xf]
    %v68 = vld [vmem:[%s2 + $0x6c] sm:$0xff]
    %v69 = vld [vmem:[%s2 + $0x74] sm:$0xf]
    %v70 = vld [vmem:[%s2 + $0x78] sm:$0xff]
    %v71 = vld [vmem:[%s2 + $0x80] sm:$0xf]
    %v72 = vld [vmem:[%s2 + $0x84] sm:$0xff]
    %v73 = vld [vmem:[%s2 + $0x8c] sm:$0xf]
    %v74 = vld [vmem:[%s2 + $0x90] sm:$0xff]
    %v75 = vld [vmem:[%s2 + $0x98] sm:$0xf]
    %v76 = vld [vmem:[%s2 + $0x9c] sm:$0xff]
    %v77 = vld [vmem:[%s2 + $0xa4] sm:$0xf]
    %v78 = vld [vmem:[%s2 + $0xa8] sm:$0xff]
    %v79 = vld [vmem:[%s2 + $0xb0] sm:$0xf]
    %v80 = vld [vmem:[%s2 + $0xb4] sm:$0xff]
    %v81 = vld [vmem:[%s2 + $0xbc] sm:$0xf]
    %v84 = vunpack.c.l.b16 %v48
    %v85 = vunpack.c.l.b16 %v49
    %v86 = vpack.c.b16 %v85, %v84
    %v120 = vunpack.c.l.b16 %v50
    %v121 = vunpack.c.h.b16 %v50
    %v122 = vunpack.c.l.b16 %v51
    %v123 = vunpack.c.l.b16 %v52
    %v124 = vunpack.c.h.b16 %v52
    %v125 = vunpack.c.l.b16 %v53
    %v126 = vunpack.c.l.b16 %v54
    %v127 = vunpack.c.h.b16 %v54
    %v128 = vunpack.c.l.b16 %v55
    %v129 = vunpack.c.l.b16 %v56
    %v130 = vunpack.c.h.b16 %v56
    %v131 = vunpack.c.l.b16 %v57
    %v132 = vunpack.c.l.b16 %v58
    %v133 = vunpack.c.h.b16 %v58
    %v134 = vunpack.c.l.b16 %v59
    %v135 = vunpack.c.l.b16 %v60
    %v136 = vunpack.c.h.b16 %v60
    %v137 = vunpack.c.l.b16 %v61
    %v138 = vunpack.c.l.b16 %v62
    %v139 = vunpack.c.h.b16 %v62
    %v140 = vunpack.c.l.b16 %v63
    %v141 = vunpack.c.l.b16 %v64
    %v142 = vunpack.c.h.b16 %v64
    %v143 = vunpack.c.l.b16 %v65
    %v144 = vunpack.c.l.b16 %v66
    %v145 = vunpack.c.h.b16 %v66
    %v146 = vunpack.c.l.b16 %v67
    %v147 = vunpack.c.l.b16 %v68
    %v148 = vunpack.c.h.b16 %v68
    %v149 = vunpack.c.l.b16 %v69
    %v150 = vunpack.c.l.b16 %v70
    %v151 = vunpack.c.h.b16 %v70
    %v152 = vunpack.c.l.b16 %v71
    %v153 = vunpack.c.l.b16 %v72
    %v154 = vunpack.c.h.b16 %v72
    %v155 = vunpack.c.l.b16 %v73
    %v156 = vunpack.c.l.b16 %v74
    %v157 = vunpack.c.h.b16 %v74
    %v158 = vunpack.c.l.b16 %v75
    %v159 = vunpack.c.l.b16 %v76
    %v160 = vunpack.c.h.b16 %v76
    %v161 = vunpack.c.l.b16 %v77
    %v162 = vunpack.c.l.b16 %v78
    %v163 = vunpack.c.h.b16 %v78
    %v164 = vunpack.c.l.b16 %v79
    %v165 = vunpack.c.l.b16 %v80
    %v166 = vunpack.c.h.b16 %v80
    %v167 = vunpack.c.l.b16 %v81
    %v168 = vpack.c.b16 %v123, %v120
    %v169 = vpack.c.b16 %v124, %v121
    %v170 = vpack.c.b16 %v125, %v122
    %v171 = vpack.c.b16 %v129, %v126
    %v172 = vpack.c.b16 %v130, %v127
    %v173 = vpack.c.b16 %v131, %v128
    %v174 = vpack.c.b16 %v135, %v132
    %v175 = vpack.c.b16 %v136, %v133
    %v176 = vpack.c.b16 %v137, %v134
    %v177 = vpack.c.b16 %v141, %v138
    %v178 = vpack.c.b16 %v142, %v139
    %v179 = vpack.c.b16 %v143, %v140
    %v180 = vpack.c.b16 %v147, %v144
    %v181 = vpack.c.b16 %v148, %v145
    %v182 = vpack.c.b16 %v149, %v146
    %v183 = vpack.c.b16 %v153, %v150
    %v184 = vpack.c.b16 %v154, %v151
    %v185 = vpack.c.b16 %v155, %v152
    %v186 = vpack.c.b16 %v159, %v156
    %v187 = vpack.c.b16 %v160, %v157
    %v188 = vpack.c.b16 %v161, %v158
    %v189 = vpack.c.b16 %v165, %v162
    %v190 = vpack.c.b16 %v166, %v163
    %v191 = vpack.c.b16 %v167, %v164
    %216 = vmatprep.subr.bf16.mxu0 %v169
    %217 = vmatpush1.bf16.msra.mxu0 %v168
    %218 = vmatprep.subr.bf16.mxu0 %v172
    %219 = vmatpush1.bf16.msra.mxu0 %v171
    %220 = vmatprep.subr.bf16.mxu0 %v175
    %221 = vmatpush1.bf16.msra.mxu0 %v174
    %222 = vmatprep.subr.bf16.mxu0 %v178
    %223 = vmatpush1.bf16.msra.mxu0 %v177
    %224 = vmatprep.subr.bf16.mxu0 %v181
    %225 = vmatpush1.bf16.msra.mxu0 %v180
    %226 = vmatprep.subr.bf16.mxu0 %v184
    %227 = vmatpush1.bf16.msra.mxu0 %v183
    %228 = vmatprep.subr.bf16.mxu0 %v187
    %229 = vmatpush1.bf16.msra.mxu0 %v186
    %230 = vmatprep.subr.bf16.mxu0 %v190
    %231 = vmatpush1.bf16.msra.mxu0 %v189
    %232 = vmatprep.subr.bf16.mxu0 0
    %233 = vmatpush1.bf16.msra.mxu0 0
    %234 = vmatprep.subr.bf16.mxu0 0
    %235 = vmatpush1.bf16.msra.mxu0 0
    %236 = vmatprep.subr.bf16.mxu0 0
    %237 = vmatpush1.bf16.msra.mxu0 0
    %238 = vmatprep.subr.bf16.mxu0 0
    %239 = vmatpush1.bf16.msra.mxu0 0
    %240 = vmatprep.subr.bf16.mxu0 0
    %241 = vmatpush1.bf16.msra.mxu0 0
    %242 = vmatprep.subr.bf16.mxu0 0
    %243 = vmatpush1.bf16.msra.mxu0 0
    %244 = vmatprep.subr.bf16.mxu0 0
    %245 = vmatpush1.bf16.msra.mxu0 0
    %246 = vmatprep.subr.bf16.mxu0 0
    %247 = vmatpush1.bf16.msra.mxu0 0
    %248 = vmatprep.mubr.bf16.mxu0 0
    %249 = vmatmul.mubr.bf16.gmra.mrb[0].mxu0 %v86
    %v250 = vpop.f32.mrb[0].mxu0
    %v251 = vadd.f32 0.0, %v250
    %v252 = vpop.f32.mrb[0].mxu0
    %v253 = vadd.f32 0.0, %v252
    %v254 = vpop.f32.mrb[0].mxu0
    %v255 = vadd.f32 0.0, %v254
    %v256 = vpop.f32.mrb[0].mxu0
    %v257 = vadd.f32 0.0, %v256
    %258 = vdwg.mxu0
    %259 = vmatprep.subr.bf16.mxu0 0
    %260 = vmatpush1.bf16.msra.mxu0 %v170
    %261 = vmatprep.subr.bf16.mxu0 0
    %262 = vmatpush1.bf16.msra.mxu0 %v173
    %263 = vmatprep.subr.bf16.mxu0 0
    %264 = vmatpush1.bf16.msra.mxu0 %v176
    %265 = vmatprep.subr.bf16.mxu0 0
    %266 = vmatpush1.bf16.msra.mxu0 %v179
    %267 = vmatprep.subr.bf16.mxu0 0
    %268 = vmatpush1.bf16.msra.mxu0 %v182
    %269 = vmatprep.subr.bf16.mxu0 0
    %270 = vmatpush1.bf16.msra.mxu0 %v185
    %271 = vmatprep.subr.bf16.mxu0 0
    %272 = vmatpush1.bf16.msra.mxu0 %v188
    %273 = vmatprep.subr.bf16.mxu0 0
    %274 = vmatpush1.bf16.msra.mxu0 %v191
    %275 = vmatprep.subr.bf16.mxu0 0
    %276 = vmatpush1.bf16.msra.mxu0 0
    %277 = vmatprep.subr.bf16.mxu0 0
    %278 = vmatpush1.bf16.msra.mxu0 0
    %279 = vmatprep.subr.bf16.mxu0 0
    %280 = vmatpush1.bf16.msra.mxu0 0
    %281 = vmatprep.subr.bf16.mxu0 0
    %282 = vmatpush1.bf16.msra.mxu0 0
    %283 = vmatprep.subr.bf16.mxu0 0
    %284 = vmatpush1.bf16.msra.mxu0 0
    %285 = vmatprep.subr.bf16.mxu0 0
    %286 = vmatpush1.bf16.msra.mxu0 0
    %287 = vmatprep.subr.bf16.mxu0 0
    %288 = vmatpush1.bf16.msra.mxu0 0
    %289 = vmatprep.subr.bf16.mxu0 0
    %290 = vmatpush1.bf16.msra.mxu0 0
    %291 = vmatprep.mubr.bf16.mxu0 0
    %292 = vmatmul.mubr.bf16.gmra.mrb[0].mxu0 %v86
    %v293 = vpop.f32.mrb[0].mxu0
    %v294 = vadd.f32 0.0, %v293
    %v295 = vpop.f32.mrb[0].mxu0
    %v296 = vpop.f32.mrb[0].mxu0
    %v297 = vadd.f32 0.0, %v296
    %v298 = vpop.f32.mrb[0].mxu0
    %299 = vdwg.mxu0
    %v300 = vadd.f32 %v42, %v251
    %v301 = vadd.f32 %v43, %v253
    %v302 = vadd.f32 %v44, %v294
    %v303 = vadd.f32 %v45, %v255
    %v304 = vadd.f32 %v46, %v257
    %v305 = vadd.f32 %v47, %v297
    %306 = vst [vmem:[#allocation2] sm:$0xff] %v300
    %307 = vst [vmem:[#allocation2 + $0x8] sm:$0xff] %v301
    %308 = vst [vmem:[#allocation2 + $0x10] sm:$0xff] %v302
    %309 = vst [vmem:[#allocation2 + $0x18] sm:$0xff] %v303
    %310 = vst [vmem:[#allocation2 + $0x20] sm:$0xff] %v304
    %311 = vst [vmem:[#allocation2 + $0x28] sm:$0xff] %v305
    %v312 = vld [vmem:[#allocation2] sm:$0xff]
    %v313 = vld [vmem:[#allocation2 + $0x8] sm:$0xff]
    %v314 = vld [vmem:[#allocation2 + $0x10] sm:$0xff]
    %v315 = vld [vmem:[#allocation2 + $0x18] sm:$0xff]
    %v316 = vld [vmem:[#allocation2 + $0x20] sm:$0xff]
    %v317 = vld [vmem:[#allocation2 + $0x28] sm:$0xff]
    %v318 = vld [vmem:[%s1] sm:$0xf]
    %v319 = vld [vmem:[%s1 + $0x4] sm:$0xf]
    %v320 = vld [vmem:[#allocation3] sm:$0xff]
    %v321 = vld [vmem:[#allocation3 + $0x8] sm:$0xf]
    %v322 = vld [vmem:[#allocation3 + $0xc] sm:$0xff]
    %v323 = vld [vmem:[#allocation3 + $0x14] sm:$0xf]
    %v324 = vld [vmem:[#allocation3 + $0x18] sm:$0xff]
    %v325 = vld [vmem:[#allocation3 + $0x20] sm:$0xf]
    %v326 = vld [vmem:[#allocation3 + $0x24] sm:$0xff]
    %v327 = vld [vmem:[#allocation3 + $0x2c] sm:$0xf]
    %v328 = vld [vmem:[#allocation3 + $0x30] sm:$0xff]
    %v329 = vld [vmem:[#allocation3 + $0x38] sm:$0xf]
    %v330 = vld [vmem:[#allocation3 + $0x3c] sm:$0xff]
    %v331 = vld [vmem:[#allocation3 + $0x44] sm:$0xf]
    %v332 = vld [vmem:[#allocation3 + $0x48] sm:$0xff]
    %v333 = vld [vmem:[#allocation3 + $0x50] sm:$0xf]
    %v334 = vld [vmem:[#allocation3 + $0x54] sm:$0xff]
    %v335 = vld [vmem:[#allocation3 + $0x5c] sm:$0xf]
    %v336 = vld [vmem:[#allocation3 + $0x60] sm:$0xff]
    %v337 = vld [vmem:[#allocation3 + $0x68] sm:$0xf]
    %v338 = vld [vmem:[#allocation3 + $0x6c] sm:$0xff]
    %v339 = vld [vmem:[#allocation3 + $0x74] sm:$0xf]
    %v340 = vld [vmem:[#allocation3 + $0x78] sm:$0xff]
    %v341 = vld [vmem:[#allocation3 + $0x80] sm:$0xf]
    %v342 = vld [vmem:[#allocation3 + $0x84] sm:$0xff]
    %v343 = vld [vmem:[#allocation3 + $0x8c] sm:$0xf]
    %v344 = vld [vmem:[#allocation3 + $0x90] sm:$0xff]
    %v345 = vld [vmem:[#allocation3 + $0x98] sm:$0xf]
    %v346 = vld [vmem:[#allocation3 + $0x9c] sm:$0xff]
    %v347 = vld [vmem:[#allocation3 + $0xa4] sm:$0xf]
    %v348 = vld [vmem:[#allocation3 + $0xa8] sm:$0xff]
    %v349 = vld [vmem:[#allocation3 + $0xb0] sm:$0xf]
    %v350 = vld [vmem:[#allocation3 + $0xb4] sm:$0xff]
    %v351 = vld [vmem:[#allocation3 + $0xbc] sm:$0xf]
    %v354 = vunpack.c.l.b16 %v318
    %v355 = vunpack.c.l.b16 %v319
    %v356 = vpack.c.b16 %v355, %v354
    %v390 = vunpack.c.l.b16 %v320
    %v391 = vunpack.c.h.b16 %v320
    %v392 = vunpack.c.l.b16 %v321
    %v393 = vunpack.c.l.b16 %v322
    %v394 = vunpack.c.h.b16 %v322
    %v395 = vunpack.c.l.b16 %v323
    %v396 = vunpack.c.l.b16 %v324
    %v397 = vunpack.c.h.b16 %v324
    %v398 = vunpack.c.l.b16 %v325
    %v399 = vunpack.c.l.b16 %v326
    %v400 = vunpack.c.h.b16 %v326
    %v401 = vunpack.c.l.b16 %v327
    %v402 = vunpack.c.l.b16 %v328
    %v403 = vunpack.c.h.b16 %v328
    %v404 = vunpack.c.l.b16 %v329
    %v405 = vunpack.c.l.b16 %v330
    %v406 = vunpack.c.h.b16 %v330
    %v407 = vunpack.c.l.b16 %v331
    %v408 = vunpack.c.l.b16 %v332
    %v409 = vunpack.c.h.b16 %v332
    %v410 = vunpack.c.l.b16 %v333
    %v411 = vunpack.c.l.b16 %v334
    %v412 = vunpack.c.h.b16 %v334
    %v413 = vunpack.c.l.b16 %v335
    %v414 = vunpack.c.l.b16 %v336
    %v415 = vunpack.c.h.b16 %v336
    %v416 = vunpack.c.l.b16 %v337
    %v417 = vunpack.c.l.b16 %v338
    %v418 = vunpack.c.h.b16 %v338
    %v419 = vunpack.c.l.b16 %v339
    %v420 = vunpack.c.l.b16 %v340
    %v421 = vunpack.c.h.b16 %v340
    %v422 = vunpack.c.l.b16 %v341
    %v423 = vunpack.c.l.b16 %v342
    %v424 = vunpack.c.h.b16 %v342
    %v425 = vunpack.c.l.b16 %v343
    %v426 = vunpack.c.l.b16 %v344
    %v427 = vunpack.c.h.b16 %v344
    %v428 = vunpack.c.l.b16 %v345
    %v429 = vunpack.c.l.b16 %v346
    %v430 = vunpack.c.h.b16 %v346
    %v431 = vunpack.c.l.b16 %v347
    %v432 = vunpack.c.l.b16 %v348
    %v433 = vunpack.c.h.b16 %v348
    %v434 = vunpack.c.l.b16 %v349
    %v435 = vunpack.c.l.b16 %v350
    %v436 = vunpack.c.h.b16 %v350
    %v437 = vunpack.c.l.b16 %v351
    %v438 = vpack.c.b16 %v393, %v390
    %v439 = vpack.c.b16 %v394, %v391
    %v440 = vpack.c.b16 %v395, %v392
    %v441 = vpack.c.b16 %v399, %v396
    %v442 = vpack.c.b16 %v400, %v397
    %v443 = vpack.c.b16 %v401, %v398
    %v444 = vpack.c.b16 %v405, %v402
    %v445 = vpack.c.b16 %v406, %v403
    %v446 = vpack.c.b16 %v407, %v404
    %v447 = vpack.c.b16 %v411, %v408
    %v448 = vpack.c.b16 %v412, %v409
    %v449 = vpack.c.b16 %v413, %v410
    %v450 = vpack.c.b16 %v417, %v414
    %v451 = vpack.c.b16 %v418, %v415
    %v452 = vpack.c.b16 %v419, %v416
    %v453 = vpack.c.b16 %v423, %v420
    %v454 = vpack.c.b16 %v424, %v421
    %v455 = vpack.c.b16 %v425, %v422
    %v456 = vpack.c.b16 %v429, %v426
    %v457 = vpack.c.b16 %v430, %v427
    %v458 = vpack.c.b16 %v431, %v428
    %v459 = vpack.c.b16 %v435, %v432
    %v460 = vpack.c.b16 %v436, %v433
    %v461 = vpack.c.b16 %v437, %v434
    %486 = vmatprep.subr.bf16.mxu0 %v439
    %487 = vmatpush1.bf16.msra.mxu0 %v438
    %488 = vmatprep.subr.bf16.mxu0 %v442
    %489 = vmatpush1.bf16.msra.mxu0 %v441
    %490 = vmatprep.subr.bf16.mxu0 %v445
    %491 = vmatpush1.bf16.msra.mxu0 %v444
    %492 = vmatprep.subr.bf16.mxu0 %v448
    %493 = vmatpush1.bf16.msra.mxu0 %v447
    %494 = vmatprep.subr.bf16.mxu0 %v451
    %495 = vmatpush1.bf16.msra.mxu0 %v450
    %496 = vmatprep.subr.bf16.mxu0 %v454
    %497 = vmatpush1.bf16.msra.mxu0 %v453
    %498 = vmatprep.subr.bf16.mxu0 %v457
    %499 = vmatpush1.bf16.msra.mxu0 %v456
    %500 = vmatprep.subr.bf16.mxu0 %v460
    %501 = vmatpush1.bf16.msra.mxu0 %v459
    %502 = vmatprep.subr.bf16.mxu0 0
    %503 = vmatpush1.bf16.msra.mxu0 0
    %504 = vmatprep.subr.bf16.mxu0 0
    %505 = vmatpush1.bf16.msra.mxu0 0
    %506 = vmatprep.subr.bf16.mxu0 0
    %507 = vmatpush1.bf16.msra.mxu0 0
    %508 = vmatprep.subr.bf16.mxu0 0
    %509 = vmatpush1.bf16.msra.mxu0 0
    %510 = vmatprep.subr.bf16.mxu0 0
    %511 = vmatpush1.bf16.msra.mxu0 0
    %512 = vmatprep.subr.bf16.mxu0 0
    %513 = vmatpush1.bf16.msra.mxu0 0
    %514 = vmatprep.subr.bf16.mxu0 0
    %515 = vmatpush1.bf16.msra.mxu0 0
    %516 = vmatprep.subr.bf16.mxu0 0
    %517 = vmatpush1.bf16.msra.mxu0 0
    %518 = vmatprep.mubr.bf16.mxu0 0
    %519 = vmatmul.mubr.bf16.gmra.mrb[0].mxu0 %v356
    %v520 = vpop.f32.mrb[0].mxu0
    %v521 = vadd.f32 0.0, %v520
    %v522 = vpop.f32.mrb[0].mxu0
    %v523 = vadd.f32 0.0, %v522
    %v524 = vpop.f32.mrb[0].mxu0
    %v525 = vadd.f32 0.0, %v524
    %v526 = vpop.f32.mrb[0].mxu0
    %v527 = vadd.f32 0.0, %v526
    %528 = vdwg.mxu0
    %529 = vmatprep.subr.bf16.mxu0 0
    %530 = vmatpush1.bf16.msra.mxu0 %v440
    %531 = vmatprep.subr.bf16.mxu0 0
    %532 = vmatpush1.bf16.msra.mxu0 %v443
    %533 = vmatprep.subr.bf16.mxu0 0
    %534 = vmatpush1.bf16.msra.mxu0 %v446
    %535 = vmatprep.subr.bf16.mxu0 0
    %536 = vmatpush1.bf16.msra.mxu0 %v449
    %537 = vmatprep.subr.bf16.mxu0 0
    %538 = vmatpush1.bf16.msra.mxu0 %v452
    %539 = vmatprep.subr.bf16.mxu0 0
    %540 = vmatpush1.bf16.msra.mxu0 %v455
    %541 = vmatprep.subr.bf16.mxu0 0
    %542 = vmatpush1.bf16.msra.mxu0 %v458
    %543 = vmatprep.subr.bf16.mxu0 0
    %544 = vmatpush1.bf16.msra.mxu0 %v461
    %545 = vmatprep.subr.bf16.mxu0 0
    %546 = vmatpush1.bf16.msra.mxu0 0
    %547 = vmatprep.subr.bf16.mxu0 0
    %548 = vmatpush1.bf16.msra.mxu0 0
    %549 = vmatprep.subr.bf16.mxu0 0
    %550 = vmatpush1.bf16.msra.mxu0 0
    %551 = vmatprep.subr.bf16.mxu0 0
    %552 = vmatpush1.bf16.msra.mxu0 0
    %553 = vmatprep.subr.bf16.mxu0 0
    %554 = vmatpush1.bf16.msra.mxu0 0
    %555 = vmatprep.subr.bf16.mxu0 0
    %556 = vmatpush1.bf16.msra.mxu0 0
    %557 = vmatprep.subr.bf16.mxu0 0
    %558 = vmatpush1.bf16.msra.mxu0 0
    %559 = vmatprep.subr.bf16.mxu0 0
    %560 = vmatpush1.bf16.msra.mxu0 0
    %561 = vmatprep.mubr.bf16.mxu0 0
    %562 = vmatmul.mubr.bf16.gmra.mrb[0].mxu0 %v356
    %v563 = vpop.f32.mrb[0].mxu0
    %v564 = vadd.f32 0.0, %v563
    %v565 = vpop.f32.mrb[0].mxu0
    %v566 = vpop.f32.mrb[0].mxu0
    %v567 = vadd.f32 0.0, %v566
    %v568 = vpop.f32.mrb[0].mxu0
    %569 = vdwg.mxu0
    %v570 = vadd.f32 %v312, %v521
    %v571 = vadd.f32 %v313, %v523
    %v572 = vadd.f32 %v314, %v564
    %v573 = vadd.f32 %v315, %v525
    %v574 = vadd.f32 %v316, %v527
    %v575 = vadd.f32 %v317, %v567
    %576 = vst [vmem:[#allocation2] sm:$0xff] %v570
    %577 = vst [vmem:[#allocation2 + $0x8] sm:$0xff] %v571
    %578 = vst [vmem:[#allocation2 + $0x10] sm:$0xff] %v572
    %579 = vst [vmem:[#allocation2 + $0x18] sm:$0xff] %v573
    %580 = vst [vmem:[#allocation2 + $0x20] sm:$0xff] %v574
    %581 = vst [vmem:[#allocation2 + $0x28] sm:$0xff] %v575
    // Predicated region
    $region26: #{rwkv7_block_forward.14} parent=1 // pred_check
      %p582 = pneg %p32
    $region27: #{rwkv7_block_forward.14} parent=1 // pred_check_branch
      %584 = sbr.rel (%p582) target = $region29
    $region28: #{rwkv7_block_forward.14} parent=1 // pred_region
      %v585 = vld [vmem:[#allocation2] sm:$0xff]
      %v586 = vld [vmem:[#allocation2 + $0x8] sm:$0xff]
      %v587 = vld [vmem:[#allocation2 + $0x10] sm:$0xff]
      %v588 = vld [vmem:[#allocation2 + $0x18] sm:$0xff]
      %v589 = vld [vmem:[#allocation2 + $0x20] sm:$0xff]
      %v590 = vld [vmem:[#allocation2 + $0x28] sm:$0xff]
      %591 = vst [vmem:[%s4] sm:$0xff] %v585
      %592 = vst [vmem:[%s4 + $0x8] sm:$0xff] %v586
      %593 = vst [vmem:[%s4 + $0x10] sm:$0xff] %v587
      %594 = vst [vmem:[%s4 + $0x18] sm:$0xff] %v588
      %595 = vst [vmem:[%s4 + $0x20] sm:$0xff] %v589
      %596 = vst [vmem:[%s4 + $0x28] sm:$0xff] %v590
    $region29: #{rwkv7_block_forward.14} parent=1 // pred_fallthru
      _
    // Predicated region
    $region30: #{rwkv7_block_forward.14} parent=1 // pred_check
      _
    $region31: #{rwkv7_block_forward.14} parent=1 // pred_check_branch
      %598 = sbr.rel (0) target = $region33
    $region32: #{rwkv7_block_forward.14} parent=1 // pred_region
      _
    $region33: #{rwkv7_block_forward.14} parent=1 // pred_fallthru
      _
    // Predicated region
    $region34: #{rwkv7_block_forward.14} parent=1 // pred_check
      _
    $region35: #{rwkv7_block_forward.14} parent=1 // pred_check_branch
      %600 = sbr.rel (0) target = $region37
    $region36: #{rwkv7_block_forward.14} parent=1 // pred_region
      _
    $region37: #{rwkv7_block_forward.14} parent=1 // pred_fallthru
      _
    %601 = vsyncpa [#allocation4], 1

// kernel: rwkv7_block_forward.15
$region0: #{rwkv7_block_forward.15}
  #allocation0 [shape = 'u32[]', space=smem, size = 0x4, offset = 0x4, fixed_abs, tag = 'smem constant byte address 0x4 - core index']
  #allocation1 [shape = 'u32[144,128]{1,0:T(1,128)}', space=vmem, size = 0x12000, scoped, tag = 'internal scratch']
  %s0 = inlined_call_operand.vmem [shape: bf16[16,128], index: 0, kind: input, shape index: {}]
  %s1 = inlined_call_operand.vmem [shape: bf16[16,128], index: 1, kind: input, shape index: {}]
  %s2 = inlined_call_operand.vmem [shape: bf16[128,32], index: 2, kind: input, shape index: {}]
  %s3 = inlined_call_operand.vmem [shape: bf16[128,32], index: 3, kind: input, shape index: {}]
  %s4 = inlined_call_operand.vmem [shape: bf16[32,128], index: 4, kind: input, shape index: {}]
  %s5 = inlined_call_operand.vmem [shape: f32[16,128], index: 5, kind: output, shape index: {}]
  %s6 = sld [smem:[#allocation0]]
  $region30: #{rwkv7_block_forward.15} parent=0
    _
  %s8 = ssub.s32 1, %s6
  %s9 = scalar_select 0, %s8, %s6
  // Predicated region
  $region2: #{rwkv7_block_forward.15} parent=0 // pred_check
    _
  $region3: #{rwkv7_block_forward.15} parent=0 // pred_check_branch
    %11 = sbr.rel (0) target = $region5
  $region4: #{rwkv7_block_forward.15} parent=0 // pred_region
    _
  $region5: #{rwkv7_block_forward.15} parent=0 // pred_fallthru
    _
  // Predicated region
  $region6: #{rwkv7_block_forward.15} parent=0 // pred_check
    _
  $region7: #{rwkv7_block_forward.15} parent=0 // pred_check_branch
    %13 = sbr.rel (0) target = $region9
  $region8: #{rwkv7_block_forward.15} parent=0 // pred_region
    _
  $region9: #{rwkv7_block_forward.15} parent=0 // pred_fallthru
    _
  // Predicated region
  $region10: #{rwkv7_block_forward.15} parent=0 // pred_check
    _
  $region11: #{rwkv7_block_forward.15} parent=0 // pred_check_branch
    %15 = sbr.rel (0) target = $region13
  $region12: #{rwkv7_block_forward.15} parent=0 // pred_region
    _
  $region13: #{rwkv7_block_forward.15} parent=0 // pred_fallthru
    _
  // Predicated region
  $region14: #{rwkv7_block_forward.15} parent=0 // pred_check
    _
  $region15: #{rwkv7_block_forward.15} parent=0 // pred_check_branch
    %17 = sbr.rel (0) target = $region17
  $region16: #{rwkv7_block_forward.15} parent=0 // pred_region
    _
  $region17: #{rwkv7_block_forward.15} parent=0 // pred_fallthru
    _
  // Predicated region
  $region18: #{rwkv7_block_forward.15} parent=0 // pred_check
    _
  $region19: #{rwkv7_block_forward.15} parent=0 // pred_check_branch
    %19 = sbr.rel (0) target = $region21
  $region20: #{rwkv7_block_forward.15} parent=0 // pred_region
    _
  $region21: #{rwkv7_block_forward.15} parent=0 // pred_fallthru
    _
  %v21 = vld [vmem:[%s0] sm:$0xf]
  %v22 = vld [vmem:[%s0 + $0x4] sm:$0xf]
  %v23 = vld [vmem:[%s2] sm:$0xf]
  %v24 = vld [vmem:[%s2 + $0x4] sm:$0xf]
  %v25 = vld [vmem:[%s2 + $0x8] sm:$0xf]
  %v26 = vld [vmem:[%s2 + $0xc] sm:$0xf]
  %v27 = vld [vmem:[%s2 + $0x10] sm:$0xf]
  %v28 = vld [vmem:[%s2 + $0x14] sm:$0xf]
  %v29 = vld [vmem:[%s2 + $0x18] sm:$0xf]
  %v30 = vld [vmem:[%s2 + $0x1c] sm:$0xf]
  %v31 = vld [vmem:[%s2 + $0x20] sm:$0xf]
  %v32 = vld [vmem:[%s2 + $0x24] sm:$0xf]
  %v33 = vld [vmem:[%s2 + $0x28] sm:$0xf]
  %v34 = vld [vmem:[%s2 + $0x2c] sm:$0xf]
  %v35 = vld [vmem:[%s2 + $0x30] sm:$0xf]
  %v36 = vld [vmem:[%s2 + $0x34] sm:$0xf]
  %v37 = vld [vmem:[%s2 + $0x38] sm:$0xf]
  %v38 = vld [vmem:[%s2 + $0x3c] sm:$0xf]
  %v39 = vld [vmem:[%s1] sm:$0xf]
  %v40 = vld [vmem:[%s1 + $0x4] sm:$0xf]
  %v41 = vld [vmem:[%s3] sm:$0xf]
  %v42 = vld [vmem:[%s3 + $0x4] sm:$0xf]
  %v43 = vld [vmem:[%s3 + $0x8] sm:$0xf]
  %v44 = vld [vmem:[%s3 + $0xc] sm:$0xf]
  %v45 = vld [vmem:[%s3 + $0x10] sm:$0xf]
  %v46 = vld [vmem:[%s3 + $0x14] sm:$0xf]
  %v47 = vld [vmem:[%s3 + $0x18] sm:$0xf]
  %v48 = vld [vmem:[%s3 + $0x1c] sm:$0xf]
  %v49 = vld [vmem:[%s3 + $0x20] sm:$0xf]
  %v50 = vld [vmem:[%s3 + $0x24] sm:$0xf]
  %v51 = vld [vmem:[%s3 + $0x28] sm:$0xf]
  %v52 = vld [vmem:[%s3 + $0x2c] sm:$0xf]
  %v53 = vld [vmem:[%s3 + $0x30] sm:$0xf]
  %v54 = vld [vmem:[%s3 + $0x34] sm:$0xf]
  %v55 = vld [vmem:[%s3 + $0x38] sm:$0xf]
  %v56 = vld [vmem:[%s3 + $0x3c] sm:$0xf]
  %v59 = vunpack.c.l.b16 %v39
  %v60 = vunpack.c.l.b16 %v40
  %v61 = vpack.c.b16 %v60, %v59
  %v79 = vunpack.c.l.b16 %v41
  %v80 = vunpack.c.l.b16 %v42
  %v81 = vunpack.c.l.b16 %v43
  %v82 = vunpack.c.l.b16 %v44
  %v83 = vunpack.c.l.b16 %v45
  %v84 = vunpack.c.l.b16 %v46
  %v85 = vunpack.c.l.b16 %v47
  %v86 = vunpack.c.l.b16 %v48
  %v87 = vunpack.c.l.b16 %v49
  %v88 = vunpack.c.l.b16 %v50
  %v89 = vunpack.c.l.b16 %v51
  %v90 = vunpack.c.l.b16 %v52
  %v91 = vunpack.c.l.b16 %v53
  %v92 = vunpack.c.l.b16 %v54
  %v93 = vunpack.c.l.b16 %v55
  %v94 = vunpack.c.l.b16 %v56
  %v95 = vpack.c.b16 %v80, %v79
  %v96 = vpack.c.b16 %v82, %v81
  %v97 = vpack.c.b16 %v84, %v83
  %v98 = vpack.c.b16 %v86, %v85
  %v99 = vpack.c.b16 %v88, %v87
  %v100 = vpack.c.b16 %v90, %v89
  %v101 = vpack.c.b16 %v92, %v91
  %v102 = vpack.c.b16 %v94, %v93
  %111 = vmatprep.subr.bf16.mxu0 0
  %112 = vmatpush1.bf16.msra.mxu0 %v95
  %113 = vmatprep.subr.bf16.mxu0 0
  %114 = vmatpush1.bf16.msra.mxu0 %v96
  %115 = vmatprep.subr.bf16.mxu0 0
  %116 = vmatpush1.bf16.msra.mxu0 %v97
  %117 = vmatprep.subr.bf16.mxu0 0
  %118 = vmatpush1.bf16.msra.mxu0 %v98
  %119 = vmatprep.subr.bf16.mxu0 0
  %120 = vmatpush1.bf16.msra.mxu0 %v99
  %121 = vmatprep.subr.bf16.mxu0 0
  %122 = vmatpush1.bf16.msra.mxu0 %v100
  %123 = vmatprep.subr.bf16.mxu0 0
  %124 = vmatpush1.bf16.msra.mxu0 %v101
  %125 = vmatprep.subr.bf16.mxu0 0
  %126 = vmatpush1.bf16.msra.mxu0 %v102
  %127 = vmatprep.subr.bf16.mxu0 0
  %128 = vmatpush1.bf16.msra.mxu0 0
  %129 = vmatprep.subr.bf16.mxu0 0
  %130 = vmatpush1.bf16.msra.mxu0 0
  %131 = vmatprep.subr.bf16.mxu0 0
  %132 = vmatpush1.bf16.msra.mxu0 0
  %133 = vmatprep.subr.bf16.mxu0 0
  %134 = vmatpush1.bf16.msra.mxu0 0
  %135 = vmatprep.subr.bf16.mxu0 0
  %136 = vmatpush1.bf16.msra.mxu0 0
  %137 = vmatprep.subr.bf16.mxu0 0
  %138 = vmatpush1.bf16.msra.mxu0 0
  %139 = vmatprep.subr.bf16.mxu0 0
  %140 = vmatpush1.bf16.msra.mxu0 0
  %141 = vmatprep.subr.bf16.mxu0 0
  %142 = vmatpush1.bf16.msra.mxu0 0
  %143 = vmatprep.mubr.bf16.mxu0 0
  %144 = vmatmul.mubr.bf16.gmra.mrb[0].mxu0 %v61
  %v145 = vpop.f32.mrb[0].mxu0
  %v146 = vadd.f32 0.0, %v145
  %v147 = vpop.f32.mrb[0].mxu0
  %v148 = vpop.f32.mrb[0].mxu0
  %v149 = vadd.f32 0.0, %v148
  %v150 = vpop.f32.mrb[0].mxu0
  %151 = vdwg.mxu0
  %v154 = vunpack.c.l.b16 %v21
  %v155 = vunpack.c.l.b16 %v22
  %v156 = vpack.c.b16 %v155, %v154
  %v174 = vunpack.c.l.b16 %v23
  %v175 = vunpack.c.l.b16 %v24
  %v176 = vunpack.c.l.b16 %v25
  %v177 = vunpack.c.l.b16 %v26
  %v178 = vunpack.c.l.b16 %v27
  %v179 = vunpack.c.l.b16 %v28
  %v180 = vunpack.c.l.b16 %v29
  %v181 = vunpack.c.l.b16 %v30
  %v182 = vunpack.c.l.b16 %v31
  %v183 = vunpack.c.l.b16 %v32
  %v184 = vunpack.c.l.b16 %v33
  %v185 = vunpack.c.l.b16 %v34
  %v186 = vunpack.c.l.b16 %v35
  %v187 = vunpack.c.l.b16 %v36
  %v188 = vunpack.c.l.b16 %v37
  %v189 = vunpack.c.l.b16 %v38
  %v190 = vpack.c.b16 %v175, %v174
  %v191 = vpack.c.b16 %v177, %v176
  %v192 = vpack.c.b16 %v179, %v178
  %v193 = vpack.c.b16 %v181, %v180
  %v194 = vpack.c.b16 %v183, %v182
  %v195 = vpack.c.b16 %v185, %v184
  %v196 = vpack.c.b16 %v187, %v186
  %v197 = vpack.c.b16 %v189, %v188
  %206 = vmatprep.subr.bf16.mxu0 0
  %207 = vmatpush1.bf16.msra.mxu0 %v190
  %208 = vmatprep.subr.bf16.mxu0 0
  %209 = vmatpush1.bf16.msra.mxu0 %v191
  %210 = vmatprep.subr.bf16.mxu0 0
  %211 = vmatpush1.bf16.msra.mxu0 %v192
  %212 = vmatprep.subr.bf16.mxu0 0
  %213 = vmatpush1.bf16.msra.mxu0 %v193
  %214 = vmatprep.subr.bf16.mxu0 0
  %215 = vmatpush1.bf16.msra.mxu0 %v194
  %216 = vmatprep.subr.bf16.mxu0 0
  %217 = vmatpush1.bf16.msra.mxu0 %v195
  %218 = vmatprep.subr.bf16.mxu0 0
  %219 = vmatpush1.bf16.msra.mxu0 %v196
  %220 = vmatprep.subr.bf16.mxu0 0
  %221 = vmatpush1.bf16.msra.mxu0 %v197
  %222 = vmatprep.subr.bf16.mxu0 0
  %223 = vmatpush1.bf16.msra.mxu0 0
  %224 = vmatprep.subr.bf16.mxu0 0
  %225 = vmatpush1.bf16.msra.mxu0 0
  %226 = vmatprep.subr.bf16.mxu0 0
  %227 = vmatpush1.bf16.msra.mxu0 0
  %228 = vmatprep.subr.bf16.mxu0 0
  %229 = vmatpush1.bf16.msra.mxu0 0
  %230 = vmatprep.subr.bf16.mxu0 0
  %231 = vmatpush1.bf16.msra.mxu0 0
  %232 = vmatprep.subr.bf16.mxu0 0
  %233 = vmatpush1.bf16.msra.mxu0 0
  %234 = vmatprep.subr.bf16.mxu0 0
  %235 = vmatpush1.bf16.msra.mxu0 0
  %236 = vmatprep.subr.bf16.mxu0 0
  %237 = vmatpush1.bf16.msra.mxu0 0
  %238 = vmatprep.mubr.bf16.mxu0 0
  %239 = vmatmul.mubr.bf16.gmra.mrb[0].mxu0 %v156
  %v240 = vpop.f32.mrb[0].mxu0
  %v241 = vadd.f32 %v146, %v240
  %v242 = vpop.f32.mrb[0].mxu0
  %v243 = vpop.f32.mrb[0].mxu0
  %v244 = vadd.f32 %v149, %v243
  %v245 = vpop.f32.mrb[0].mxu0
  %246 = vdwg.mxu0
  %v247 = vtanh.pop %v241
  %v248 = vtanh.pop %v244
  %v249 = vpack.c.bf16 %v248, %v247
  %v250 = vld [vmem:[%s4] sm:$0xf]
  %v251 = vld [vmem:[%s4 + $0x4] sm:$0xf]
  %v252 = vld [vmem:[%s4 + $0x8] sm:$0xf]
  %v253 = vld [vmem:[%s4 + $0xc] sm:$0xf]
  %v258 = vunpack.c.l.b16 %v250
  %v259 = vunpack.c.l.b16 %v251
  %v260 = vunpack.c.l.b16 %v252
  %v261 = vunpack.c.l.b16 %v253
  %v262 = vpack.c.b16 %v259, %v258
  %v263 = vpack.c.b16 %v261, %v260
  %vm266 = vcmask 261120
  %v268 = vsel %vm266, %v249, 0
  %270 = vmatprep.subr.bf16.mxu0 0
  %271 = vmatpush1.bf16.msra.mxu0 %v262
  %272 = vmatprep.subr.bf16.mxu0 0
  %273 = vmatpush1.bf16.msra.mxu0 %v263
  %274 = vmatprep.subr.bf16.mxu0 0
  %275 = vmatpush1.bf16.msra.mxu0 0
  %276 = vmatprep.subr.bf16.mxu0 0
  %277 = vmatpush1.bf16.msra.mxu0 0
  %278 = vmatprep.subr.bf16.mxu0 0
  %279 = vmatpush1.bf16.msra.mxu0 0
  %280 = vmatprep.subr.bf16.mxu0 0
  %281 = vmatpush1.bf16.msra.mxu0 0
  %282 = vmatprep.subr.bf16.mxu0 0
  %283 = vmatpush1.bf16.msra.mxu0 0
  %284 = vmatprep.subr.bf16.mxu0 0
  %285 = vmatpush1.bf16.msra.mxu0 0
  %286 = vmatprep.subr.bf16.mxu0 0
  %287 = vmatpush1.bf16.msra.mxu0 0
  %288 = vmatprep.subr.bf16.mxu0 0
  %289 = vmatpush1.bf16.msra.mxu0 0
  %290 = vmatprep.subr.bf16.mxu0 0
  %291 = vmatpush1.bf16.msra.mxu0 0
  %292 = vmatprep.subr.bf16.mxu0 0
  %293 = vmatpush1.bf16.msra.mxu0 0
  %294 = vmatprep.subr.bf16.mxu0 0
  %295 = vmatpush1.bf16.msra.mxu0 0
  %296 = vmatprep.subr.bf16.mxu0 0
  %297 = vmatpush1.bf16.msra.mxu0 0
  %298 = vmatprep.subr.bf16.mxu0 0
  %299 = vmatpush1.bf16.msra.mxu0 0
  %300 = vmatprep.subr.bf16.mxu0 0
  %301 = vmatpush1.bf16.msra.mxu0 0
  %302 = vmatprep.mubr.bf16.mxu0 0
  %303 = vmatmul.mubr.bf16.gmra.mrb[0].mxu0 %v268
  %v304 = vpop.f32.mrb[0].mxu0
  %v305 = vadd.f32 0.0, %v304
  %v306 = vpop.f32.mrb[0].mxu0
  %v307 = vpop.f32.mrb[0].mxu0
  %v308 = vadd.f32 0.0, %v307
  %v309 = vpop.f32.mrb[0].mxu0
  %310 = vdwg.mxu0
  %311 = vst [vmem:[%s5] sm:$0xff] %v305
  %312 = vst [vmem:[%s5 + $0x8] sm:$0xff] %v308
  // Predicated region
  $region22: #{rwkv7_block_forward.15} parent=0 // pred_check
    _
  $region23: #{rwkv7_block_forward.15} parent=0 // pred_check_branch
    %314 = sbr.rel (0) target = $region25
  $region24: #{rwkv7_block_forward.15} parent=0 // pred_region
    _
  $region25: #{rwkv7_block_forward.15} parent=0 // pred_fallthru
    _
  // Predicated region
  $region26: #{rwkv7_block_forward.15} parent=0 // pred_check
    _
  $region27: #{rwkv7_block_forward.15} parent=0 // pred_check_branch
    %316 = sbr.rel (0) target = $region29
  $region28: #{rwkv7_block_forward.15} parent=0 // pred_region
    _
  $region29: #{rwkv7_block_forward.15} parent=0 // pred_fallthru
    _

// kernel: rwkv7_block_forward.17
$region0: #{rwkv7_block_forward.17}
  #allocation0 [shape = 'u32[]', space=smem, size = 0x4, offset = 0x4, fixed_abs, tag = 'smem constant byte address 0x4 - core index']
  #allocation1 [shape = 'u32[144,128]{1,0:T(1,128)}', space=vmem, size = 0x12000, scoped, tag = 'internal scratch']
  %s0 = inlined_call_operand.vmem [shape: bf16[16,128], index: 0, kind: input, shape index: {}]
  %s1 = inlined_call_operand.vmem [shape: bf16[16,128], index: 1, kind: input, shape index: {}]
  %s2 = inlined_call_operand.vmem [shape: bf16[128,32], index: 2, kind: input, shape index: {}]
  %s3 = inlined_call_operand.vmem [shape: bf16[128,32], index: 3, kind: input, shape index: {}]
  %s4 = inlined_call_operand.vmem [shape: bf16[32,128], index: 4, kind: input, shape index: {}]
  %s5 = inlined_call_operand.vmem [shape: f32[16,128], index: 5, kind: output, shape index: {}]
  %s6 = sld [smem:[#allocation0]]
  $region30: #{rwkv7_block_forward.17} parent=0
    _
  %s8 = ssub.s32 1, %s6
  %s9 = scalar_select 0, %s8, %s6
  // Predicated region
  $region2: #{rwkv7_block_forward.17} parent=0 // pred_check
    _
  $region3: #{rwkv7_block_forward.17} parent=0 // pred_check_branch
    %11 = sbr.rel (0) target = $region5
  $region4: #{rwkv7_block_forward.17} parent=0 // pred_region
    _
  $region5: #{rwkv7_block_forward.17} parent=0 // pred_fallthru
    _
  // Predicated region
  $region6: #{rwkv7_block_forward.17} parent=0 // pred_check
    _
  $region7: #{rwkv7_block_forward.17} parent=0 // pred_check_branch
    %13 = sbr.rel (0) target = $region9
  $region8: #{rwkv7_block_forward.17} parent=0 // pred_region
    _
  $region9: #{rwkv7_block_forward.17} parent=0 // pred_fallthru
    _
  // Predicated region
  $region10: #{rwkv7_block_forward.17} parent=0 // pred_check
    _
  $region11: #{rwkv7_block_forward.17} parent=0 // pred_check_branch
    %15 = sbr.rel (0) target = $region13
  $region12: #{rwkv7_block_forward.17} parent=0 // pred_region
    _
  $region13: #{rwkv7_block_forward.17} parent=0 // pred_fallthru
    _
  // Predicated region
  $region14: #{rwkv7_block_forward.17} parent=0 // pred_check
    _
  $region15: #{rwkv7_block_forward.17} parent=0 // pred_check_branch
    %17 = sbr.rel (0) target = $region17
  $region16: #{rwkv7_block_forward.17} parent=0 // pred_region
    _
  $region17: #{rwkv7_block_forward.17} parent=0 // pred_fallthru
    _
  // Predicated region
  $region18: #{rwkv7_block_forward.17} parent=0 // pred_check
    _
  $region19: #{rwkv7_block_forward.17} parent=0 // pred_check_branch
    %19 = sbr.rel (0) target = $region21
  $region20: #{rwkv7_block_forward.17} parent=0 // pred_region
    _
  $region21: #{rwkv7_block_forward.17} parent=0 // pred_fallthru
    _
  %v21 = vld [vmem:[%s0] sm:$0xf]
  %v22 = vld [vmem:[%s0 + $0x4] sm:$0xf]
  %v23 = vld [vmem:[%s2] sm:$0xf]
  %v24 = vld [vmem:[%s2 + $0x4] sm:$0xf]
  %v25 = vld [vmem:[%s2 + $0x8] sm:$0xf]
  %v26 = vld [vmem:[%s2 + $0xc] sm:$0xf]
  %v27 = vld [vmem:[%s2 + $0x10] sm:$0xf]
  %v28 = vld [vmem:[%s2 + $0x14] sm:$0xf]
  %v29 = vld [vmem:[%s2 + $0x18] sm:$0xf]
  %v30 = vld [vmem:[%s2 + $0x1c] sm:$0xf]
  %v31 = vld [vmem:[%s2 + $0x20] sm:$0xf]
  %v32 = vld [vmem:[%s2 + $0x24] sm:$0xf]
  %v33 = vld [vmem:[%s2 + $0x28] sm:$0xf]
  %v34 = vld [vmem:[%s2 + $0x2c] sm:$0xf]
  %v35 = vld [vmem:[%s2 + $0x30] sm:$0xf]
  %v36 = vld [vmem:[%s2 + $0x34] sm:$0xf]
  %v37 = vld [vmem:[%s2 + $0x38] sm:$0xf]
  %v38 = vld [vmem:[%s2 + $0x3c] sm:$0xf]
  %v39 = vld [vmem:[%s1] sm:$0xf]
  %v40 = vld [vmem:[%s1 + $0x4] sm:$0xf]
  %v41 = vld [vmem:[%s3] sm:$0xf]
  %v42 = vld [vmem:[%s3 + $0x4] sm:$0xf]
  %v43 = vld [vmem:[%s3 + $0x8] sm:$0xf]
  %v44 = vld [vmem:[%s3 + $0xc] sm:$0xf]
  %v45 = vld [vmem:[%s3 + $0x10] sm:$0xf]
  %v46 = vld [vmem:[%s3 + $0x14] sm:$0xf]
  %v47 = vld [vmem:[%s3 + $0x18] sm:$0xf]
  %v48 = vld [vmem:[%s3 + $0x1c] sm:$0xf]
  %v49 = vld [vmem:[%s3 + $0x20] sm:$0xf]
  %v50 = vld [vmem:[%s3 + $0x24] sm:$0xf]
  %v51 = vld [vmem:[%s3 + $0x28] sm:$0xf]
  %v52 = vld [vmem:[%s3 + $0x2c] sm:$0xf]
  %v53 = vld [vmem:[%s3 + $0x30] sm:$0xf]
  %v54 = vld [vmem:[%s3 + $0x34] sm:$0xf]
  %v55 = vld [vmem:[%s3 + $0x38] sm:$0xf]
  %v56 = vld [vmem:[%s3 + $0x3c] sm:$0xf]
  %v59 = vunpack.c.l.b16 %v39
  %v60 = vunpack.c.l.b16 %v40
  %v61 = vpack.c.b16 %v60, %v59
  %v79 = vunpack.c.l.b16 %v41
  %v80 = vunpack.c.l.b16 %v42
  %v81 = vunpack.c.l.b16 %v43
  %v82 = vunpack.c.l.b16 %v44
  %v83 = vunpack.c.l.b16 %v45
  %v84 = vunpack.c.l.b16 %v46
  %v85 = vunpack.c.l.b16 %v47
  %v86 = vunpack.c.l.b16 %v48
  %v87 = vunpack.c.l.b16 %v49
  %v88 = vunpack.c.l.b16 %v50
  %v89 = vunpack.c.l.b16 %v51
  %v90 = vunpack.c.l.b16 %v52
  %v91 = vunpack.c.l.b16 %v53
  %v92 = vunpack.c.l.b16 %v54
  %v93 = vunpack.c.l.b16 %v55
  %v94 = vunpack.c.l.b16 %v56
  %v95 = vpack.c.b16 %v80, %v79
  %v96 = vpack.c.b16 %v82, %v81
  %v97 = vpack.c.b16 %v84, %v83
  %v98 = vpack.c.b16 %v86, %v85
  %v99 = vpack.c.b16 %v88, %v87
  %v100 = vpack.c.b16 %v90, %v89
  %v101 = vpack.c.b16 %v92, %v91
  %v102 = vpack.c.b16 %v94, %v93
  %111 = vmatprep.subr.bf16.mxu0 0
  %112 = vmatpush1.bf16.msra.mxu0 %v95
  %113 = vmatprep.subr.bf16.mxu0 0
  %114 = vmatpush1.bf16.msra.mxu0 %v96
  %115 = vmatprep.subr.bf16.mxu0 0
  %116 = vmatpush1.bf16.msra.mxu0 %v97
  %117 = vmatprep.subr.bf16.mxu0 0
  %118 = vmatpush1.bf16.msra.mxu0 %v98
  %119 = vmatprep.subr.bf16.mxu0 0
  %120 = vmatpush1.bf16.msra.mxu0 %v99
  %121 = vmatprep.subr.bf16.mxu0 0
  %122 = vmatpush1.bf16.msra.mxu0 %v100
  %123 = vmatprep.subr.bf16.mxu0 0
  %124 = vmatpush1.bf16.msra.mxu0 %v101
  %125 = vmatprep.subr.bf16.mxu0 0
  %126 = vmatpush1.bf16.msra.mxu0 %v102
  %127 = vmatprep.subr.bf16.mxu0 0
  %128 = vmatpush1.bf16.msra.mxu0 0
  %129 = vmatprep.subr.bf16.mxu0 0
  %130 = vmatpush1.bf16.msra.mxu0 0
  %131 = vmatprep.subr.bf16.mxu0 0
  %132 = vmatpush1.bf16.msra.mxu0 0
  %133 = vmatprep.subr.bf16.mxu0 0
  %134 = vmatpush1.bf16.msra.mxu0 0
  %135 = vmatprep.subr.bf16.mxu0 0
  %136 = vmatpush1.bf16.msra.mxu0 0
  %137 = vmatprep.subr.bf16.mxu0 0
  %138 = vmatpush1.bf16.msra.mxu0 0
  %139 = vmatprep.subr.bf16.mxu0 0
  %140 = vmatpush1.bf16.msra.mxu0 0
  %141 = vmatprep.subr.bf16.mxu0 0
  %142 = vmatpush1.bf16.msra.mxu0 0
  %143 = vmatprep.mubr.bf16.mxu0 0
  %144 = vmatmul.mubr.bf16.gmra.mrb[0].mxu0 %v61
  %v145 = vpop.f32.mrb[0].mxu0
  %v146 = vadd.f32 0.0, %v145
  %v147 = vpop.f32.mrb[0].mxu0
  %v148 = vpop.f32.mrb[0].mxu0
  %v149 = vadd.f32 0.0, %v148
  %v150 = vpop.f32.mrb[0].mxu0
  %151 = vdwg.mxu0
  %v154 = vunpack.c.l.b16 %v21
  %v155 = vunpack.c.l.b16 %v22
  %v156 = vpack.c.b16 %v155, %v154
  %v174 = vunpack.c.l.b16 %v23
  %v175 = vunpack.c.l.b16 %v24
  %v176 = vunpack.c.l.b16 %v25
  %v177 = vunpack.c.l.b16 %v26
  %v178 = vunpack.c.l.b16 %v27
  %v179 = vunpack.c.l.b16 %v28
  %v180 = vunpack.c.l.b16 %v29
  %v181 = vunpack.c.l.b16 %v30
  %v182 = vunpack.c.l.b16 %v31
  %v183 = vunpack.c.l.b16 %v32
  %v184 = vunpack.c.l.b16 %v33
  %v185 = vunpack.c.l.b16 %v34
  %v186 = vunpack.c.l.b16 %v35
  %v187 = vunpack.c.l.b16 %v36
  %v188 = vunpack.c.l.b16 %v37
  %v189 = vunpack.c.l.b16 %v38
  %v190 = vpack.c.b16 %v175, %v174
  %v191 = vpack.c.b16 %v177, %v176
  %v192 = vpack.c.b16 %v179, %v178
  %v193 = vpack.c.b16 %v181, %v180
  %v194 = vpack.c.b16 %v183, %v182
  %v195 = vpack.c.b16 %v185, %v184
  %v196 = vpack.c.b16 %v187, %v186
  %v197 = vpack.c.b16 %v189, %v188
  %206 = vmatprep.subr.bf16.mxu0 0
  %207 = vmatpush1.bf16.msra.mxu0 %v190
  %208 = vmatprep.subr.bf16.mxu0 0
  %209 = vmatpush1.bf16.msra.mxu0 %v191
  %210 = vmatprep.subr.bf16.mxu0 0
  %211 = vmatpush1.bf16.msra.mxu0 %v192
  %212 = vmatprep.subr.bf16.mxu0 0
  %213 = vmatpush1.bf16.msra.mxu0 %v193
  %214 = vmatprep.subr.bf16.mxu0 0
  %215 = vmatpush1.bf16.msra.mxu0 %v194
  %216 = vmatprep.subr.bf16.mxu0 0
  %217 = vmatpush1.bf16.msra.mxu0 %v195
  %218 = vmatprep.subr.bf16.mxu0 0
  %219 = vmatpush1.bf16.msra.mxu0 %v196
  %220 = vmatprep.subr.bf16.mxu0 0
  %221 = vmatpush1.bf16.msra.mxu0 %v197
  %222 = vmatprep.subr.bf16.mxu0 0
  %223 = vmatpush1.bf16.msra.mxu0 0
  %224 = vmatprep.subr.bf16.mxu0 0
  %225 = vmatpush1.bf16.msra.mxu0 0
  %226 = vmatprep.subr.bf16.mxu0 0
  %227 = vmatpush1.bf16.msra.mxu0 0
  %228 = vmatprep.subr.bf16.mxu0 0
  %229 = vmatpush1.bf16.msra.mxu0 0
  %230 = vmatprep.subr.bf16.mxu0 0
  %231 = vmatpush1.bf16.msra.mxu0 0
  %232 = vmatprep.subr.bf16.mxu0 0
  %233 = vmatpush1.bf16.msra.mxu0 0
  %234 = vmatprep.subr.bf16.mxu0 0
  %235 = vmatpush1.bf16.msra.mxu0 0
  %236 = vmatprep.subr.bf16.mxu0 0
  %237 = vmatpush1.bf16.msra.mxu0 0
  %238 = vmatprep.mubr.bf16.mxu0 0
  %239 = vmatmul.mubr.bf16.gmra.mrb[0].mxu0 %v156
  %v240 = vpop.f32.mrb[0].mxu0
  %v241 = vadd.f32 %v146, %v240
  %v242 = vpop.f32.mrb[0].mxu0
  %v243 = vpop.f32.mrb[0].mxu0
  %v244 = vadd.f32 %v149, %v243
  %v245 = vpop.f32.mrb[0].mxu0
  %246 = vdwg.mxu0
  %v247 = vxor.u32 %v241, 2147483648
  %v248 = vxor.u32 %v244, 2147483648
  %v249 = vmul.f32 %v247, 1.442695
  %v250 = vpow.pop %v249
  %v251 = vmul.f32 %v248, 1.442695
  %v252 = vpow.pop %v251
  %v253 = vadd.f32 %v250, 1.0
  %v254 = vadd.f32 %v252, 1.0
  %v255 = vrcp.pop %v253
  %v256 = vmul.f32 1.0, %v255
  %v257 = vrcp.pop %v254
  %v258 = vmul.f32 1.0, %v257
  %v259 = vpack.c.bf16 %v258, %v256
  %v260 = vld [vmem:[%s4] sm:$0xf]
  %v261 = vld [vmem:[%s4 + $0x4] sm:$0xf]
  %v262 = vld [vmem:[%s4 + $0x8] sm:$0xf]
  %v263 = vld [vmem:[%s4 + $0xc] sm:$0xf]
  %v268 = vunpack.c.l.b16 %v260
  %v269 = vunpack.c.l.b16 %v261
  %v270 = vunpack.c.l.b16 %v262
  %v271 = vunpack.c.l.b16 %v263
  %v272 = vpack.c.b16 %v269, %v268
  %v273 = vpack.c.b16 %v271, %v270
  %vm276 = vcmask 261120
  %v278 = vsel %vm276, %v259, 0
  %280 = vmatprep.subr.bf16.mxu0 0
  %281 = vmatpush1.bf16.msra.mxu0 %v272
  %282 = vmatprep.subr.bf16.mxu0 0
  %283 = vmatpush1.bf16.msra.mxu0 %v273
  %284 = vmatprep.subr.bf16.mxu0 0
  %285 = vmatpush1.bf16.msra.mxu0 0
  %286 = vmatprep.subr.bf16.mxu0 0
  %287 = vmatpush1.bf16.msra.mxu0 0
  %288 = vmatprep.subr.bf16.mxu0 0
  %289 = vmatpush1.bf16.msra.mxu0 0
  %290 = vmatprep.subr.bf16.mxu0 0
  %291 = vmatpush1.bf16.msra.mxu0 0
  %292 = vmatprep.subr.bf16.mxu0 0
  %293 = vmatpush1.bf16.msra.mxu0 0
  %294 = vmatprep.subr.bf16.mxu0 0
  %295 = vmatpush1.bf16.msra.mxu0 0
  %296 = vmatprep.subr.bf16.mxu0 0
  %297 = vmatpush1.bf16.msra.mxu0 0
  %298 = vmatprep.subr.bf16.mxu0 0
  %299 = vmatpush1.bf16.msra.mxu0 0
  %300 = vmatprep.subr.bf16.mxu0 0
  %301 = vmatpush1.bf16.msra.mxu0 0
  %302 = vmatprep.subr.bf16.mxu0 0
  %303 = vmatpush1.bf16.msra.mxu0 0
  %304 = vmatprep.subr.bf16.mxu0 0
  %305 = vmatpush1.bf16.msra.mxu0 0
  %306 = vmatprep.subr.bf16.mxu0 0
  %307 = vmatpush1.bf16.msra.mxu0 0
  %308 = vmatprep.subr.bf16.mxu0 0
  %309 = vmatpush1.bf16.msra.mxu0 0
  %310 = vmatprep.subr.bf16.mxu0 0
  %311 = vmatpush1.bf16.msra.mxu0 0
  %312 = vmatprep.mubr.bf16.mxu0 0
  %313 = vmatmul.mubr.bf16.gmra.mrb[0].mxu0 %v278
  %v314 = vpop.f32.mrb[0].mxu0
  %v315 = vadd.f32 0.0, %v314
  %v316 = vpop.f32.mrb[0].mxu0
  %v317 = vpop.f32.mrb[0].mxu0
  %v318 = vadd.f32 0.0, %v317
  %v319 = vpop.f32.mrb[0].mxu0
  %320 = vdwg.mxu0
  %321 = vst [vmem:[%s5] sm:$0xff] %v315
  %322 = vst [vmem:[%s5 + $0x8] sm:$0xff] %v318
  // Predicated region
  $region22: #{rwkv7_block_forward.17} parent=0 // pred_check
    _
  $region23: #{rwkv7_block_forward.17} parent=0 // pred_check_branch
    %324 = sbr.rel (0) target = $region25
  $region24: #{rwkv7_block_forward.17} parent=0 // pred_region
    _
  $region25: #{rwkv7_block_forward.17} parent=0 // pred_fallthru
    _
  // Predicated region
  $region26: #{rwkv7_block_forward.17} parent=0 // pred_check
    _
  $region27: #{rwkv7_block_forward.17} parent=0 // pred_check_branch
    %326 = sbr.rel (0) target = $region29
  $region28: #{rwkv7_block_forward.17} parent=0 // pred_region
    _
  $region29: #{rwkv7_block_forward.17} parent=0 // pred_fallthru
    _

// kernel: rwkv7_block_forward.16
$region0: #{rwkv7_block_forward.16}
  #allocation0 [shape = 'u32[]', space=smem, size = 0x4, offset = 0x4, fixed_abs, tag = 'smem constant byte address 0x4 - core index']
  #allocation1 [shape = 'u32[144,128]{1,0:T(1,128)}', space=vmem, size = 0x12000, scoped, tag = 'internal scratch']
  %s0 = inlined_call_operand.vmem [shape: bf16[16,128], index: 0, kind: input, shape index: {}]
  %s1 = inlined_call_operand.vmem [shape: bf16[16,128], index: 1, kind: input, shape index: {}]
  %s2 = inlined_call_operand.vmem [shape: bf16[128,32], index: 2, kind: input, shape index: {}]
  %s3 = inlined_call_operand.vmem [shape: bf16[128,32], index: 3, kind: input, shape index: {}]
  %s4 = inlined_call_operand.vmem [shape: bf16[32,128], index: 4, kind: input, shape index: {}]
  %s5 = inlined_call_operand.vmem [shape: f32[16,128], index: 5, kind: output, shape index: {}]
  %s6 = sld [smem:[#allocation0]]
  $region30: #{rwkv7_block_forward.16} parent=0
    _
  %s8 = ssub.s32 1, %s6
  %s9 = scalar_select 0, %s8, %s6
  // Predicated region
  $region2: #{rwkv7_block_forward.16} parent=0 // pred_check
    _
  $region3: #{rwkv7_block_forward.16} parent=0 // pred_check_branch
    %11 = sbr.rel (0) target = $region5
  $region4: #{rwkv7_block_forward.16} parent=0 // pred_region
    _
  $region5: #{rwkv7_block_forward.16} parent=0 // pred_fallthru
    _
  // Predicated region
  $region6: #{rwkv7_block_forward.16} parent=0 // pred_check
    _
  $region7: #{rwkv7_block_forward.16} parent=0 // pred_check_branch
    %13 = sbr.rel (0) target = $region9
  $region8: #{rwkv7_block_forward.16} parent=0 // pred_region
    _
  $region9: #{rwkv7_block_forward.16} parent=0 // pred_fallthru
    _
  // Predicated region
  $region10: #{rwkv7_block_forward.16} parent=0 // pred_check
    _
  $region11: #{rwkv7_block_forward.16} parent=0 // pred_check_branch
    %15 = sbr.rel (0) target = $region13
  $region12: #{rwkv7_block_forward.16} parent=0 // pred_region
    _
  $region13: #{rwkv7_block_forward.16} parent=0 // pred_fallthru
    _
  // Predicated region
  $region14: #{rwkv7_block_forward.16} parent=0 // pred_check
    _
  $region15: #{rwkv7_block_forward.16} parent=0 // pred_check_branch
    %17 = sbr.rel (0) target = $region17
  $region16: #{rwkv7_block_forward.16} parent=0 // pred_region
    _
  $region17: #{rwkv7_block_forward.16} parent=0 // pred_fallthru
    _
  // Predicated region
  $region18: #{rwkv7_block_forward.16} parent=0 // pred_check
    _
  $region19: #{rwkv7_block_forward.16} parent=0 // pred_check_branch
    %19 = sbr.rel (0) target = $region21
  $region20: #{rwkv7_block_forward.16} parent=0 // pred_region
    _
  $region21: #{rwkv7_block_forward.16} parent=0 // pred_fallthru
    _
  %v21 = vld [vmem:[%s0] sm:$0xf]
  %v22 = vld [vmem:[%s0 + $0x4] sm:$0xf]
  %v23 = vld [vmem:[%s2] sm:$0xf]
  %v24 = vld [vmem:[%s2 + $0x4] sm:$0xf]
  %v25 = vld [vmem:[%s2 + $0x8] sm:$0xf]
  %v26 = vld [vmem:[%s2 + $0xc] sm:$0xf]
  %v27 = vld [vmem:[%s2 + $0x10] sm:$0xf]
  %v28 = vld [vmem:[%s2 + $0x14] sm:$0xf]
  %v29 = vld [vmem:[%s2 + $0x18] sm:$0xf]
  %v30 = vld [vmem:[%s2 + $0x1c] sm:$0xf]
  %v31 = vld [vmem:[%s2 + $0x20] sm:$0xf]
  %v32 = vld [vmem:[%s2 + $0x24] sm:$0xf]
  %v33 = vld [vmem:[%s2 + $0x28] sm:$0xf]
  %v34 = vld [vmem:[%s2 + $0x2c] sm:$0xf]
  %v35 = vld [vmem:[%s2 + $0x30] sm:$0xf]
  %v36 = vld [vmem:[%s2 + $0x34] sm:$0xf]
  %v37 = vld [vmem:[%s2 + $0x38] sm:$0xf]
  %v38 = vld [vmem:[%s2 + $0x3c] sm:$0xf]
  %v39 = vld [vmem:[%s1] sm:$0xf]
  %v40 = vld [vmem:[%s1 + $0x4] sm:$0xf]
  %v41 = vld [vmem:[%s3] sm:$0xf]
  %v42 = vld [vmem:[%s3 + $0x4] sm:$0xf]
  %v43 = vld [vmem:[%s3 + $0x8] sm:$0xf]
  %v44 = vld [vmem:[%s3 + $0xc] sm:$0xf]
  %v45 = vld [vmem:[%s3 + $0x10] sm:$0xf]
  %v46 = vld [vmem:[%s3 + $0x14] sm:$0xf]
  %v47 = vld [vmem:[%s3 + $0x18] sm:$0xf]
  %v48 = vld [vmem:[%s3 + $0x1c] sm:$0xf]
  %v49 = vld [vmem:[%s3 + $0x20] sm:$0xf]
  %v50 = vld [vmem:[%s3 + $0x24] sm:$0xf]
  %v51 = vld [vmem:[%s3 + $0x28] sm:$0xf]
  %v52 = vld [vmem:[%s3 + $0x2c] sm:$0xf]
  %v53 = vld [vmem:[%s3 + $0x30] sm:$0xf]
  %v54 = vld [vmem:[%s3 + $0x34] sm:$0xf]
  %v55 = vld [vmem:[%s3 + $0x38] sm:$0xf]
  %v56 = vld [vmem:[%s3 + $0x3c] sm:$0xf]
  %v59 = vunpack.c.l.b16 %v39
  %v60 = vunpack.c.l.b16 %v40
  %v61 = vpack.c.b16 %v60, %v59
  %v79 = vunpack.c.l.b16 %v41
  %v80 = vunpack.c.l.b16 %v42
  %v81 = vunpack.c.l.b16 %v43
  %v82 = vunpack.c.l.b16 %v44
  %v83 = vunpack.c.l.b16 %v45
  %v84 = vunpack.c.l.b16 %v46
  %v85 = vunpack.c.l.b16 %v47
  %v86 = vunpack.c.l.b16 %v48
  %v87 = vunpack.c.l.b16 %v49
  %v88 = vunpack.c.l.b16 %v50
  %v89 = vunpack.c.l.b16 %v51
  %v90 = vunpack.c.l.b16 %v52
  %v91 = vunpack.c.l.b16 %v53
  %v92 = vunpack.c.l.b16 %v54
  %v93 = vunpack.c.l.b16 %v55
  %v94 = vunpack.c.l.b16 %v56
  %v95 = vpack.c.b16 %v80, %v79
  %v96 = vpack.c.b16 %v82, %v81
  %v97 = vpack.c.b16 %v84, %v83
  %v98 = vpack.c.b16 %v86, %v85
  %v99 = vpack.c.b16 %v88, %v87
  %v100 = vpack.c.b16 %v90, %v89
  %v101 = vpack.c.b16 %v92, %v91
  %v102 = vpack.c.b16 %v94, %v93
  %111 = vmatprep.subr.bf16.mxu0 0
  %112 = vmatpush1.bf16.msra.mxu0 %v95
  %113 = vmatprep.subr.bf16.mxu0 0
  %114 = vmatpush1.bf16.msra.mxu0 %v96
  %115 = vmatprep.subr.bf16.mxu0 0
  %116 = vmatpush1.bf16.msra.mxu0 %v97
  %117 = vmatprep.subr.bf16.mxu0 0
  %118 = vmatpush1.bf16.msra.mxu0 %v98
  %119 = vmatprep.subr.bf16.mxu0 0
  %120 = vmatpush1.bf16.msra.mxu0 %v99
  %121 = vmatprep.subr.bf16.mxu0 0
  %122 = vmatpush1.bf16.msra.mxu0 %v100
  %123 = vmatprep.subr.bf16.mxu0 0
  %124 = vmatpush1.bf16.msra.mxu0 %v101
  %125 = vmatprep.subr.bf16.mxu0 0
  %126 = vmatpush1.bf16.msra.mxu0 %v102
  %127 = vmatprep.subr.bf16.mxu0 0
  %128 = vmatpush1.bf16.msra.mxu0 0
  %129 = vmatprep.subr.bf16.mxu0 0
  %130 = vmatpush1.bf16.msra.mxu0 0
  %131 = vmatprep.subr.bf16.mxu0 0
  %132 = vmatpush1.bf16.msra.mxu0 0
  %133 = vmatprep.subr.bf16.mxu0 0
  %134 = vmatpush1.bf16.msra.mxu0 0
  %135 = vmatprep.subr.bf16.mxu0 0
  %136 = vmatpush1.bf16.msra.mxu0 0
  %137 = vmatprep.subr.bf16.mxu0 0
  %138 = vmatpush1.bf16.msra.mxu0 0
  %139 = vmatprep.subr.bf16.mxu0 0
  %140 = vmatpush1.bf16.msra.mxu0 0
  %141 = vmatprep.subr.bf16.mxu0 0
  %142 = vmatpush1.bf16.msra.mxu0 0
  %143 = vmatprep.mubr.bf16.mxu0 0
  %144 = vmatmul.mubr.bf16.gmra.mrb[0].mxu0 %v61
  %v145 = vpop.f32.mrb[0].mxu0
  %v146 = vadd.f32 0.0, %v145
  %v147 = vpop.f32.mrb[0].mxu0
  %v148 = vpop.f32.mrb[0].mxu0
  %v149 = vadd.f32 0.0, %v148
  %v150 = vpop.f32.mrb[0].mxu0
  %151 = vdwg.mxu0
  %v154 = vunpack.c.l.b16 %v21
  %v155 = vunpack.c.l.b16 %v22
  %v156 = vpack.c.b16 %v155, %v154
  %v174 = vunpack.c.l.b16 %v23
  %v175 = vunpack.c.l.b16 %v24
  %v176 = vunpack.c.l.b16 %v25
  %v177 = vunpack.c.l.b16 %v26
  %v178 = vunpack.c.l.b16 %v27
  %v179 = vunpack.c.l.b16 %v28
  %v180 = vunpack.c.l.b16 %v29
  %v181 = vunpack.c.l.b16 %v30
  %v182 = vunpack.c.l.b16 %v31
  %v183 = vunpack.c.l.b16 %v32
  %v184 = vunpack.c.l.b16 %v33
  %v185 = vunpack.c.l.b16 %v34
  %v186 = vunpack.c.l.b16 %v35
  %v187 = vunpack.c.l.b16 %v36
  %v188 = vunpack.c.l.b16 %v37
  %v189 = vunpack.c.l.b16 %v38
  %v190 = vpack.c.b16 %v175, %v174
  %v191 = vpack.c.b16 %v177, %v176
  %v192 = vpack.c.b16 %v179, %v178
  %v193 = vpack.c.b16 %v181, %v180
  %v194 = vpack.c.b16 %v183, %v182
  %v195 = vpack.c.b16 %v185, %v184
  %v196 = vpack.c.b16 %v187, %v186
  %v197 = vpack.c.b16 %v189, %v188
  %206 = vmatprep.subr.bf16.mxu0 0
  %207 = vmatpush1.bf16.msra.mxu0 %v190
  %208 = vmatprep.subr.bf16.mxu0 0
  %209 = vmatpush1.bf16.msra.mxu0 %v191
  %210 = vmatprep.subr.bf16.mxu0 0
  %211 = vmatpush1.bf16.msra.mxu0 %v192
  %212 = vmatprep.subr.bf16.mxu0 0
  %213 = vmatpush1.bf16.msra.mxu0 %v193
  %214 = vmatprep.subr.bf16.mxu0 0
  %215 = vmatpush1.bf16.msra.mxu0 %v194
  %216 = vmatprep.subr.bf16.mxu0 0
  %217 = vmatpush1.bf16.msra.mxu0 %v195
  %218 = vmatprep.subr.bf16.mxu0 0
  %219 = vmatpush1.bf16.msra.mxu0 %v196
  %220 = vmatprep.subr.bf16.mxu0 0
  %221 = vmatpush1.bf16.msra.mxu0 %v197
  %222 = vmatprep.subr.bf16.mxu0 0
  %223 = vmatpush1.bf16.msra.mxu0 0
  %224 = vmatprep.subr.bf16.mxu0 0
  %225 = vmatpush1.bf16.msra.mxu0 0
  %226 = vmatprep.subr.bf16.mxu0 0
  %227 = vmatpush1.bf16.msra.mxu0 0
  %228 = vmatprep.subr.bf16.mxu0 0
  %229 = vmatpush1.bf16.msra.mxu0 0
  %230 = vmatprep.subr.bf16.mxu0 0
  %231 = vmatpush1.bf16.msra.mxu0 0
  %232 = vmatprep.subr.bf16.mxu0 0
  %233 = vmatpush1.bf16.msra.mxu0 0
  %234 = vmatprep.subr.bf16.mxu0 0
  %235 = vmatpush1.bf16.msra.mxu0 0
  %236 = vmatprep.subr.bf16.mxu0 0
  %237 = vmatpush1.bf16.msra.mxu0 0
  %238 = vmatprep.mubr.bf16.mxu0 0
  %239 = vmatmul.mubr.bf16.gmra.mrb[0].mxu0 %v156
  %v240 = vpop.f32.mrb[0].mxu0
  %v241 = vadd.f32 %v146, %v240
  %v242 = vpop.f32.mrb[0].mxu0
  %v243 = vpop.f32.mrb[0].mxu0
  %v244 = vadd.f32 %v149, %v243
  %v245 = vpop.f32.mrb[0].mxu0
  %246 = vdwg.mxu0
  %v247 = vpack.c.bf16 %v244, %v241
  %v248 = vld [vmem:[%s4] sm:$0xf]
  %v249 = vld [vmem:[%s4 + $0x4] sm:$0xf]
  %v250 = vld [vmem:[%s4 + $0x8] sm:$0xf]
  %v251 = vld [vmem:[%s4 + $0xc] sm:$0xf]
  %v256 = vunpack.c.l.b16 %v248
  %v257 = vunpack.c.l.b16 %v249
  %v258 = vunpack.c.l.b16 %v250
  %v259 = vunpack.c.l.b16 %v251
  %v260 = vpack.c.b16 %v257, %v256
  %v261 = vpack.c.b16 %v259, %v258
  %vm264 = vcmask 261120
  %v266 = vsel %vm264, %v247, 0
  %268 = vmatprep.subr.bf16.mxu0 0
  %269 = vmatpush1.bf16.msra.mxu0 %v260
  %270 = vmatprep.subr.bf16.mxu0 0
  %271 = vmatpush1.bf16.msra.mxu0 %v261
  %272 = vmatprep.subr.bf16.mxu0 0
  %273 = vmatpush1.bf16.msra.mxu0 0
  %274 = vmatprep.subr.bf16.mxu0 0
  %275 = vmatpush1.bf16.msra.mxu0 0
  %276 = vmatprep.subr.bf16.mxu0 0
  %277 = vmatpush1.bf16.msra.mxu0 0
  %278 = vmatprep.subr.bf16.mxu0 0
  %279 = vmatpush1.bf16.msra.mxu0 0
  %280 = vmatprep.subr.bf16.mxu0 0
  %281 = vmatpush1.bf16.msra.mxu0 0
  %282 = vmatprep.subr.bf16.mxu0 0
  %283 = vmatpush1.bf16.msra.mxu0 0
  %284 = vmatprep.subr.bf16.mxu0 0
  %285 = vmatpush1.bf16.msra.mxu0 0
  %286 = vmatprep.subr.bf16.mxu0 0
  %287 = vmatpush1.bf16.msra.mxu0 0
  %288 = vmatprep.subr.bf16.mxu0 0
  %289 = vmatpush1.bf16.msra.mxu0 0
  %290 = vmatprep.subr.bf16.mxu0 0
  %291 = vmatpush1.bf16.msra.mxu0 0
  %292 = vmatprep.subr.bf16.mxu0 0
  %293 = vmatpush1.bf16.msra.mxu0 0
  %294 = vmatprep.subr.bf16.mxu0 0
  %295 = vmatpush1.bf16.msra.mxu0 0
  %296 = vmatprep.subr.bf16.mxu0 0
  %297 = vmatpush1.bf16.msra.mxu0 0
  %298 = vmatprep.subr.bf16.mxu0 0
  %299 = vmatpush1.bf16.msra.mxu0 0
  %300 = vmatprep.mubr.bf16.mxu0 0
  %301 = vmatmul.mubr.bf16.gmra.mrb[0].mxu0 %v266
  %v302 = vpop.f32.mrb[0].mxu0
  %v303 = vadd.f32 0.0, %v302
  %v304 = vpop.f32.mrb[0].mxu0
  %v305 = vpop.f32.mrb[0].mxu0
  %v306 = vadd.f32 0.0, %v305
  %v307 = vpop.f32.mrb[0].mxu0
  %308 = vdwg.mxu0
  %309 = vst [vmem:[%s5] sm:$0xff] %v303
  %310 = vst [vmem:[%s5 + $0x8] sm:$0xff] %v306
  // Predicated region
  $region22: #{rwkv7_block_forward.16} parent=0 // pred_check
    _
  $region23: #{rwkv7_block_forward.16} parent=0 // pred_check_branch
    %312 = sbr.rel (0) target = $region25
  $region24: #{rwkv7_block_forward.16} parent=0 // pred_region
    _
  $region25: #{rwkv7_block_forward.16} parent=0 // pred_fallthru
    _
  // Predicated region
  $region26: #{rwkv7_block_forward.16} parent=0 // pred_check
    _
  $region27: #{rwkv7_block_forward.16} parent=0 // pred_check_branch
    %314 = sbr.rel (0) target = $region29
  $region28: #{rwkv7_block_forward.16} parent=0 // pred_region
    _
  $region29: #{rwkv7_block_forward.16} parent=0 // pred_fallthru
    _

// kernel: rwkv7_block_forward.19
$region0: #{rwkv7_block_forward.19}
  #allocation0 [shape = 'u32[]', space=smem, size = 0x4, offset = 0x4, fixed_abs, tag = 'smem constant byte address 0x4 - core index']
  #allocation1 [shape = 'u32[144,128]{1,0:T(1,128)}', space=vmem, size = 0x12000, scoped, tag = 'internal scratch']
  %s0 = inlined_call_operand.vmem [shape: f32[16,128], index: 0, kind: input, shape index: {}]
  %s1 = inlined_call_operand.vmem [shape: f32[1,128], index: 1, kind: input, shape index: {}]
  %s2 = inlined_call_operand.vmem [shape: f32[1,128], index: 2, kind: input, shape index: {}]
  %s3 = inlined_call_operand.vmem [shape: f32[16,128], index: 3, kind: output, shape index: {}]
  %s4 = sld [smem:[#allocation0]]
  $region22: #{rwkv7_block_forward.19} parent=0
    _
  %s6 = ssub.s32 1, %s4
  %s7 = scalar_select 0, %s6, %s4
  // Predicated region
  $region2: #{rwkv7_block_forward.19} parent=0 // pred_check
    _
  $region3: #{rwkv7_block_forward.19} parent=0 // pred_check_branch
    %9 = sbr.rel (0) target = $region5
  $region4: #{rwkv7_block_forward.19} parent=0 // pred_region
    _
  $region5: #{rwkv7_block_forward.19} parent=0 // pred_fallthru
    _
  // Predicated region
  $region6: #{rwkv7_block_forward.19} parent=0 // pred_check
    _
  $region7: #{rwkv7_block_forward.19} parent=0 // pred_check_branch
    %11 = sbr.rel (0) target = $region9
  $region8: #{rwkv7_block_forward.19} parent=0 // pred_region
    _
  $region9: #{rwkv7_block_forward.19} parent=0 // pred_fallthru
    _
  // Predicated region
  $region10: #{rwkv7_block_forward.19} parent=0 // pred_check
    _
  $region11: #{rwkv7_block_forward.19} parent=0 // pred_check_branch
    %13 = sbr.rel (0) target = $region13
  $region12: #{rwkv7_block_forward.19} parent=0 // pred_region
    _
  $region13: #{rwkv7_block_forward.19} parent=0 // pred_fallthru
    _
  %v14 = vld [vmem:[%s0] sm:$0xff]
  %v15 = vld [vmem:[%s0 + $0x8] sm:$0xff]
  %vm16 = vcmask 523264
  %v17 = vsel %vm16, %v14, 0.0
  %18 = vadd.xlane.f32.xlu0 %v17
  %v19 = vpop.xlane.xlu0 %18
  %v20 = vsel %vm16, %v15, 0.0
  %21 = vadd.xlane.f32.xlu0 %v20
  %v22 = vpop.xlane.xlu0 %21
  %v23 = vrcp.pop 64.0
  %v24 = vmul.f32 %v19, %v23
  %v25 = vmul.f32 %v22, %v23
  %v26 = vsub.f32 %v14, %v24
  %v27 = vsub.f32 %v15, %v25
  %v28 = vmul.f32 %v26, %v26
  %v29 = vmul.f32 %v27, %v27
  %v30 = vsel %vm16, %v28, 0.0
  %31 = vadd.xlane.f32.xlu0 %v30
  %v32 = vpop.xlane.xlu0 %31
  %v33 = vsel %vm16, %v29, 0.0
  %34 = vadd.xlane.f32.xlu0 %v33
  %v35 = vpop.xlane.xlu0 %34
  %v36 = vmul.f32 %v32, %v23
  %v37 = vmul.f32 %v35, %v23
  %v38 = vadd.f32 %v36, 0.00064
  %v39 = vadd.f32 %v37, 0.00064
  %v40 = vrsqrt.pop %v38
  %v41 = vrsqrt.pop %v39
  %v42 = vmul.f32 %v26, %v40
  %v43 = vmul.f32 %v27, %v41
  %46 = vrot.lane.b32.xlu0 %v14, 64
  %v47 = vpop.permute.xlu0 %46
  %48 = vrot.lane.b32.xlu0 %v15, 64
  %v49 = vpop.permute.xlu0 %48
  %v52 = vsel %vm16, %v47, 0.0
  %53 = vadd.xlane.f32.xlu0 %v52
  %v54 = vpop.xlane.xlu0 %53
  %v55 = vsel %vm16, %v49, 0.0
  %56 = vadd.xlane.f32.xlu0 %v55
  %v57 = vpop.xlane.xlu0 %56
  %v58 = vmul.f32 %v54, %v23
  %v59 = vmul.f32 %v57, %v23
  %v60 = vsub.f32 %v14, %v58
  %v61 = vsub.f32 %v15, %v59
  %v62 = vmul.f32 %v60, %v60
  %v63 = vmul.f32 %v61, %v61
  %66 = vrot.lane.b32.xlu0 %v62, 64
  %v67 = vpop.permute.xlu0 %66
  %68 = vrot.lane.b32.xlu0 %v63, 64
  %v69 = vpop.permute.xlu0 %68
  %v72 = vsel %vm16, %v67, 0.0
  %73 = vadd.xlane.f32.xlu0 %v72
  %v74 = vpop.xlane.xlu0 %73
  %v75 = vsel %vm16, %v69, 0.0
  %76 = vadd.xlane.f32.xlu0 %v75
  %v77 = vpop.xlane.xlu0 %76
  %v78 = vmul.f32 %v74, %v23
  %v79 = vmul.f32 %v77, %v23
  %v80 = vadd.f32 %v78, 0.00064
  %v81 = vadd.f32 %v79, 0.00064
  %v82 = vrsqrt.pop %v80
  %v83 = vrsqrt.pop %v81
  %v84 = vmul.f32 %v60, %v82
  %v85 = vmul.f32 %v61, %v83
  %v86 = vsel %vm16, %v42, %v84
  %v87 = vsel %vm16, %v43, %v85
  %v88 = vld [vmem:[%s1] sm:$0x1]
  %v90 = vlaneseq
  %v91 = vshrl.u32 %v90, 7
  %v92 = vsub.s32 0, %v91
  %v93 = vrot.slane %v88, %v92
  %v95 = vmul.f32 %v86, %v93
  %v96 = vmul.f32 %v87, %v93
  %v97 = vld [vmem:[%s2] sm:$0x1]
  %v99 = vlaneseq
  %v100 = vshrl.u32 %v99, 7
  %v101 = vsub.s32 0, %v100
  %v102 = vrot.slane %v97, %v101
  %v104 = vadd.f32 %v95, %v102
  %v105 = vadd.f32 %v96, %v102
  %106 = vst [vmem:[%s3] sm:$0xff] %v104
  %107 = vst [vmem:[%s3 + $0x8] sm:$0xff] %v105
  // Predicated region
  $region14: #{rwkv7_block_forward.19} parent=0 // pred_check
    _
  $region15: #{rwkv7_block_forward.19} parent=0 // pred_check_branch
    %109 = sbr.rel (0) target = $region17
  $region16: #{rwkv7_block_forward.19} parent=0 // pred_region
    _
  $region17: #{rwkv7_block_forward.19} parent=0 // pred_fallthru
    _
  // Predicated region
  $region18: #{rwkv7_block_forward.19} parent=0 // pred_check
    _
  $region19: #{rwkv7_block_forward.19} parent=0 // pred_check_branch
    %111 = sbr.rel (0) target = $region21
  $region20: #{rwkv7_block_forward.19} parent=0 // pred_region
    _
  $region21: #{rwkv7_block_forward.19} parent=0 // pred_fallthru
    _

// kernel: rwkv7_block_forward.20
$region0: #{rwkv7_block_forward.20}
  #allocation0 [shape = 'u32[]', space=smem, size = 0x4, offset = 0x4, fixed_abs, tag = 'smem constant byte address 0x4 - core index']
  #allocation1 [shape = 'u32[144,128]{1,0:T(1,128)}', space=vmem, size = 0x12000, scoped, tag = 'internal scratch']
  #allocation2 [shape = 'f32[16,128]{1,0:T(8,128)}', space=vmem, size = 0x2000, scoped, tag = 'scratch operand']
  %s0 = inlined_call_operand.vmem [shape: bf16[16,128], index: 0, kind: input, shape index: {}]
  %s1 = inlined_call_operand.vmem [shape: bf16[128,128], index: 1, kind: input, shape index: {}]
  %s2 = inlined_call_operand.vmem [shape: f32[16,128], index: 2, kind: output, shape index: {}]
  %s3 = sld [smem:[#allocation0]]
  $region26: #{rwkv7_block_forward.20} parent=0
    _
  %s5 = ssub.s32 1, %s3
  %s6 = scalar_select 0, %s5, %s3
  // Predicated region
  $region2: #{rwkv7_block_forward.20} parent=0 // pred_check
    _
  $region3: #{rwkv7_block_forward.20} parent=0 // pred_check_branch
    %8 = sbr.rel (0) target = $region5
  $region4: #{rwkv7_block_forward.20} parent=0 // pred_region
    _
  $region5: #{rwkv7_block_forward.20} parent=0 // pred_fallthru
    _
  // Predicated region
  $region6: #{rwkv7_block_forward.20} parent=0 // pred_check
    _
  $region7: #{rwkv7_block_forward.20} parent=0 // pred_check_branch
    %10 = sbr.rel (0) target = $region9
  $region8: #{rwkv7_block_forward.20} parent=0 // pred_region
    _
  $region9: #{rwkv7_block_forward.20} parent=0 // pred_fallthru
    _
  %p12 = scmp.eq.s32.totalorder 0, 0
  // Predicated region
  $region10: #{rwkv7_block_forward.20} parent=0 // pred_check
    %p13 = pneg %p12
  $region11: #{rwkv7_block_forward.20} parent=0 // pred_check_branch
    %15 = sbr.rel (%p13) target = $region13
  $region12: #{rwkv7_block_forward.20} parent=0 // pred_region
    %16 = vst [vmem:[#allocation2] sm:$0xff] 0.0
    %17 = vst [vmem:[#allocation2 + $0x8] sm:$0xff] 0.0
  $region13: #{rwkv7_block_forward.20} parent=0 // pred_fallthru
    _
  %v18 = vld [vmem:[#allocation2] sm:$0xff]
  %v19 = vld [vmem:[#allocation2 + $0x8] sm:$0xff]
  %v20 = vld [vmem:[%s0] sm:$0xf]
  %v21 = vld [vmem:[%s0 + $0x4] sm:$0xf]
  %v22 = vld [vmem:[%s1] sm:$0xf]
  %v23 = vld [vmem:[%s1 + $0x4] sm:$0xf]
  %v24 = vld [vmem:[%s1 + $0x8] sm:$0xf]
  %v25 = vld [vmem:[%s1 + $0xc] sm:$0xf]
  %v26 = vld [vmem:[%s1 + $0x10] sm:$0xf]
  %v27 = vld [vmem:[%s1 + $0x14] sm:$0xf]
  %v28 = vld [vmem:[%s1 + $0x18] sm:$0xf]
  %v29 = vld [vmem:[%s1 + $0x1c] sm:$0xf]
  %v30 = vld [vmem:[%s1 + $0x20] sm:$0xf]
  %v31 = vld [vmem:[%s1 + $0x24] sm:$0xf]
  %v32 = vld [vmem:[%s1 + $0x28] sm:$0xf]
  %v33 = vld [vmem:[%s1 + $0x2c] sm:$0xf]
  %v34 = vld [vmem:[%s1 + $0x30] sm:$0xf]
  %v35 = vld [vmem:[%s1 + $0x34] sm:$0xf]
  %v36 = vld [vmem:[%s1 + $0x38] sm:$0xf]
  %v37 = vld [vmem:[%s1 + $0x3c] sm:$0xf]
  %v40 = vunpack.c.l.b16 %v20
  %v41 = vunpack.c.l.b16 %v21
  %v42 = vpack.c.b16 %v41, %v40
  %v60 = vunpack.c.l.b16 %v22
  %v61 = vunpack.c.l.b16 %v23
  %v62 = vunpack.c.l.b16 %v24
  %v63 = vunpack.c.l.b16 %v25
  %v64 = vunpack.c.l.b16 %v26
  %v65 = vunpack.c.l.b16 %v27
  %v66 = vunpack.c.l.b16 %v28
  %v67 = vunpack.c.l.b16 %v29
  %v68 = vunpack.c.l.b16 %v30
  %v69 = vunpack.c.l.b16 %v31
  %v70 = vunpack.c.l.b16 %v32
  %v71 = vunpack.c.l.b16 %v33
  %v72 = vunpack.c.l.b16 %v34
  %v73 = vunpack.c.l.b16 %v35
  %v74 = vunpack.c.l.b16 %v36
  %v75 = vunpack.c.l.b16 %v37
  %v76 = vpack.c.b16 %v61, %v60
  %v77 = vpack.c.b16 %v63, %v62
  %v78 = vpack.c.b16 %v65, %v64
  %v79 = vpack.c.b16 %v67, %v66
  %v80 = vpack.c.b16 %v69, %v68
  %v81 = vpack.c.b16 %v71, %v70
  %v82 = vpack.c.b16 %v73, %v72
  %v83 = vpack.c.b16 %v75, %v74
  %92 = vmatprep.subr.bf16.mxu0 0
  %93 = vmatpush1.bf16.msra.mxu0 %v76
  %94 = vmatprep.subr.bf16.mxu0 0
  %95 = vmatpush1.bf16.msra.mxu0 %v77
  %96 = vmatprep.subr.bf16.mxu0 0
  %97 = vmatpush1.bf16.msra.mxu0 %v78
  %98 = vmatprep.subr.bf16.mxu0 0
  %99 = vmatpush1.bf16.msra.mxu0 %v79
  %100 = vmatprep.subr.bf16.mxu0 0
  %101 = vmatpush1.bf16.msra.mxu0 %v80
  %102 = vmatprep.subr.bf16.mxu0 0
  %103 = vmatpush1.bf16.msra.mxu0 %v81
  %104 = vmatprep.subr.bf16.mxu0 0
  %105 = vmatpush1.bf16.msra.mxu0 %v82
  %106 = vmatprep.subr.bf16.mxu0 0
  %107 = vmatpush1.bf16.msra.mxu0 %v83
  %108 = vmatprep.subr.bf16.mxu0 0
  %109 = vmatpush1.bf16.msra.mxu0 0
  %110 = vmatprep.subr.bf16.mxu0 0
  %111 = vmatpush1.bf16.msra.mxu0 0
  %112 = vmatprep.subr.bf16.mxu0 0
  %113 = vmatpush1.bf16.msra.mxu0 0
  %114 = vmatprep.subr.bf16.mxu0 0
  %115 = vmatpush1.bf16.msra.mxu0 0
  %116 = vmatprep.subr.bf16.mxu0 0
  %117 = vmatpush1.bf16.msra.mxu0 0
  %118 = vmatprep.subr.bf16.mxu0 0
  %119 = vmatpush1.bf16.msra.mxu0 0
  %120 = vmatprep.subr.bf16.mxu0 0
  %121 = vmatpush1.bf16.msra.mxu0 0
  %122 = vmatprep.subr.bf16.mxu0 0
  %123 = vmatpush1.bf16.msra.mxu0 0
  %124 = vmatprep.mubr.bf16.mxu0 0
  %125 = vmatmul.mubr.bf16.gmra.mrb[0].mxu0 %v42
  %v126 = vpop.f32.mrb[0].mxu0
  %v127 = vadd.f32 0.0, %v126
  %v128 = vpop.f32.mrb[0].mxu0
  %v129 = vpop.f32.mrb[0].mxu0
  %v130 = vadd.f32 0.0, %v129
  %v131 = vpop.f32.mrb[0].mxu0
  %132 = vdwg.mxu0
  %v133 = vadd.f32 %v18, %v127
  %v134 = vadd.f32 %v19, %v130
  %135 = vst [vmem:[#allocation2] sm:$0xff] %v133
  %136 = vst [vmem:[#allocation2 + $0x8] sm:$0xff] %v134
  // Predicated region
  $region14: #{rwkv7_block_forward.20} parent=0 // pred_check
    %p137 = pneg %p12
  $region15: #{rwkv7_block_forward.20} parent=0 // pred_check_branch
    %139 = sbr.rel (%p137) target = $region17
  $region16: #{rwkv7_block_forward.20} parent=0 // pred_region
    %v140 = vld [vmem:[#allocation2] sm:$0xff]
    %v141 = vld [vmem:[#allocation2 + $0x8] sm:$0xff]
    %142 = vst [vmem:[%s2] sm:$0xff] %v140
    %143 = vst [vmem:[%s2 + $0x8] sm:$0xff] %v141
  $region17: #{rwkv7_block_forward.20} parent=0 // pred_fallthru
    _
  // Predicated region
  $region18: #{rwkv7_block_forward.20} parent=0 // pred_check
    _
  $region19: #{rwkv7_block_forward.20} parent=0 // pred_check_branch
    %145 = sbr.rel (0) target = $region21
  $region20: #{rwkv7_block_forward.20} parent=0 // pred_region
    _
  $region21: #{rwkv7_block_forward.20} parent=0 // pred_fallthru
    _
  // Predicated region
  $region22: #{rwkv7_block_forward.20} parent=0 // pred_check
    _
  $region23: #{rwkv7_block_forward.20} parent=0 // pred_check_branch
    %147 = sbr.rel (0) target = $region25
  $region24: #{rwkv7_block_forward.20} parent=0 // pred_region
    _
  $region25: #{rwkv7_block_forward.20} parent=0 // pred_fallthru
    _

// kernel: rwkv7_block_forward.22
$region0: #{rwkv7_block_forward.22}
  #allocation0 [shape = 'u32[]', space=smem, size = 0x4, offset = 0x4, fixed_abs, tag = 'smem constant byte address 0x4 - core index']
  #allocation1 [shape = 'u32[144,128]{1,0:T(1,128)}', space=vmem, size = 0x12000, scoped, tag = 'internal scratch']
  #allocation2 [shape = 'f32[16,512]{1,0:T(8,128)}', space=vmem, size = 0x8000, scoped, tag = 'scratch operand']
  %s0 = inlined_call_operand.vmem [shape: bf16[16,128], index: 0, kind: input, shape index: {}]
  %s1 = inlined_call_operand.vmem [shape: bf16[128,512], index: 1, kind: input, shape index: {}]
  %s2 = inlined_call_operand.vmem [shape: f32[16,512], index: 2, kind: output, shape index: {}]
  %s3 = sld [smem:[#allocation0]]
  $region26: #{rwkv7_block_forward.22} parent=0
    _
  %s5 = ssub.s32 1, %s3
  %s6 = scalar_select 0, %s5, %s3
  // Predicated region
  $region2: #{rwkv7_block_forward.22} parent=0 // pred_check
    _
  $region3: #{rwkv7_block_forward.22} parent=0 // pred_check_branch
    %8 = sbr.rel (0) target = $region5
  $region4: #{rwkv7_block_forward.22} parent=0 // pred_region
    _
  $region5: #{rwkv7_block_forward.22} parent=0 // pred_fallthru
    _
  // Predicated region
  $region6: #{rwkv7_block_forward.22} parent=0 // pred_check
    _
  $region7: #{rwkv7_block_forward.22} parent=0 // pred_check_branch
    %10 = sbr.rel (0) target = $region9
  $region8: #{rwkv7_block_forward.22} parent=0 // pred_region
    _
  $region9: #{rwkv7_block_forward.22} parent=0 // pred_fallthru
    _
  %p12 = scmp.eq.s32.totalorder 0, 0
  // Predicated region
  $region10: #{rwkv7_block_forward.22} parent=0 // pred_check
    %p13 = pneg %p12
  $region11: #{rwkv7_block_forward.22} parent=0 // pred_check_branch
    %15 = sbr.rel (%p13) target = $region13
  $region12: #{rwkv7_block_forward.22} parent=0 // pred_region
    %16 = vst [vmem:[#allocation2] sm:$0xff] 0.0
    %17 = vst [vmem:[#allocation2 + $0x8] sm:$0xff] 0.0
    %18 = vst [vmem:[#allocation2 + $0x10] sm:$0xff] 0.0
    %19 = vst [vmem:[#allocation2 + $0x18] sm:$0xff] 0.0
    %20 = vst [vmem:[#allocation2 + $0x20] sm:$0xff] 0.0
    %21 = vst [vmem:[#allocation2 + $0x28] sm:$0xff] 0.0
    %22 = vst [vmem:[#allocation2 + $0x30] sm:$0xff] 0.0
    %23 = vst [vmem:[#allocation2 + $0x38] sm:$0xff] 0.0
  $region13: #{rwkv7_block_forward.22} parent=0 // pred_fallthru
    _
  %v24 = vld [vmem:[#allocation2] sm:$0xff]
  %v25 = vld [vmem:[#allocation2 + $0x8] sm:$0xff]
  %v26 = vld [vmem:[#allocation2 + $0x10] sm:$0xff]
  %v27 = vld [vmem:[#allocation2 + $0x18] sm:$0xff]
  %v28 = vld [vmem:[#allocation2 + $0x20] sm:$0xff]
  %v29 = vld [vmem:[#allocation2 + $0x28] sm:$0xff]
  %v30 = vld [vmem:[#allocation2 + $0x30] sm:$0xff]
  %v31 = vld [vmem:[#allocation2 + $0x38] sm:$0xff]
  %v32 = vld [vmem:[%s0] sm:$0xf]
  %v33 = vld [vmem:[%s0 + $0x4] sm:$0xf]
  %v34 = vld [vmem:[%s1] sm:$0xff]
  %v35 = vld [vmem:[%s1 + $0x8] sm:$0xff]
  %v36 = vld [vmem:[%s1 + $0x10] sm:$0xff]
  %v37 = vld [vmem:[%s1 + $0x18] sm:$0xff]
  %v38 = vld [vmem:[%s1 + $0x20] sm:$0xff]
  %v39 = vld [vmem:[%s1 + $0x28] sm:$0xff]
  %v40 = vld [vmem:[%s1 + $0x30] sm:$0xff]
  %v41 = vld [vmem:[%s1 + $0x38] sm:$0xff]
  %v42 = vld [vmem:[%s1 + $0x40] sm:$0xff]
  %v43 = vld [vmem:[%s1 + $0x48] sm:$0xff]
  %v44 = vld [vmem:[%s1 + $0x50] sm:$0xff]
  %v45 = vld [vmem:[%s1 + $0x58] sm:$0xff]
  %v46 = vld [vmem:[%s1 + $0x60] sm:$0xff]
  %v47 = vld [vmem:[%s1 + $0x68] sm:$0xff]
  %v48 = vld [vmem:[%s1 + $0x70] sm:$0xff]
  %v49 = vld [vmem:[%s1 + $0x78] sm:$0xff]
  %v50 = vld [vmem:[%s1 + $0x80] sm:$0xff]
  %v51 = vld [vmem:[%s1 + $0x88] sm:$0xff]
  %v52 = vld [vmem:[%s1 + $0x90] sm:$0xff]
  %v53 = vld [vmem:[%s1 + $0x98] sm:$0xff]
  %v54 = vld [vmem:[%s1 + $0xa0] sm:$0xff]
  %v55 = vld [vmem:[%s1 + $0xa8] sm:$0xff]
  %v56 = vld [vmem:[%s1 + $0xb0] sm:$0xff]
  %v57 = vld [vmem:[%s1 + $0xb8] sm:$0xff]
  %v58 = vld [vmem:[%s1 + $0xc0] sm:$0xff]
  %v59 = vld [vmem:[%s1 + $0xc8] sm:$0xff]
  %v60 = vld [vmem:[%s1 + $0xd0] sm:$0xff]
  %v61 = vld [vmem:[%s1 + $0xd8] sm:$0xff]
  %v62 = vld [vmem:[%s1 + $0xe0] sm:$0xff]
  %v63 = vld [vmem:[%s1 + $0xe8] sm:$0xff]
  %v64 = vld [vmem:[%s1 + $0xf0] sm:$0xff]
  %v65 = vld [vmem:[%s1 + $0xf8] sm:$0xff]
  %v68 = vunpack.c.l.b16 %v32
  %v69 = vunpack.c.l.b16 %v33
  %v70 = vpack.c.b16 %v69, %v68
  %v104 = vunpack.c.l.b16 %v34
  %v105 = vunpack.c.h.b16 %v34
  %v106 = vunpack.c.l.b16 %v35
  %v107 = vunpack.c.h.b16 %v35
  %v108 = vunpack.c.l.b16 %v36
  %v109 = vunpack.c.h.b16 %v36
  %v110 = vunpack.c.l.b16 %v37
  %v111 = vunpack.c.h.b16 %v37
  %v112 = vunpack.c.l.b16 %v38
  %v113 = vunpack.c.h.b16 %v38
  %v114 = vunpack.c.l.b16 %v39
  %v115 = vunpack.c.h.b16 %v39
  %v116 = vunpack.c.l.b16 %v40
  %v117 = vunpack.c.h.b16 %v40
  %v118 = vunpack.c.l.b16 %v41
  %v119 = vunpack.c.h.b16 %v41
  %v120 = vunpack.c.l.b16 %v42
  %v121 = vunpack.c.h.b16 %v42
  %v122 = vunpack.c.l.b16 %v43
  %v123 = vunpack.c.h.b16 %v43
  %v124 = vunpack.c.l.b16 %v44
  %v125 = vunpack.c.h.b16 %v44
  %v126 = vunpack.c.l.b16 %v45
  %v127 = vunpack.c.h.b16 %v45
  %v128 = vunpack.c.l.b16 %v46
  %v129 = vunpack.c.h.b16 %v46
  %v130 = vunpack.c.l.b16 %v47
  %v131 = vunpack.c.h.b16 %v47
  %v132 = vunpack.c.l.b16 %v48
  %v133 = vunpack.c.h.b16 %v48
  %v134 = vunpack.c.l.b16 %v49
  %v135 = vunpack.c.h.b16 %v49
  %v136 = vunpack.c.l.b16 %v50
  %v137 = vunpack.c.h.b16 %v50
  %v138 = vunpack.c.l.b16 %v51
  %v139 = vunpack.c.h.b16 %v51
  %v140 = vunpack.c.l.b16 %v52
  %v141 = vunpack.c.h.b16 %v52
  %v142 = vunpack.c.l.b16 %v53
  %v143 = vunpack.c.h.b16 %v53
  %v144 = vunpack.c.l.b16 %v54
  %v145 = vunpack.c.h.b16 %v54
  %v146 = vunpack.c.l.b16 %v55
  %v147 = vunpack.c.h.b16 %v55
  %v148 = vunpack.c.l.b16 %v56
  %v149 = vunpack.c.h.b16 %v56
  %v150 = vunpack.c.l.b16 %v57
  %v151 = vunpack.c.h.b16 %v57
  %v152 = vunpack.c.l.b16 %v58
  %v153 = vunpack.c.h.b16 %v58
  %v154 = vunpack.c.l.b16 %v59
  %v155 = vunpack.c.h.b16 %v59
  %v156 = vunpack.c.l.b16 %v60
  %v157 = vunpack.c.h.b16 %v60
  %v158 = vunpack.c.l.b16 %v61
  %v159 = vunpack.c.h.b16 %v61
  %v160 = vunpack.c.l.b16 %v62
  %v161 = vunpack.c.h.b16 %v62
  %v162 = vunpack.c.l.b16 %v63
  %v163 = vunpack.c.h.b16 %v63
  %v164 = vunpack.c.l.b16 %v64
  %v165 = vunpack.c.h.b16 %v64
  %v166 = vunpack.c.l.b16 %v65
  %v167 = vunpack.c.h.b16 %v65
  %v168 = vpack.c.b16 %v108, %v104
  %v169 = vpack.c.b16 %v109, %v105
  %v170 = vpack.c.b16 %v110, %v106
  %v171 = vpack.c.b16 %v111, %v107
  %v172 = vpack.c.b16 %v116, %v112
  %v173 = vpack.c.b16 %v117, %v113
  %v174 = vpack.c.b16 %v118, %v114
  %v175 = vpack.c.b16 %v119, %v115
  %v176 = vpack.c.b16 %v124, %v120
  %v177 = vpack.c.b16 %v125, %v121
  %v178 = vpack.c.b16 %v126, %v122
  %v179 = vpack.c.b16 %v127, %v123
  %v180 = vpack.c.b16 %v132, %v128
  %v181 = vpack.c.b16 %v133, %v129
  %v182 = vpack.c.b16 %v134, %v130
  %v183 = vpack.c.b16 %v135, %v131
  %v184 = vpack.c.b16 %v140, %v136
  %v185 = vpack.c.b16 %v141, %v137
  %v186 = vpack.c.b16 %v142, %v138
  %v187 = vpack.c.b16 %v143, %v139
  %v188 = vpack.c.b16 %v148, %v144
  %v189 = vpack.c.b16 %v149, %v145
  %v190 = vpack.c.b16 %v150, %v146
  %v191 = vpack.c.b16 %v151, %v147
  %v192 = vpack.c.b16 %v156, %v152
  %v193 = vpack.c.b16 %v157, %v153
  %v194 = vpack.c.b16 %v158, %v154
  %v195 = vpack.c.b16 %v159, %v155
  %v196 = vpack.c.b16 %v164, %v160
  %v197 = vpack.c.b16 %v165, %v161
  %v198 = vpack.c.b16 %v166, %v162
  %v199 = vpack.c.b16 %v167, %v163
  %232 = vmatprep.subr.bf16.mxu0 %v169
  %233 = vmatpush1.bf16.msra.mxu0 %v168
  %234 = vmatprep.subr.bf16.mxu0 %v173
  %235 = vmatpush1.bf16.msra.mxu0 %v172
  %236 = vmatprep.subr.bf16.mxu0 %v177
  %237 = vmatpush1.bf16.msra.mxu0 %v176
  %238 = vmatprep.subr.bf16.mxu0 %v181
  %239 = vmatpush1.bf16.msra.mxu0 %v180
  %240 = vmatprep.subr.bf16.mxu0 %v185
  %241 = vmatpush1.bf16.msra.mxu0 %v184
  %242 = vmatprep.subr.bf16.mxu0 %v189
  %243 = vmatpush1.bf16.msra.mxu0 %v188
  %244 = vmatprep.subr.bf16.mxu0 %v193
  %245 = vmatpush1.bf16.msra.mxu0 %v192
  %246 = vmatprep.subr.bf16.mxu0 %v197
  %247 = vmatpush1.bf16.msra.mxu0 %v196
  %248 = vmatprep.subr.bf16.mxu0 0
  %249 = vmatpush1.bf16.msra.mxu0 0
  %250 = vmatprep.subr.bf16.mxu0 0
  %251 = vmatpush1.bf16.msra.mxu0 0
  %252 = vmatprep.subr.bf16.mxu0 0
  %253 = vmatpush1.bf16.msra.mxu0 0
  %254 = vmatprep.subr.bf16.mxu0 0
  %255 = vmatpush1.bf16.msra.mxu0 0
  %256 = vmatprep.subr.bf16.mxu0 0
  %257 = vmatpush1.bf16.msra.mxu0 0
  %258 = vmatprep.subr.bf16.mxu0 0
  %259 = vmatpush1.bf16.msra.mxu0 0
  %260 = vmatprep.subr.bf16.mxu0 0
  %261 = vmatpush1.bf16.msra.mxu0 0
  %262 = vmatprep.subr.bf16.mxu0 0
  %263 = vmatpush1.bf16.msra.mxu0 0
  %264 = vmatprep.mubr.bf16.mxu0 0
  %265 = vmatmul.mubr.bf16.gmra.mrb[0].mxu0 %v70
  %v266 = vpop.f32.mrb[0].mxu0
  %v267 = vadd.f32 0.0, %v266
  %v268 = vpop.f32.mrb[0].mxu0
  %v269 = vadd.f32 0.0, %v268
  %v270 = vpop.f32.mrb[0].mxu0
  %v271 = vadd.f32 0.0, %v270
  %v272 = vpop.f32.mrb[0].mxu0
  %v273 = vadd.f32 0.0, %v272
  %274 = vdwg.mxu0
  %275 = vmatprep.subr.bf16.mxu0 %v171
  %276 = vmatpush1.bf16.msra.mxu0 %v170
  %277 = vmatprep.subr.bf16.mxu0 %v175
  %278 = vmatpush1.bf16.msra.mxu0 %v174
  %279 = vmatprep.subr.bf16.mxu0 %v179
  %280 = vmatpush1.bf16.msra.mxu0 %v178
  %281 = vmatprep.subr.bf16.mxu0 %v183
  %282 = vmatpush1.bf16.msra.mxu0 %v182
  %283 = vmatprep.subr.bf16.mxu0 %v187
  %284 = vmatpush1.bf16.msra.mxu0 %v186
  %285 = vmatprep.subr.bf16.mxu0 %v191
  %286 = vmatpush1.bf16.msra.mxu0 %v190
  %287 = vmatprep.subr.bf16.mxu0 %v195
  %288 = vmatpush1.bf16.msra.mxu0 %v194
  %289 = vmatprep.subr.bf16.mxu0 %v199
  %290 = vmatpush1.bf16.msra.mxu0 %v198
  %291 = vmatprep.subr.bf16.mxu0 0
  %292 = vmatpush1.bf16.msra.mxu0 0
  %293 = vmatprep.subr.bf16.mxu0 0
  %294 = vmatpush1.bf16.msra.mxu0 0
  %295 = vmatprep.subr.bf16.mxu0 0
  %296 = vmatpush1.bf16.msra.mxu0 0
  %297 = vmatprep.subr.bf16.mxu0 0
  %298 = vmatpush1.bf16.msra.mxu0 0
  %299 = vmatprep.subr.bf16.mxu0 0
  %300 = vmatpush1.bf16.msra.mxu0 0
  %301 = vmatprep.subr.bf16.mxu0 0
  %302 = vmatpush1.bf16.msra.mxu0 0
  %303 = vmatprep.subr.bf16.mxu0 0
  %304 = vmatpush1.bf16.msra.mxu0 0
  %305 = vmatprep.subr.bf16.mxu0 0
  %306 = vmatpush1.bf16.msra.mxu0 0
  %307 = vmatprep.mubr.bf16.mxu0 0
  %308 = vmatmul.mubr.bf16.gmra.mrb[0].mxu0 %v70
  %v309 = vpop.f32.mrb[0].mxu0
  %v310 = vadd.f32 0.0, %v309
  %v311 = vpop.f32.mrb[0].mxu0
  %v312 = vadd.f32 0.0, %v311
  %v313 = vpop.f32.mrb[0].mxu0
  %v314 = vadd.f32 0.0, %v313
  %v315 = vpop.f32.mrb[0].mxu0
  %v316 = vadd.f32 0.0, %v315
  %317 = vdwg.mxu0
  %v318 = vadd.f32 %v24, %v267
  %v319 = vadd.f32 %v25, %v269
  %v320 = vadd.f32 %v26, %v310
  %v321 = vadd.f32 %v27, %v312
  %v322 = vadd.f32 %v28, %v271
  %v323 = vadd.f32 %v29, %v273
  %v324 = vadd.f32 %v30, %v314
  %v325 = vadd.f32 %v31, %v316
  %326 = vst [vmem:[#allocation2] sm:$0xff] %v318
  %327 = vst [vmem:[#allocation2 + $0x8] sm:$0xff] %v319
  %328 = vst [vmem:[#allocation2 + $0x10] sm:$0xff] %v320
  %329 = vst [vmem:[#allocation2 + $0x18] sm:$0xff] %v321
  %330 = vst [vmem:[#allocation2 + $0x20] sm:$0xff] %v322
  %331 = vst [vmem:[#allocation2 + $0x28] sm:$0xff] %v323
  %332 = vst [vmem:[#allocation2 + $0x30] sm:$0xff] %v324
  %333 = vst [vmem:[#allocation2 + $0x38] sm:$0xff] %v325
  // Predicated region
  $region14: #{rwkv7_block_forward.22} parent=0 // pred_check
    %p334 = pneg %p12
  $region15: #{rwkv7_block_forward.22} parent=0 // pred_check_branch
    %336 = sbr.rel (%p334) target = $region17
  $region16: #{rwkv7_block_forward.22} parent=0 // pred_region
    %v337 = vld [vmem:[#allocation2] sm:$0xff]
    %v338 = vld [vmem:[#allocation2 + $0x8] sm:$0xff]
    %v339 = vld [vmem:[#allocation2 + $0x10] sm:$0xff]
    %v340 = vld [vmem:[#allocation2 + $0x18] sm:$0xff]
    %v341 = vld [vmem:[#allocation2 + $0x20] sm:$0xff]
    %v342 = vld [vmem:[#allocation2 + $0x28] sm:$0xff]
    %v343 = vld [vmem:[#allocation2 + $0x30] sm:$0xff]
    %v344 = vld [vmem:[#allocation2 + $0x38] sm:$0xff]
    %345 = vst [vmem:[%s2] sm:$0xff] %v337
    %346 = vst [vmem:[%s2 + $0x8] sm:$0xff] %v338
    %347 = vst [vmem:[%s2 + $0x10] sm:$0xff] %v339
    %348 = vst [vmem:[%s2 + $0x18] sm:$0xff] %v340
    %349 = vst [vmem:[%s2 + $0x20] sm:$0xff] %v341
    %350 = vst [vmem:[%s2 + $0x28] sm:$0xff] %v342
    %351 = vst [vmem:[%s2 + $0x30] sm:$0xff] %v343
    %352 = vst [vmem:[%s2 + $0x38] sm:$0xff] %v344
  $region17: #{rwkv7_block_forward.22} parent=0 // pred_fallthru
    _
  // Predicated region
  $region18: #{rwkv7_block_forward.22} parent=0 // pred_check
    _
  $region19: #{rwkv7_block_forward.22} parent=0 // pred_check_branch
    %354 = sbr.rel (0) target = $region21
  $region20: #{rwkv7_block_forward.22} parent=0 // pred_region
    _
  $region21: #{rwkv7_block_forward.22} parent=0 // pred_fallthru
    _
  // Predicated region
  $region22: #{rwkv7_block_forward.22} parent=0 // pred_check
    _
  $region23: #{rwkv7_block_forward.22} parent=0 // pred_check_branch
    %356 = sbr.rel (0) target = $region25
  $region24: #{rwkv7_block_forward.22} parent=0 // pred_region
    _
  $region25: #{rwkv7_block_forward.22} parent=0 // pred_fallthru
    _

// kernel: rwkv7_block_forward.18
$region0: #{rwkv7_block_forward.18}
  #allocation0 [shape = 'u32[]', space=smem, size = 0x4, offset = 0x4, fixed_abs, tag = 'smem constant byte address 0x4 - core index']
  #allocation1 [shape = 'u32[144,128]{1,0:T(1,128)}', space=vmem, size = 0x12000, scoped, tag = 'internal scratch']
  %s0 = inlined_call_operand.vmem [shape: f32[4,8,64], index: 0, kind: input, shape index: {}]
  %s1 = inlined_call_operand.vmem [shape: f32[4,8,64], index: 1, kind: input, shape index: {}]
  %s2 = inlined_call_operand.vmem [shape: f32[4,8,64], index: 2, kind: input, shape index: {}]
  %s3 = inlined_call_operand.vmem [shape: f32[4,8,64], index: 3, kind: input, shape index: {}]
  %s4 = inlined_call_operand.vmem [shape: f32[4,8,64], index: 4, kind: input, shape index: {}]
  %s5 = inlined_call_operand.vmem [shape: f32[4,8,64], index: 5, kind: input, shape index: {}]
  %s6 = inlined_call_operand.vmem [shape: f32[4,64,64], index: 6, kind: input, shape index: {}]
  %s7 = inlined_call_operand.vmem [shape: f32[4,8,64], index: 7, kind: output, shape index: {0}]
  %s8 = inlined_call_operand.hbm [shape: f32[4,64,64], index: 8, kind: output, shape index: {1}]
  %9 = xla_tuple %s7, %s8
  %s10 = sld [smem:[#allocation0]]
  $region69: #{rwkv7_block_forward.18} parent=0
    _
  %s12 = ssub.s32 1, %s10
  %s13 = scalar_select 0, %s12, %s10
  $region1: #{rwkv7_block_forward.18} parent=0
    #allocation2 [shape = 'u8[65536]{0}', space=vmem, size = 0x10000, scoped, tag = 'output window, operand 1']
    #allocation3 [shape = 's32[2]{0}', space=sflag, size = 0x8, scoped, tag = 'scoped memory for rwkv7_block_forward.18']
    %14 = vsyncpa [#allocation3], 0
    %s15 = scalar_lea.sflag [#allocation3], 1
    %16 = vsyncpa %s15, 0
    loop: start=0, step=1, limit=6
    $region2: #{rwkv7_block_forward.18} parent=1 // loop_pre_header
      _
    $region3: #{rwkv7_block_forward.18} parent=1 // loop_header
      %s18 = sphi 0, %s22
      %p19 = scmp.ge.s32.totalorder %s18, 6
      %s28 = sphi 0, %s30
      %s31 = sphi 0, %s28
      %s32 = sphi 0, %s31
      %s48 = sphi 0, %s32
      %s54 = sphi 0, %s56
      %s57 = sphi 0, %s54
      %s58 = sphi 0, %s57
      %s74 = sphi 0, %s58
      %s80 = sphi 0, %s82
      %s83 = sphi 0, %s80
      %s84 = sphi 0, %s83
      %s100 = sphi 0, %s84
      %s106 = sphi 0, %s108
      %s109 = sphi 0, %s106
      %s110 = sphi 0, %s109
      %s126 = sphi 0, %s110
      %s132 = sphi 0, %s134
      %s135 = sphi 0, %s132
      %s136 = sphi 0, %s135
      %s152 = sphi 0, %s136
      %s158 = sphi 0, %s160
      %s161 = sphi 0, %s158
      %s162 = sphi 0, %s161
      %s178 = sphi 0, %s162
      %s184 = sphi 0, %s186
      %s187 = sphi 0, %s184
      %s188 = sphi 0, %s187
      %s204 = sphi 0, %s188
      %s210 = sphi 0, %s212
      %s213 = sphi 0, %s210
      %s214 = sphi 0, %s213
      %s230 = sphi 0, %s214
      %s236 = sphi 0, %s238
      %s239 = sphi 0, %s236
      %s240 = sphi 0, %s239
      %s256 = sphi 0, %s240
    $region4: #{rwkv7_block_forward.18} parent=1 // loop_header_branch
      %21 = sbr.rel (%p19) target = $region8
    $region5: #{rwkv7_block_forward.18} parent=1 // loop_body
      %s23 = ssub.s32 %s18, 1
      %s24 = ssub.s32 %s18, 2
      %s25 = sadd.s32 %s18, 1
      %s26 = ssub.s32 %s18, %s25
      %p27 = scmp.eq.s32.totalorder %s26, 0
      %s29 = sadd.s32 %s28, 1
      %s30 = scalar_select %p27, %s28, %s29
      %p33 = pneg %p27
      %p34 = scmp.eq.s32.totalorder %s18, 3
      %p35 = por %p33, %p34
      %p36 = scmp.ne.s32.totalorder %s28, %s31
      %p37 = scmp.eq.s32.totalorder %s18, 0
      %p38 = por %p36, %p37
      %p39 = scmp.ne.s32.totalorder %s28, %s31
      %p40 = scmp.eq.s32.totalorder %s23, 3
      %p41 = por %p39, %p40
      %p42 = scmp.ne.s32.totalorder %s31, %s32
      %p43 = scmp.eq.s32.totalorder %s23, 0
      %p44 = por %p42, %p43
      %p45 = scmp.ne.s32.totalorder %s31, %s32
      %p46 = scmp.eq.s32.totalorder %s24, 3
      %p47 = por %p45, %p46
      %p49 = scmp.ne.s32.totalorder %s32, %s48
      %p50 = scmp.eq.s32.totalorder %s24, 0
      %p51 = por %p49, %p50
      %s52 = ssub.s32 %s18, %s25
      %p53 = scmp.eq.s32.totalorder %s52, 0
      %s55 = sadd.s32 %s54, 1
      %s56 = scalar_select %p53, %s54, %s55
      %p59 = pneg %p53
      %p60 = scmp.eq.s32.totalorder %s18, 3
      %p61 = por %p59, %p60
      %p62 = scmp.ne.s32.totalorder %s54, %s57
      %p63 = scmp.eq.s32.totalorder %s18, 0
      %p64 = por %p62, %p63
      %p65 = scmp.ne.s32.totalorder %s54, %s57
      %p66 = scmp.eq.s32.totalorder %s23, 3
      %p67 = por %p65, %p66
      %p68 = scmp.ne.s32.totalorder %s57, %s58
      %p69 = scmp.eq.s32.totalorder %s23, 0
      %p70 = por %p68, %p69
      %p71 = scmp.ne.s32.totalorder %s57, %s58
      %p72 = scmp.eq.s32.totalorder %s24, 3
      %p73 = por %p71, %p72
      %p75 = scmp.ne.s32.totalorder %s58, %s74
      %p76 = scmp.eq.s32.totalorder %s24, 0
      %p77 = por %p75, %p76
      %s78 = ssub.s32 %s18, %s25
      %p79 = scmp.eq.s32.totalorder %s78, 0
      %s81 = sadd.s32 %s80, 1
      %s82 = scalar_select %p79, %s80, %s81
      %p85 = pneg %p79
      %p86 = scmp.eq.s32.totalorder %s18, 3
      %p87 = por %p85, %p86
      %p88 = scmp.ne.s32.totalorder %s80, %s83
      %p89 = scmp.eq.s32.totalorder %s18, 0
      %p90 = por %p88, %p89
      %p91 = scmp.ne.s32.totalorder %s80, %s83
      %p92 = scmp.eq.s32.totalorder %s23, 3
      %p93 = por %p91, %p92
      %p94 = scmp.ne.s32.totalorder %s83, %s84
      %p95 = scmp.eq.s32.totalorder %s23, 0
      %p96 = por %p94, %p95
      %p97 = scmp.ne.s32.totalorder %s83, %s84
      %p98 = scmp.eq.s32.totalorder %s24, 3
      %p99 = por %p97, %p98
      %p101 = scmp.ne.s32.totalorder %s84, %s100
      %p102 = scmp.eq.s32.totalorder %s24, 0
      %p103 = por %p101, %p102
      %s104 = ssub.s32 %s18, %s25
      %p105 = scmp.eq.s32.totalorder %s104, 0
      %s107 = sadd.s32 %s106, 1
      %s108 = scalar_select %p105, %s106, %s107
      %p111 = pneg %p105
      %p112 = scmp.eq.s32.totalorder %s18, 3
      %p113 = por %p111, %p112
      %p114 = scmp.ne.s32.totalorder %s106, %s109
      %p115 = scmp.eq.s32.totalorder %s18, 0
      %p116 = por %p114, %p115
      %p117 = scmp.ne.s32.totalorder %s106, %s109
      %p118 = scmp.eq.s32.totalorder %s23, 3
      %p119 = por %p117, %p118
      %p120 = scmp.ne.s32.totalorder %s109, %s110
      %p121 = scmp.eq.s32.totalorder %s23, 0
      %p122 = por %p120, %p121
      %p123 = scmp.ne.s32.totalorder %s109, %s110
      %p124 = scmp.eq.s32.totalorder %s24, 3
      %p125 = por %p123, %p124
      %p127 = scmp.ne.s32.totalorder %s110, %s126
      %p128 = scmp.eq.s32.totalorder %s24, 0
      %p129 = por %p127, %p128
      %s130 = ssub.s32 %s18, %s25
      %p131 = scmp.eq.s32.totalorder %s130, 0
      %s133 = sadd.s32 %s132, 1
      %s134 = scalar_select %p131, %s132, %s133
      %p137 = pneg %p131
      %p138 = scmp.eq.s32.totalorder %s18, 3
      %p139 = por %p137, %p138
      %p140 = scmp.ne.s32.totalorder %s132, %s135
      %p141 = scmp.eq.s32.totalorder %s18, 0
      %p142 = por %p140, %p141
      %p143 = scmp.ne.s32.totalorder %s132, %s135
      %p144 = scmp.eq.s32.totalorder %s23, 3
      %p145 = por %p143, %p144
      %p146 = scmp.ne.s32.totalorder %s135, %s136
      %p147 = scmp.eq.s32.totalorder %s23, 0
      %p148 = por %p146, %p147
      %p149 = scmp.ne.s32.totalorder %s135, %s136
      %p150 = scmp.eq.s32.totalorder %s24, 3
      %p151 = por %p149, %p150
      %p153 = scmp.ne.s32.totalorder %s136, %s152
      %p154 = scmp.eq.s32.totalorder %s24, 0
      %p155 = por %p153, %p154
      %s156 = ssub.s32 %s18, %s25
      %p157 = scmp.eq.s32.totalorder %s156, 0
      %s159 = sadd.s32 %s158, 1
      %s160 = scalar_select %p157, %s158, %s159
      %p163 = pneg %p157
      %p164 = scmp.eq.s32.totalorder %s18, 3
      %p165 = por %p163, %p164
      %p166 = scmp.ne.s32.totalorder %s158, %s161
      %p167 = scmp.eq.s32.totalorder %s18, 0
      %p168 = por %p166, %p167
      %p169 = scmp.ne.s32.totalorder %s158, %s161
      %p170 = scmp.eq.s32.totalorder %s23, 3
      %p171 = por %p169, %p170
      %p172 = scmp.ne.s32.totalorder %s161, %s162
      %p173 = scmp.eq.s32.totalorder %s23, 0
      %p174 = por %p172, %p173
      %p175 = scmp.ne.s32.totalorder %s161, %s162
      %p176 = scmp.eq.s32.totalorder %s24, 3
      %p177 = por %p175, %p176
      %p179 = scmp.ne.s32.totalorder %s162, %s178
      %p180 = scmp.eq.s32.totalorder %s24, 0
      %p181 = por %p179, %p180
      %s182 = ssub.s32 %s18, %s25
      %p183 = scmp.eq.s32.totalorder %s182, 0
      %s185 = sadd.s32 %s184, 1
      %s186 = scalar_select %p183, %s184, %s185
      %p189 = pneg %p183
      %p190 = scmp.eq.s32.totalorder %s18, 3
      %p191 = por %p189, %p190
      %p192 = scmp.ne.s32.totalorder %s184, %s187
      %p193 = scmp.eq.s32.totalorder %s18, 0
      %p194 = por %p192, %p193
      %p195 = scmp.ne.s32.totalorder %s184, %s187
      %p196 = scmp.eq.s32.totalorder %s23, 3
      %p197 = por %p195, %p196
      %p198 = scmp.ne.s32.totalorder %s187, %s188
      %p199 = scmp.eq.s32.totalorder %s23, 0
      %p200 = por %p198, %p199
      %p201 = scmp.ne.s32.totalorder %s187, %s188
      %p202 = scmp.eq.s32.totalorder %s24, 3
      %p203 = por %p201, %p202
      %p205 = scmp.ne.s32.totalorder %s188, %s204
      %p206 = scmp.eq.s32.totalorder %s24, 0
      %p207 = por %p205, %p206
      %s208 = ssub.s32 %s18, %s25
      %p209 = scmp.eq.s32.totalorder %s208, 0
      %s211 = sadd.s32 %s210, 1
      %s212 = scalar_select %p209, %s210, %s211
      %p215 = pneg %p209
      %p216 = scmp.eq.s32.totalorder %s18, 3
      %p217 = por %p215, %p216
      %p218 = scmp.ne.s32.totalorder %s210, %s213
      %p219 = scmp.eq.s32.totalorder %s18, 0
      %p220 = por %p218, %p219
      %p221 = scmp.ne.s32.totalorder %s210, %s213
      %p222 = scmp.eq.s32.totalorder %s23, 3
      %p223 = por %p221, %p222
      %p224 = scmp.ne.s32.totalorder %s213, %s214
      %p225 = scmp.eq.s32.totalorder %s23, 0
      %p226 = por %p224, %p225
      %p227 = scmp.ne.s32.totalorder %s213, %s214
      %p228 = scmp.eq.s32.totalorder %s24, 3
      %p229 = por %p227, %p228
      %p231 = scmp.ne.s32.totalorder %s214, %s230
      %p232 = scmp.eq.s32.totalorder %s24, 0
      %p233 = por %p231, %p232
      %s234 = ssub.s32 %s18, %s25
      %p235 = scmp.eq.s32.totalorder %s234, 0
      %s237 = sadd.s32 %s236, 1
      %s238 = scalar_select %p235, %s236, %s237
      %p241 = pneg %p235
      %p242 = scmp.eq.s32.totalorder %s18, 3
      %p243 = por %p241, %p242
      %p244 = scmp.ne.s32.totalorder %s236, %s239
      %p245 = scmp.eq.s32.totalorder %s18, 0
      %p246 = por %p244, %p245
      %p247 = scmp.ne.s32.totalorder %s236, %s239
      %p248 = scmp.eq.s32.totalorder %s23, 3
      %p249 = por %p247, %p248
      %p250 = scmp.ne.s32.totalorder %s239, %s240
      %p251 = scmp.eq.s32.totalorder %s23, 0
      %p252 = por %p250, %p251
      %p253 = scmp.ne.s32.totalorder %s239, %s240
      %p254 = scmp.eq.s32.totalorder %s24, 3
      %p255 = por %p253, %p254
      %p257 = scmp.ne.s32.totalorder %s240, %s256
      %p258 = scmp.eq.s32.totalorder %s24, 0
      %p259 = por %p257, %p258
      %p260 = scmp.le.s32.totalorder 1, %s18
      %p261 = scmp.lt.s32.totalorder %s18, 5
      %p262 = pnand %p260, %p261
      %p263 = pneg %p262
      // Predicated region
      $region9: #{rwkv7_block_forward.18} parent=5 // pred_check
        _
      $region10: #{rwkv7_block_forward.18} parent=5 // pred_check_branch
        %265 = sbr.rel (%p262) target = $region12
      $region11: #{rwkv7_block_forward.18} parent=5 // pred_region
        %s266 = ssub.s32 %s18, 1
      $region12: #{rwkv7_block_forward.18} parent=5 // pred_fallthru
        _
      %p267 = scmp.lt.s32.totalorder %s18, 4
      // Predicated region
      $region13: #{rwkv7_block_forward.18} parent=5 // pred_check
        %p268 = pneg %p267
      $region14: #{rwkv7_block_forward.18} parent=5 // pred_check_branch
        %270 = sbr.rel (%p268) target = $region16
      $region15: #{rwkv7_block_forward.18} parent=5 // pred_region
        // Predicated region
        $region17: #{rwkv7_block_forward.18} parent=15 // pred_check
          %p271 = pneg %p38
        $region18: #{rwkv7_block_forward.18} parent=15 // pred_check_branch
          %273 = sbr.rel (%p271) target = $region20
        $region19: #{rwkv7_block_forward.18} parent=15 // pred_region
          %p274 = scmp.lt.s32.totalorder %s18, 3
          %s275 = scalar_select %p274, %s18, 3
          %s276 = smul.addr %s275, 8
          %s277 = scalar_lea.vmem %s0, %s276
        $region20: #{rwkv7_block_forward.18} parent=15 // pred_fallthru
          _
        // Predicated region
        $region21: #{rwkv7_block_forward.18} parent=15 // pred_check
          %p278 = pneg %p64
        $region22: #{rwkv7_block_forward.18} parent=15 // pred_check_branch
          %280 = sbr.rel (%p278) target = $region24
        $region23: #{rwkv7_block_forward.18} parent=15 // pred_region
          %p281 = scmp.lt.s32.totalorder %s18, 3
          %s282 = scalar_select %p281, %s18, 3
          %s283 = smul.addr %s282, 8
          %s284 = scalar_lea.vmem %s1, %s283
        $region24: #{rwkv7_block_forward.18} parent=15 // pred_fallthru
          _
        // Predicated region
        $region25: #{rwkv7_block_forward.18} parent=15 // pred_check
          %p285 = pneg %p90
        $region26: #{rwkv7_block_forward.18} parent=15 // pred_check_branch
          %287 = sbr.rel (%p285) target = $region28
        $region27: #{rwkv7_block_forward.18} parent=15 // pred_region
          %p288 = scmp.lt.s32.totalorder %s18, 3
          %s289 = scalar_select %p288, %s18, 3
          %s290 = smul.addr %s289, 8
          %s291 = scalar_lea.vmem %s2, %s290
        $region28: #{rwkv7_block_forward.18} parent=15 // pred_fallthru
          _
        // Predicated region
        $region29: #{rwkv7_block_forward.18} parent=15 // pred_check
          %p292 = pneg %p116
        $region30: #{rwkv7_block_forward.18} parent=15 // pred_check_branch
          %294 = sbr.rel (%p292) target = $region32
        $region31: #{rwkv7_block_forward.18} parent=15 // pred_region
          %p295 = scmp.lt.s32.totalorder %s18, 3
          %s296 = scalar_select %p295, %s18, 3
          %s297 = smul.addr %s296, 8
          %s298 = scalar_lea.vmem %s3, %s297
        $region32: #{rwkv7_block_forward.18} parent=15 // pred_fallthru
          _
        // Predicated region
        $region33: #{rwkv7_block_forward.18} parent=15 // pred_check
          %p299 = pneg %p142
        $region34: #{rwkv7_block_forward.18} parent=15 // pred_check_branch
          %301 = sbr.rel (%p299) target = $region36
        $region35: #{rwkv7_block_forward.18} parent=15 // pred_region
          %p302 = scmp.lt.s32.totalorder %s18, 3
          %s303 = scalar_select %p302, %s18, 3
          %s304 = smul.addr %s303, 8
          %s305 = scalar_lea.vmem %s4, %s304
        $region36: #{rwkv7_block_forward.18} parent=15 // pred_fallthru
          _
        // Predicated region
        $region37: #{rwkv7_block_forward.18} parent=15 // pred_check
          %p306 = pneg %p168
        $region38: #{rwkv7_block_forward.18} parent=15 // pred_check_branch
          %308 = sbr.rel (%p306) target = $region40
        $region39: #{rwkv7_block_forward.18} parent=15 // pred_region
          %p309 = scmp.lt.s32.totalorder %s18, 3
          %s310 = scalar_select %p309, %s18, 3
          %s311 = smul.addr %s310, 8
          %s312 = scalar_lea.vmem %s5, %s311
        $region40: #{rwkv7_block_forward.18} parent=15 // pred_fallthru
          _
        // Predicated region
        $region41: #{rwkv7_block_forward.18} parent=15 // pred_check
          %p313 = pneg %p194
        $region42: #{rwkv7_block_forward.18} parent=15 // pred_check_branch
          %315 = sbr.rel (%p313) target = $region44
        $region43: #{rwkv7_block_forward.18} parent=15 // pred_region
          %p316 = scmp.lt.s32.totalorder %s18, 3
          %s317 = scalar_select %p316, %s18, 3
          %s318 = smul.addr %s317, 8
          %s319 = smul.addr %s318, 8
          %s320 = scalar_lea.vmem %s6, %s319
        $region44: #{rwkv7_block_forward.18} parent=15 // pred_fallthru
          _
      $region16: #{rwkv7_block_forward.18} parent=5 // pred_fallthru
        _
      %p321 = scmp.le.s32.totalorder 1, %s18
      %p322 = scmp.lt.s32.totalorder %s18, 5
      %p323 = pnand %p321, %p322
      %p324 = pneg %p323
      // Predicated region
      $region45: #{rwkv7_block_forward.18} parent=5 // pred_check
        _
      $region46: #{rwkv7_block_forward.18} parent=5 // pred_check_branch
        %326 = sbr.rel (%p323) target = $region48
      $region47: #{rwkv7_block_forward.18} parent=5 // pred_region
        %s327 = ssub.s32 %s18, 1
        %p328 = scmp.lt.s32.totalorder %s23, 3
        %s329 = scalar_select %p328, %s23, 3
        %s330 = smul.addr %s329, 8
        %s331 = scalar_lea.vmem %s0, %s330
        %p332 = pneg %p44
        %p333 = pneg %p41
        %p334 = scmp.lt.s32.totalorder %s23, 3
        %s335 = scalar_select %p334, %s23, 3
        %s336 = smul.addr %s335, 8
        %s337 = scalar_lea.vmem %s1, %s336
        %p338 = pneg %p70
        %p339 = pneg %p67
        %p340 = scmp.lt.s32.totalorder %s23, 3
        %s341 = scalar_select %p340, %s23, 3
        %s342 = smul.addr %s341, 8
        %s343 = scalar_lea.vmem %s2, %s342
        %p344 = pneg %p96
        %p345 = pneg %p93
        %p346 = scmp.lt.s32.totalorder %s23, 3
        %s347 = scalar_select %p346, %s23, 3
        %s348 = smul.addr %s347, 8
        %s349 = scalar_lea.vmem %s3, %s348
        %p350 = pneg %p122
        %p351 = pneg %p119
        %p352 = scmp.lt.s32.totalorder %s23, 3
        %s353 = scalar_select %p352, %s23, 3
        %s354 = smul.addr %s353, 8
        %s355 = scalar_lea.vmem %s4, %s354
        %p356 = pneg %p148
        %p357 = pneg %p145
        %p358 = scmp.lt.s32.totalorder %s23, 3
        %s359 = scalar_select %p358, %s23, 3
        %s360 = smul.addr %s359, 8
        %s361 = scalar_lea.vmem %s5, %s360
        %p362 = pneg %p174
        %p363 = pneg %p171
        %p364 = scmp.lt.s32.totalorder %s23, 3
        %s365 = scalar_select %p364, %s23, 3
        %s366 = smul.addr %s365, 8
        %s367 = smul.addr %s366, 8
        %s368 = scalar_lea.vmem %s6, %s367
        %p369 = pneg %p200
        %p370 = pneg %p197
        %p371 = pneg %p226
        %p372 = pneg %p223
        %p373 = scmp.lt.s32.totalorder %s23, 3
        %s374 = scalar_select %p373, %s23, 3
        %s375 = smul.addr %s374, 8
        %s376 = scalar_lea.vmem %s7, %s375
        %p377 = pneg %p252
        %p378 = pneg %p249
        %s379 = sand.u32 %s239, 1
        %s380 = scalar_lea.sflag [#allocation3], %s379
        %s381 = sand.u32 %s239, 1
        %s382 = smul.addr %s381, 64
        %s383 = scalar_lea.vmem [#allocation2], %s382
        %p384 = scmp.lt.s32.totalorder %s23, 3
        %s385 = scalar_select %p384, %s23, 3
        %s386 = smul.addr %s385, 8
        %s387 = scalar_lea.vmem %s0, %s386
        %p388 = scmp.lt.s32.totalorder %s23, 3
        %s389 = scalar_select %p388, %s23, 3
        %s390 = smul.addr %s389, 8
        %s391 = scalar_lea.vmem %s1, %s390
        %p392 = scmp.lt.s32.totalorder %s23, 3
        %s393 = scalar_select %p392, %s23, 3
        %s394 = smul.addr %s393, 8
        %s395 = scalar_lea.vmem %s2, %s394
        %p396 = scmp.lt.s32.totalorder %s23, 3
        %s397 = scalar_select %p396, %s23, 3
        %s398 = smul.addr %s397, 8
        %s399 = scalar_lea.vmem %s3, %s398
        %p400 = scmp.lt.s32.totalorder %s23, 3
        %s401 = scalar_select %p400, %s23, 3
        %s402 = smul.addr %s401, 8
        %s403 = scalar_lea.vmem %s4, %s402
        %p404 = scmp.lt.s32.totalorder %s23, 3
        %s405 = scalar_select %p404, %s23, 3
        %s406 = smul.addr %s405, 8
        %s407 = scalar_lea.vmem %s5, %s406
        %p408 = scmp.lt.s32.totalorder %s23, 3
        %s409 = scalar_select %p408, %s23, 3
        %s410 = smul.addr %s409, 8
        %s411 = smul.addr %s410, 8
        %s412 = scalar_lea.vmem %s6, %s411
        %p413 = scmp.lt.s32.totalorder %s23, 3
        %s414 = scalar_select %p413, %s23, 3
        %s415 = smul.addr %s414, 8
        %s416 = scalar_lea.vmem %s7, %s415
        %v417 = vld [vmem:[%s391] sm:$0xff]
        %v418 = vmul.f32 %v417, 1.442695
        %v419 = vpow.pop %v418
        %v420 = vsub.f32 0.0, %v419
        %v421 = vmul.f32 %v420, 1.442695
        %v422 = vpow.pop %v421
        %v423 = vld [vmem:[%s387] sm:$0xff]
        %v424 = vld [vmem:[%s395] sm:$0xff]
        %v425 = vld [vmem:[%s399] sm:$0xff]
        %v426 = vld [vmem:[%s403] sm:$0xff]
        %v427 = vld [vmem:[%s407] sm:$0xff]
        %v428 = vld [vmem:[%s412] sm:$0xff]
        %v429 = vld [vmem:[%s412 + $0x8] sm:$0xff]
        %v430 = vld [vmem:[%s412 + $0x10] sm:$0xff]
        %v431 = vld [vmem:[%s412 + $0x18] sm:$0xff]
        %v432 = vld [vmem:[%s412 + $0x20] sm:$0xff]
        %v433 = vld [vmem:[%s412 + $0x28] sm:$0xff]
        %v434 = vld [vmem:[%s412 + $0x30] sm:$0xff]
        %v435 = vld [vmem:[%s412 + $0x38] sm:$0xff]
        %v436 = vlaneseq
        %v437 = vshrl.u32 %v436, 7
        %v438 = vsub.s32 0, %v437
        %v439 = vrot.slane %v426, %v438
        %v440 = vmul.f32 %v428, %v439
        %v441 = vmul.f32 %v429, %v439
        %v442 = vmul.f32 %v430, %v439
        %v443 = vmul.f32 %v431, %v439
        %v444 = vmul.f32 %v432, %v439
        %v445 = vmul.f32 %v433, %v439
        %v446 = vmul.f32 %v434, %v439
        %v447 = vmul.f32 %v435, %v439
        %vm448 = vcmask 523264
        %v449 = vsel %vm448, %v440, 0.0
        %450 = vadd.xlane.f32.xlu0 %v449
        %v451 = vpop.xlane.xlu0 %450
        %v452 = vsel %vm448, %v441, 0.0
        %453 = vadd.xlane.f32.xlu0 %v452
        %v454 = vpop.xlane.xlu0 %453
        %v455 = vsel %vm448, %v442, 0.0
        %456 = vadd.xlane.f32.xlu0 %v455
        %v457 = vpop.xlane.xlu0 %456
        %v458 = vsel %vm448, %v443, 0.0
        %459 = vadd.xlane.f32.xlu0 %v458
        %v460 = vpop.xlane.xlu0 %459
        %v461 = vsel %vm448, %v444, 0.0
        %462 = vadd.xlane.f32.xlu0 %v461
        %v463 = vpop.xlane.xlu0 %462
        %v464 = vsel %vm448, %v445, 0.0
        %465 = vadd.xlane.f32.xlu0 %v464
        %v466 = vpop.xlane.xlu0 %465
        %v467 = vsel %vm448, %v446, 0.0
        %468 = vadd.xlane.f32.xlu0 %v467
        %v469 = vpop.xlane.xlu0 %468
        %v470 = vsel %vm448, %v447, 0.0
        %471 = vadd.xlane.f32.xlu0 %v470
        %v472 = vpop.xlane.xlu0 %471
        %v473 = vlaneseq
        %v474 = vshrl.u32 %v473, 7
        %v475 = vsub.s32 0, %v474
        %v476 = vrot.slane %v422, %v475
        %v477 = vmul.f32 %v428, %v476
        %v478 = vmul.f32 %v429, %v476
        %v479 = vmul.f32 %v430, %v476
        %v480 = vmul.f32 %v431, %v476
        %v481 = vmul.f32 %v432, %v476
        %v482 = vmul.f32 %v433, %v476
        %v483 = vmul.f32 %v434, %v476
        %v484 = vmul.f32 %v435, %v476
        %v485 = vlaneseq
        %v486 = vshrl.u32 %v485, 7
        %v487 = vsub.s32 0, %v486
        %v488 = vrot.slane %v427, %v487
        %v489 = vmul.f32 %v451, %v488
        %v490 = vmul.f32 %v454, %v488
        %v491 = vmul.f32 %v457, %v488
        %v492 = vmul.f32 %v460, %v488
        %v493 = vmul.f32 %v463, %v488
        %v494 = vmul.f32 %v466, %v488
        %v495 = vmul.f32 %v469, %v488
        %v496 = vmul.f32 %v472, %v488
        %v497 = vadd.f32 %v477, %v489
        %v498 = vadd.f32 %v478, %v490
        %v499 = vadd.f32 %v479, %v491
        %v500 = vadd.f32 %v480, %v492
        %v501 = vadd.f32 %v481, %v493
        %v502 = vadd.f32 %v482, %v494
        %v503 = vadd.f32 %v483, %v495
        %v504 = vadd.f32 %v484, %v496
        %505 = vxpose.xlu0.b32.start [1/16] %v425, 128
        %506 = vxpose.xlu0.b32.cont [2/16] 0.0, 128
        %507 = vxpose.xlu0.b32.cont [3/16] 0.0, 128
        %508 = vxpose.xlu0.b32.cont [4/16] 0.0, 128
        %509 = vxpose.xlu0.b32.cont [5/16] 0.0, 128
        %510 = vxpose.xlu0.b32.cont [6/16] 0.0, 128
        %511 = vxpose.xlu0.b32.cont [7/16] 0.0, 128
        %512 = vxpose.xlu0.b32.cont [8/16] 0.0, 128
        %513 = vxpose.xlu0.b32.cont [9/16] 0.0, 128
        %514 = vxpose.xlu0.b32.cont [10/16] 0.0, 128
        %515 = vxpose.xlu0.b32.cont [11/16] 0.0, 128
        %516 = vxpose.xlu0.b32.cont [12/16] 0.0, 128
        %517 = vxpose.xlu0.b32.cont [13/16] 0.0, 128
        %518 = vxpose.xlu0.b32.cont [14/16] 0.0, 128
        %519 = vxpose.xlu0.b32.cont [15/16] 0.0, 128
        %520 = vxpose.xlu0.b32.end [16/16] 0.0, 128
        %v521 = vpop.trf.xlu0
        %v522 = vpop.trf.xlu0
        %v523 = vpop.trf.xlu0
        %v524 = vpop.trf.xlu0
        %v525 = vpop.trf.xlu0
        %v526 = vpop.trf.xlu0
        %v527 = vpop.trf.xlu0
        %v528 = vpop.trf.xlu0
        %v529 = vpop.trf.xlu0
        %v530 = vpop.trf.xlu0
        %v531 = vpop.trf.xlu0
        %v532 = vpop.trf.xlu0
        %v533 = vpop.trf.xlu0
        %v534 = vpop.trf.xlu0
        %v535 = vpop.trf.xlu0
        %v536 = vpop.trf.xlu0
        %538 = vset.pattern.permute.xlu0 0
        %539 = vperm.xlu0 %538, %v521
        %v540 = vpop.permute.xlu0 %539
        %543 = vset.pattern.permute.xlu0 0
        %544 = vperm.xlu0 %543, %v522
        %v545 = vpop.permute.xlu0 %544
        %548 = vset.pattern.permute.xlu0 0
        %549 = vperm.xlu0 %548, %v523
        %v550 = vpop.permute.xlu0 %549
        %553 = vset.pattern.permute.xlu0 0
        %554 = vperm.xlu0 %553, %v524
        %v555 = vpop.permute.xlu0 %554
        %558 = vset.pattern.permute.xlu0 0
        %559 = vperm.xlu0 %558, %v525
        %v560 = vpop.permute.xlu0 %559
        %563 = vset.pattern.permute.xlu0 0
        %564 = vperm.xlu0 %563, %v526
        %v565 = vpop.permute.xlu0 %564
        %568 = vset.pattern.permute.xlu0 0
        %569 = vperm.xlu0 %568, %v527
        %v570 = vpop.permute.xlu0 %569
        %573 = vset.pattern.permute.xlu0 0
        %574 = vperm.xlu0 %573, %v528
        %v575 = vpop.permute.xlu0 %574
        %v577 = vlaneseq
        %v578 = vshrl.u32 %v577, 7
        %v579 = vsub.s32 0, %v578
        %v580 = vrot.slane %v424, %v579
        %v581 = vmul.f32 %v540, %v580
        %v582 = vmul.f32 %v545, %v580
        %v583 = vmul.f32 %v550, %v580
        %v584 = vmul.f32 %v555, %v580
        %v585 = vmul.f32 %v560, %v580
        %v586 = vmul.f32 %v565, %v580
        %v587 = vmul.f32 %v570, %v580
        %v588 = vmul.f32 %v575, %v580
        %v589 = vadd.f32 %v497, %v581
        %v590 = vadd.f32 %v498, %v582
        %v591 = vadd.f32 %v499, %v583
        %v592 = vadd.f32 %v500, %v584
        %v593 = vadd.f32 %v501, %v585
        %v594 = vadd.f32 %v502, %v586
        %v595 = vadd.f32 %v503, %v587
        %v596 = vadd.f32 %v504, %v588
        %v597 = vlaneseq
        %v598 = vshrl.u32 %v597, 7
        %v599 = vsub.s32 0, %v598
        %v600 = vrot.slane %v423, %v599
        %v601 = vmul.f32 %v589, %v600
        %v602 = vmul.f32 %v590, %v600
        %v603 = vmul.f32 %v591, %v600
        %v604 = vmul.f32 %v592, %v600
        %v605 = vmul.f32 %v593, %v600
        %v606 = vmul.f32 %v594, %v600
        %v607 = vmul.f32 %v595, %v600
        %v608 = vmul.f32 %v596, %v600
        %v609 = vsel %vm448, %v601, 0.0
        %610 = vadd.xlane.f32.xlu0 %v609
        %v611 = vpop.xlane.xlu0 %610
        %v612 = vsel %vm448, %v602, 0.0
        %613 = vadd.xlane.f32.xlu0 %v612
        %v614 = vpop.xlane.xlu0 %613
        %v615 = vsel %vm448, %v603, 0.0
        %616 = vadd.xlane.f32.xlu0 %v615
        %v617 = vpop.xlane.xlu0 %616
        %v618 = vsel %vm448, %v604, 0.0
        %619 = vadd.xlane.f32.xlu0 %v618
        %v620 = vpop.xlane.xlu0 %619
        %v621 = vsel %vm448, %v605, 0.0
        %622 = vadd.xlane.f32.xlu0 %v621
        %v623 = vpop.xlane.xlu0 %622
        %v624 = vsel %vm448, %v606, 0.0
        %625 = vadd.xlane.f32.xlu0 %v624
        %v626 = vpop.xlane.xlu0 %625
        %v627 = vsel %vm448, %v607, 0.0
        %628 = vadd.xlane.f32.xlu0 %v627
        %v629 = vpop.xlane.xlu0 %628
        %v630 = vsel %vm448, %v608, 0.0
        %631 = vadd.xlane.f32.xlu0 %v630
        %v632 = vpop.xlane.xlu0 %631
        %633 = vxpose.xlu0.b32.start [1/16] %v611, 128
        %634 = vxpose.xlu0.b32.cont [2/16] %v614, 128
        %635 = vxpose.xlu0.b32.cont [3/16] %v617, 128
        %636 = vxpose.xlu0.b32.cont [4/16] %v620, 128
        %637 = vxpose.xlu0.b32.cont [5/16] %v623, 128
        %638 = vxpose.xlu0.b32.cont [6/16] %v626, 128
        %639 = vxpose.xlu0.b32.cont [7/16] %v629, 128
        %640 = vxpose.xlu0.b32.cont [8/16] %v632, 128
        %641 = vxpose.xlu0.b32.cont [9/16] 0.0, 128
        %642 = vxpose.xlu0.b32.cont [10/16] 0.0, 128
        %643 = vxpose.xlu0.b32.cont [11/16] 0.0, 128
        %644 = vxpose.xlu0.b32.cont [12/16] 0.0, 128
        %645 = vxpose.xlu0.b32.cont [13/16] 0.0, 128
        %646 = vxpose.xlu0.b32.cont [14/16] 0.0, 128
        %647 = vxpose.xlu0.b32.cont [15/16] 0.0, 128
        %648 = vxpose.xlu0.b32.end [16/16] 0.0, 128
        %v649 = vpop.trf.xlu0
        %v650 = vpop.trf.xlu0
        %v651 = vpop.trf.xlu0
        %v652 = vpop.trf.xlu0
        %v653 = vpop.trf.xlu0
        %v654 = vpop.trf.xlu0
        %v655 = vpop.trf.xlu0
        %v656 = vpop.trf.xlu0
        %v657 = vpop.trf.xlu0
        %v658 = vpop.trf.xlu0
        %v659 = vpop.trf.xlu0
        %v660 = vpop.trf.xlu0
        %v661 = vpop.trf.xlu0
        %v662 = vpop.trf.xlu0
        %v663 = vpop.trf.xlu0
        %v664 = vpop.trf.xlu0
        %v665 = vlaneseq
        %v666 = vshrl.u32 %v665, 7
        %v667 = vsub.s32 1, %v666
        %v668 = vrot.slane %v426, %v667
        %v669 = vmul.f32 %v589, %v668
        %v670 = vmul.f32 %v590, %v668
        %v671 = vmul.f32 %v591, %v668
        %v672 = vmul.f32 %v592, %v668
        %v673 = vmul.f32 %v593, %v668
        %v674 = vmul.f32 %v594, %v668
        %v675 = vmul.f32 %v595, %v668
        %v676 = vmul.f32 %v596, %v668
        %v677 = vsel %vm448, %v669, 0.0
        %678 = vadd.xlane.f32.xlu0 %v677
        %v679 = vpop.xlane.xlu0 %678
        %v680 = vsel %vm448, %v670, 0.0
        %681 = vadd.xlane.f32.xlu0 %v680
        %v682 = vpop.xlane.xlu0 %681
        %v683 = vsel %vm448, %v671, 0.0
        %684 = vadd.xlane.f32.xlu0 %v683
        %v685 = vpop.xlane.xlu0 %684
        %v686 = vsel %vm448, %v672, 0.0
        %687 = vadd.xlane.f32.xlu0 %v686
        %v688 = vpop.xlane.xlu0 %687
        %v689 = vsel %vm448, %v673, 0.0
        %690 = vadd.xlane.f32.xlu0 %v689
        %v691 = vpop.xlane.xlu0 %690
        %v692 = vsel %vm448, %v674, 0.0
        %693 = vadd.xlane.f32.xlu0 %v692
        %v694 = vpop.xlane.xlu0 %693
        %v695 = vsel %vm448, %v675, 0.0
        %696 = vadd.xlane.f32.xlu0 %v695
        %v697 = vpop.xlane.xlu0 %696
        %v698 = vsel %vm448, %v676, 0.0
        %699 = vadd.xlane.f32.xlu0 %v698
        %v700 = vpop.xlane.xlu0 %699
        %v701 = vlaneseq
        %v702 = vshrl.u32 %v701, 7
        %v703 = vsub.s32 1, %v702
        %v704 = vrot.slane %v422, %v703
        %v705 = vmul.f32 %v589, %v704
        %v706 = vmul.f32 %v590, %v704
        %v707 = vmul.f32 %v591, %v704
        %v708 = vmul.f32 %v592, %v704
        %v709 = vmul.f32 %v593, %v704
        %v710 = vmul.f32 %v594, %v704
        %v711 = vmul.f32 %v595, %v704
        %v712 = vmul.f32 %v596, %v704
        %v713 = vlaneseq
        %v714 = vshrl.u32 %v713, 7
        %v715 = vsub.s32 1, %v714
        %v716 = vrot.slane %v427, %v715
        %v717 = vmul.f32 %v679, %v716
        %v718 = vmul.f32 %v682, %v716
        %v719 = vmul.f32 %v685, %v716
        %v720 = vmul.f32 %v688, %v716
        %v721 = vmul.f32 %v691, %v716
        %v722 = vmul.f32 %v694, %v716
        %v723 = vmul.f32 %v697, %v716
        %v724 = vmul.f32 %v700, %v716
        %v725 = vadd.f32 %v705, %v717
        %v726 = vadd.f32 %v706, %v718
        %v727 = vadd.f32 %v707, %v719
        %v728 = vadd.f32 %v708, %v720
        %v729 = vadd.f32 %v709, %v721
        %v730 = vadd.f32 %v710, %v722
        %v731 = vadd.f32 %v711, %v723
        %v732 = vadd.f32 %v712, %v724
        %v734 = vrot.slane %v425, 1
        %736 = vxpose.xlu0.b32.start [1/16] %v734, 128
        %737 = vxpose.xlu0.b32.cont [2/16] 0.0, 128
        %738 = vxpose.xlu0.b32.cont [3/16] 0.0, 128
        %739 = vxpose.xlu0.b32.cont [4/16] 0.0, 128
        %740 = vxpose.xlu0.b32.cont [5/16] 0.0, 128
        %741 = vxpose.xlu0.b32.cont [6/16] 0.0, 128
        %742 = vxpose.xlu0.b32.cont [7/16] 0.0, 128
        %743 = vxpose.xlu0.b32.cont [8/16] 0.0, 128
        %744 = vxpose.xlu0.b32.cont [9/16] 0.0, 128
        %745 = vxpose.xlu0.b32.cont [10/16] 0.0, 128
        %746 = vxpose.xlu0.b32.cont [11/16] 0.0, 128
        %747 = vxpose.xlu0.b32.cont [12/16] 0.0, 128
        %748 = vxpose.xlu0.b32.cont [13/16] 0.0, 128
        %749 = vxpose.xlu0.b32.cont [14/16] 0.0, 128
        %750 = vxpose.xlu0.b32.cont [15/16] 0.0, 128
        %751 = vxpose.xlu0.b32.end [16/16] 0.0, 128
        %v752 = vpop.trf.xlu0
        %v753 = vpop.trf.xlu0
        %v754 = vpop.trf.xlu0
        %v755 = vpop.trf.xlu0
        %v756 = vpop.trf.xlu0
        %v757 = vpop.trf.xlu0
        %v758 = vpop.trf.xlu0
        %v759 = vpop.trf.xlu0
        %v760 = vpop.trf.xlu0
        %v761 = vpop.trf.xlu0
        %v762 = vpop.trf.xlu0
        %v763 = vpop.trf.xlu0
        %v764 = vpop.trf.xlu0
        %v765 = vpop.trf.xlu0
        %v766 = vpop.trf.xlu0
        %v767 = vpop.trf.xlu0
        %769 = vset.pattern.permute.xlu0 0
        %770 = vperm.xlu0 %769, %v752
        %v771 = vpop.permute.xlu0 %770
        %774 = vset.pattern.permute.xlu0 0
        %775 = vperm.xlu0 %774, %v753
        %v776 = vpop.permute.xlu0 %775
        %779 = vset.pattern.permute.xlu0 0
        %780 = vperm.xlu0 %779, %v754
        %v781 = vpop.permute.xlu0 %780
        %784 = vset.pattern.permute.xlu0 0
        %785 = vperm.xlu0 %784, %v755
        %v786 = vpop.permute.xlu0 %785
        %789 = vset.pattern.permute.xlu0 0
        %790 = vperm.xlu0 %789, %v756
        %v791 = vpop.permute.xlu0 %790
        %794 = vset.pattern.permute.xlu0 0
        %795 = vperm.xlu0 %794, %v757
        %v796 = vpop.permute.xlu0 %795
        %799 = vset.pattern.permute.xlu0 0
        %800 = vperm.xlu0 %799, %v758
        %v801 = vpop.permute.xlu0 %800
        %804 = vset.pattern.permute.xlu0 0
        %805 = vperm.xlu0 %804, %v759
        %v806 = vpop.permute.xlu0 %805
        %v808 = vlaneseq
        %v809 = vshrl.u32 %v808, 7
        %v810 = vsub.s32 1, %v809
        %v811 = vrot.slane %v424, %v810
        %v812 = vmul.f32 %v771, %v811
        %v813 = vmul.f32 %v776, %v811
        %v814 = vmul.f32 %v781, %v811
        %v815 = vmul.f32 %v786, %v811
        %v816 = vmul.f32 %v791, %v811
        %v817 = vmul.f32 %v796, %v811
        %v818 = vmul.f32 %v801, %v811
        %v819 = vmul.f32 %v806, %v811
        %v820 = vadd.f32 %v725, %v812
        %v821 = vadd.f32 %v726, %v813
        %v822 = vadd.f32 %v727, %v814
        %v823 = vadd.f32 %v728, %v815
        %v824 = vadd.f32 %v729, %v816
        %v825 = vadd.f32 %v730, %v817
        %v826 = vadd.f32 %v731, %v818
        %v827 = vadd.f32 %v732, %v819
        %v828 = vlaneseq
        %v829 = vshrl.u32 %v828, 7
        %v830 = vsub.s32 1, %v829
        %v831 = vrot.slane %v423, %v830
        %v832 = vmul.f32 %v820, %v831
        %v833 = vmul.f32 %v821, %v831
        %v834 = vmul.f32 %v822, %v831
        %v835 = vmul.f32 %v823, %v831
        %v836 = vmul.f32 %v824, %v831
        %v837 = vmul.f32 %v825, %v831
        %v838 = vmul.f32 %v826, %v831
        %v839 = vmul.f32 %v827, %v831
        %v840 = vsel %vm448, %v832, 0.0
        %841 = vadd.xlane.f32.xlu0 %v840
        %v842 = vpop.xlane.xlu0 %841
        %v843 = vsel %vm448, %v833, 0.0
        %844 = vadd.xlane.f32.xlu0 %v843
        %v845 = vpop.xlane.xlu0 %844
        %v846 = vsel %vm448, %v834, 0.0
        %847 = vadd.xlane.f32.xlu0 %v846
        %v848 = vpop.xlane.xlu0 %847
        %v849 = vsel %vm448, %v835, 0.0
        %850 = vadd.xlane.f32.xlu0 %v849
        %v851 = vpop.xlane.xlu0 %850
        %v852 = vsel %vm448, %v836, 0.0
        %853 = vadd.xlane.f32.xlu0 %v852
        %v854 = vpop.xlane.xlu0 %853
        %v855 = vsel %vm448, %v837, 0.0
        %856 = vadd.xlane.f32.xlu0 %v855
        %v857 = vpop.xlane.xlu0 %856
        %v858 = vsel %vm448, %v838, 0.0
        %859 = vadd.xlane.f32.xlu0 %v858
        %v860 = vpop.xlane.xlu0 %859
        %v861 = vsel %vm448, %v839, 0.0
        %862 = vadd.xlane.f32.xlu0 %v861
        %v863 = vpop.xlane.xlu0 %862
        %864 = vxpose.xlu0.b32.start [1/16] %v842, 128
        %865 = vxpose.xlu0.b32.cont [2/16] %v845, 128
        %866 = vxpose.xlu0.b32.cont [3/16] %v848, 128
        %867 = vxpose.xlu0.b32.cont [4/16] %v851, 128
        %868 = vxpose.xlu0.b32.cont [5/16] %v854, 128
        %869 = vxpose.xlu0.b32.cont [6/16] %v857, 128
        %870 = vxpose.xlu0.b32.cont [7/16] %v860, 128
        %871 = vxpose.xlu0.b32.cont [8/16] %v863, 128
        %872 = vxpose.xlu0.b32.cont [9/16] 0.0, 128
        %873 = vxpose.xlu0.b32.cont [10/16] 0.0, 128
        %874 = vxpose.xlu0.b32.cont [11/16] 0.0, 128
        %875 = vxpose.xlu0.b32.cont [12/16] 0.0, 128
        %876 = vxpose.xlu0.b32.cont [13/16] 0.0, 128
        %877 = vxpose.xlu0.b32.cont [14/16] 0.0, 128
        %878 = vxpose.xlu0.b32.cont [15/16] 0.0, 128
        %879 = vxpose.xlu0.b32.end [16/16] 0.0, 128
        %v880 = vpop.trf.xlu0
        %v881 = vpop.trf.xlu0
        %v882 = vpop.trf.xlu0
        %v883 = vpop.trf.xlu0
        %v884 = vpop.trf.xlu0
        %v885 = vpop.trf.xlu0
        %v886 = vpop.trf.xlu0
        %v887 = vpop.trf.xlu0
        %v888 = vpop.trf.xlu0
        %v889 = vpop.trf.xlu0
        %v890 = vpop.trf.xlu0
        %v891 = vpop.trf.xlu0
        %v892 = vpop.trf.xlu0
        %v893 = vpop.trf.xlu0
        %v894 = vpop.trf.xlu0
        %v895 = vpop.trf.xlu0
        %v896 = vlaneseq
        %v897 = vshrl.u32 %v896, 7
        %v898 = vsub.s32 2, %v897
        %v899 = vrot.slane %v426, %v898
        %v900 = vmul.f32 %v820, %v899
        %v901 = vmul.f32 %v821, %v899
        %v902 = vmul.f32 %v822, %v899
        %v903 = vmul.f32 %v823, %v899
        %v904 = vmul.f32 %v824, %v899
        %v905 = vmul.f32 %v825, %v899
        %v906 = vmul.f32 %v826, %v899
        %v907 = vmul.f32 %v827, %v899
        %v908 = vsel %vm448, %v900, 0.0
        %909 = vadd.xlane.f32.xlu0 %v908
        %v910 = vpop.xlane.xlu0 %909
        %v911 = vsel %vm448, %v901, 0.0
        %912 = vadd.xlane.f32.xlu0 %v911
        %v913 = vpop.xlane.xlu0 %912
        %v914 = vsel %vm448, %v902, 0.0
        %915 = vadd.xlane.f32.xlu0 %v914
        %v916 = vpop.xlane.xlu0 %915
        %v917 = vsel %vm448, %v903, 0.0
        %918 = vadd.xlane.f32.xlu0 %v917
        %v919 = vpop.xlane.xlu0 %918
        %v920 = vsel %vm448, %v904, 0.0
        %921 = vadd.xlane.f32.xlu0 %v920
        %v922 = vpop.xlane.xlu0 %921
        %v923 = vsel %vm448, %v905, 0.0
        %924 = vadd.xlane.f32.xlu0 %v923
        %v925 = vpop.xlane.xlu0 %924
        %v926 = vsel %vm448, %v906, 0.0
        %927 = vadd.xlane.f32.xlu0 %v926
        %v928 = vpop.xlane.xlu0 %927
        %v929 = vsel %vm448, %v907, 0.0
        %930 = vadd.xlane.f32.xlu0 %v929
        %v931 = vpop.xlane.xlu0 %930
        %v932 = vlaneseq
        %v933 = vshrl.u32 %v932, 7
        %v934 = vsub.s32 2, %v933
        %v935 = vrot.slane %v422, %v934
        %v936 = vmul.f32 %v820, %v935
        %v937 = vmul.f32 %v821, %v935
        %v938 = vmul.f32 %v822, %v935
        %v939 = vmul.f32 %v823, %v935
        %v940 = vmul.f32 %v824, %v935
        %v941 = vmul.f32 %v825, %v935
        %v942 = vmul.f32 %v826, %v935
        %v943 = vmul.f32 %v827, %v935
        %v944 = vlaneseq
        %v945 = vshrl.u32 %v944, 7
        %v946 = vsub.s32 2, %v945
        %v947 = vrot.slane %v427, %v946
        %v948 = vmul.f32 %v910, %v947
        %v949 = vmul.f32 %v913, %v947
        %v950 = vmul.f32 %v916, %v947
        %v951 = vmul.f32 %v919, %v947
        %v952 = vmul.f32 %v922, %v947
        %v953 = vmul.f32 %v925, %v947
        %v954 = vmul.f32 %v928, %v947
        %v955 = vmul.f32 %v931, %v947
        %v956 = vadd.f32 %v936, %v948
        %v957 = vadd.f32 %v937, %v949
        %v958 = vadd.f32 %v938, %v950
        %v959 = vadd.f32 %v939, %v951
        %v960 = vadd.f32 %v940, %v952
        %v961 = vadd.f32 %v941, %v953
        %v962 = vadd.f32 %v942, %v954
        %v963 = vadd.f32 %v943, %v955
        %v964 = vrot.slane %v425, 2
        %966 = vxpose.xlu0.b32.start [1/16] %v964, 128
        %967 = vxpose.xlu0.b32.cont [2/16] 0.0, 128
        %968 = vxpose.xlu0.b32.cont [3/16] 0.0, 128
        %969 = vxpose.xlu0.b32.cont [4/16] 0.0, 128
        %970 = vxpose.xlu0.b32.cont [5/16] 0.0, 128
        %971 = vxpose.xlu0.b32.cont [6/16] 0.0, 128
        %972 = vxpose.xlu0.b32.cont [7/16] 0.0, 128
        %973 = vxpose.xlu0.b32.cont [8/16] 0.0, 128
        %974 = vxpose.xlu0.b32.cont [9/16] 0.0, 128
        %975 = vxpose.xlu0.b32.cont [10/16] 0.0, 128
        %976 = vxpose.xlu0.b32.cont [11/16] 0.0, 128
        %977 = vxpose.xlu0.b32.cont [12/16] 0.0, 128
        %978 = vxpose.xlu0.b32.cont [13/16] 0.0, 128
        %979 = vxpose.xlu0.b32.cont [14/16] 0.0, 128
        %980 = vxpose.xlu0.b32.cont [15/16] 0.0, 128
        %981 = vxpose.xlu0.b32.end [16/16] 0.0, 128
        %v982 = vpop.trf.xlu0
        %v983 = vpop.trf.xlu0
        %v984 = vpop.trf.xlu0
        %v985 = vpop.trf.xlu0
        %v986 = vpop.trf.xlu0
        %v987 = vpop.trf.xlu0
        %v988 = vpop.trf.xlu0
        %v989 = vpop.trf.xlu0
        %v990 = vpop.trf.xlu0
        %v991 = vpop.trf.xlu0
        %v992 = vpop.trf.xlu0
        %v993 = vpop.trf.xlu0
        %v994 = vpop.trf.xlu0
        %v995 = vpop.trf.xlu0
        %v996 = vpop.trf.xlu0
        %v997 = vpop.trf.xlu0
        %999 = vset.pattern.permute.xlu0 0
        %1000 = vperm.xlu0 %999, %v982
        %v1001 = vpop.permute.xlu0 %1000
        %1004 = vset.pattern.permute.xlu0 0
        %1005 = vperm.xlu0 %1004, %v983
        %v1006 = vpop.permute.xlu0 %1005
        %1009 = vset.pattern.permute.xlu0 0
        %1010 = vperm.xlu0 %1009, %v984
        %v1011 = vpop.permute.xlu0 %1010
        %1014 = vset.pattern.permute.xlu0 0
        %1015 = vperm.xlu0 %1014, %v985
        %v1016 = vpop.permute.xlu0 %1015
        %1019 = vset.pattern.permute.xlu0 0
        %1020 = vperm.xlu0 %1019, %v986
        %v1021 = vpop.permute.xlu0 %1020
        %1024 = vset.pattern.permute.xlu0 0
        %1025 = vperm.xlu0 %1024, %v987
        %v1026 = vpop.permute.xlu0 %1025
        %1029 = vset.pattern.permute.xlu0 0
        %1030 = vperm.xlu0 %1029, %v988
        %v1031 = vpop.permute.xlu0 %1030
        %1034 = vset.pattern.permute.xlu0 0
        %1035 = vperm.xlu0 %1034, %v989
        %v1036 = vpop.permute.xlu0 %1035
        %v1038 = vlaneseq
        %v1039 = vshrl.u32 %v1038, 7
        %v1040 = vsub.s32 2, %v1039
        %v1041 = vrot.slane %v424, %v1040
        %v1042 = vmul.f32 %v1001, %v1041
        %v1043 = vmul.f32 %v1006, %v1041
        %v1044 = vmul.f32 %v1011, %v1041
        %v1045 = vmul.f32 %v1016, %v1041
        %v1046 = vmul.f32 %v1021, %v1041
        %v1047 = vmul.f32 %v1026, %v1041
        %v1048 = vmul.f32 %v1031, %v1041
        %v1049 = vmul.f32 %v1036, %v1041
        %v1050 = vadd.f32 %v956, %v1042
        %v1051 = vadd.f32 %v957, %v1043
        %v1052 = vadd.f32 %v958, %v1044
        %v1053 = vadd.f32 %v959, %v1045
        %v1054 = vadd.f32 %v960, %v1046
        %v1055 = vadd.f32 %v961, %v1047
        %v1056 = vadd.f32 %v962, %v1048
        %v1057 = vadd.f32 %v963, %v1049
        %v1058 = vlaneseq
        %v1059 = vshrl.u32 %v1058, 7
        %v1060 = vsub.s32 2, %v1059
        %v1061 = vrot.slane %v423, %v1060
        %v1062 = vmul.f32 %v1050, %v1061
        %v1063 = vmul.f32 %v1051, %v1061
        %v1064 = vmul.f32 %v1052, %v1061
        %v1065 = vmul.f32 %v1053, %v1061
        %v1066 = vmul.f32 %v1054, %v1061
        %v1067 = vmul.f32 %v1055, %v1061
        %v1068 = vmul.f32 %v1056, %v1061
        %v1069 = vmul.f32 %v1057, %v1061
        %v1070 = vsel %vm448, %v1062, 0.0
        %1071 = vadd.xlane.f32.xlu0 %v1070
        %v1072 = vpop.xlane.xlu0 %1071
        %v1073 = vsel %vm448, %v1063, 0.0
        %1074 = vadd.xlane.f32.xlu0 %v1073
        %v1075 = vpop.xlane.xlu0 %1074
        %v1076 = vsel %vm448, %v1064, 0.0
        %1077 = vadd.xlane.f32.xlu0 %v1076
        %v1078 = vpop.xlane.xlu0 %1077
        %v1079 = vsel %vm448, %v1065, 0.0
        %1080 = vadd.xlane.f32.xlu0 %v1079
        %v1081 = vpop.xlane.xlu0 %1080
        %v1082 = vsel %vm448, %v1066, 0.0
        %1083 = vadd.xlane.f32.xlu0 %v1082
        %v1084 = vpop.xlane.xlu0 %1083
        %v1085 = vsel %vm448, %v1067, 0.0
        %1086 = vadd.xlane.f32.xlu0 %v1085
        %v1087 = vpop.xlane.xlu0 %1086
        %v1088 = vsel %vm448, %v1068, 0.0
        %1089 = vadd.xlane.f32.xlu0 %v1088
        %v1090 = vpop.xlane.xlu0 %1089
        %v1091 = vsel %vm448, %v1069, 0.0
        %1092 = vadd.xlane.f32.xlu0 %v1091
        %v1093 = vpop.xlane.xlu0 %1092
        %1094 = vxpose.xlu0.b32.start [1/16] %v1072, 128
        %1095 = vxpose.xlu0.b32.cont [2/16] %v1075, 128
        %1096 = vxpose.xlu0.b32.cont [3/16] %v1078, 128
        %1097 = vxpose.xlu0.b32.cont [4/16] %v1081, 128
        %1098 = vxpose.xlu0.b32.cont [5/16] %v1084, 128
        %1099 = vxpose.xlu0.b32.cont [6/16] %v1087, 128
        %1100 = vxpose.xlu0.b32.cont [7/16] %v1090, 128
        %1101 = vxpose.xlu0.b32.cont [8/16] %v1093, 128
        %1102 = vxpose.xlu0.b32.cont [9/16] 0.0, 128
        %1103 = vxpose.xlu0.b32.cont [10/16] 0.0, 128
        %1104 = vxpose.xlu0.b32.cont [11/16] 0.0, 128
        %1105 = vxpose.xlu0.b32.cont [12/16] 0.0, 128
        %1106 = vxpose.xlu0.b32.cont [13/16] 0.0, 128
        %1107 = vxpose.xlu0.b32.cont [14/16] 0.0, 128
        %1108 = vxpose.xlu0.b32.cont [15/16] 0.0, 128
        %1109 = vxpose.xlu0.b32.end [16/16] 0.0, 128
        %v1110 = vpop.trf.xlu0
        %v1111 = vpop.trf.xlu0
        %v1112 = vpop.trf.xlu0
        %v1113 = vpop.trf.xlu0
        %v1114 = vpop.trf.xlu0
        %v1115 = vpop.trf.xlu0
        %v1116 = vpop.trf.xlu0
        %v1117 = vpop.trf.xlu0
        %v1118 = vpop.trf.xlu0
        %v1119 = vpop.trf.xlu0
        %v1120 = vpop.trf.xlu0
        %v1121 = vpop.trf.xlu0
        %v1122 = vpop.trf.xlu0
        %v1123 = vpop.trf.xlu0
        %v1124 = vpop.trf.xlu0
        %v1125 = vpop.trf.xlu0
        %v1126 = vlaneseq
        %v1127 = vshrl.u32 %v1126, 7
        %v1128 = vsub.s32 3, %v1127
        %v1129 = vrot.slane %v426, %v1128
        %v1130 = vmul.f32 %v1050, %v1129
        %v1131 = vmul.f32 %v1051, %v1129
        %v1132 = vmul.f32 %v1052, %v1129
        %v1133 = vmul.f32 %v1053, %v1129
        %v1134 = vmul.f32 %v1054, %v1129
        %v1135 = vmul.f32 %v1055, %v1129
        %v1136 = vmul.f32 %v1056, %v1129
        %v1137 = vmul.f32 %v1057, %v1129
        %v1138 = vsel %vm448, %v1130, 0.0
        %1139 = vadd.xlane.f32.xlu0 %v1138
        %v1140 = vpop.xlane.xlu0 %1139
        %v1141 = vsel %vm448, %v1131, 0.0
        %1142 = vadd.xlane.f32.xlu0 %v1141
        %v1143 = vpop.xlane.xlu0 %1142
        %v1144 = vsel %vm448, %v1132, 0.0
        %1145 = vadd.xlane.f32.xlu0 %v1144
        %v1146 = vpop.xlane.xlu0 %1145
        %v1147 = vsel %vm448, %v1133, 0.0
        %1148 = vadd.xlane.f32.xlu0 %v1147
        %v1149 = vpop.xlane.xlu0 %1148
        %v1150 = vsel %vm448, %v1134, 0.0
        %1151 = vadd.xlane.f32.xlu0 %v1150
        %v1152 = vpop.xlane.xlu0 %1151
        %v1153 = vsel %vm448, %v1135, 0.0
        %1154 = vadd.xlane.f32.xlu0 %v1153
        %v1155 = vpop.xlane.xlu0 %1154
        %v1156 = vsel %vm448, %v1136, 0.0
        %1157 = vadd.xlane.f32.xlu0 %v1156
        %v1158 = vpop.xlane.xlu0 %1157
        %v1159 = vsel %vm448, %v1137, 0.0
        %1160 = vadd.xlane.f32.xlu0 %v1159
        %v1161 = vpop.xlane.xlu0 %1160
        %v1162 = vlaneseq
        %v1163 = vshrl.u32 %v1162, 7
        %v1164 = vsub.s32 3, %v1163
        %v1165 = vrot.slane %v422, %v1164
        %v1166 = vmul.f32 %v1050, %v1165
        %v1167 = vmul.f32 %v1051, %v1165
        %v1168 = vmul.f32 %v1052, %v1165
        %v1169 = vmul.f32 %v1053, %v1165
        %v1170 = vmul.f32 %v1054, %v1165
        %v1171 = vmul.f32 %v1055, %v1165
        %v1172 = vmul.f32 %v1056, %v1165
        %v1173 = vmul.f32 %v1057, %v1165
        %v1174 = vlaneseq
        %v1175 = vshrl.u32 %v1174, 7
        %v1176 = vsub.s32 3, %v1175
        %v1177 = vrot.slane %v427, %v1176
        %v1178 = vmul.f32 %v1140, %v1177
        %v1179 = vmul.f32 %v1143, %v1177
        %v1180 = vmul.f32 %v1146, %v1177
        %v1181 = vmul.f32 %v1149, %v1177
        %v1182 = vmul.f32 %v1152, %v1177
        %v1183 = vmul.f32 %v1155, %v1177
        %v1184 = vmul.f32 %v1158, %v1177
        %v1185 = vmul.f32 %v1161, %v1177
        %v1186 = vadd.f32 %v1166, %v1178
        %v1187 = vadd.f32 %v1167, %v1179
        %v1188 = vadd.f32 %v1168, %v1180
        %v1189 = vadd.f32 %v1169, %v1181
        %v1190 = vadd.f32 %v1170, %v1182
        %v1191 = vadd.f32 %v1171, %v1183
        %v1192 = vadd.f32 %v1172, %v1184
        %v1193 = vadd.f32 %v1173, %v1185
        %v1194 = vrot.slane %v425, 3
        %1196 = vxpose.xlu0.b32.start [1/16] %v1194, 128
        %1197 = vxpose.xlu0.b32.cont [2/16] 0.0, 128
        %1198 = vxpose.xlu0.b32.cont [3/16] 0.0, 128
        %1199 = vxpose.xlu0.b32.cont [4/16] 0.0, 128
        %1200 = vxpose.xlu0.b32.cont [5/16] 0.0, 128
        %1201 = vxpose.xlu0.b32.cont [6/16] 0.0, 128
        %1202 = vxpose.xlu0.b32.cont [7/16] 0.0, 128
        %1203 = vxpose.xlu0.b32.cont [8/16] 0.0, 128
        %1204 = vxpose.xlu0.b32.cont [9/16] 0.0, 128
        %1205 = vxpose.xlu0.b32.cont [10/16] 0.0, 128
        %1206 = vxpose.xlu0.b32.cont [11/16] 0.0, 128
        %1207 = vxpose.xlu0.b32.cont [12/16] 0.0, 128
        %1208 = vxpose.xlu0.b32.cont [13/16] 0.0, 128
        %1209 = vxpose.xlu0.b32.cont [14/16] 0.0, 128
        %1210 = vxpose.xlu0.b32.cont [15/16] 0.0, 128
        %1211 = vxpose.xlu0.b32.end [16/16] 0.0, 128
        %v1212 = vpop.trf.xlu0
        %v1213 = vpop.trf.xlu0
        %v1214 = vpop.trf.xlu0
        %v1215 = vpop.trf.xlu0
        %v1216 = vpop.trf.xlu0
        %v1217 = vpop.trf.xlu0
        %v1218 = vpop.trf.xlu0
        %v1219 = vpop.trf.xlu0
        %v1220 = vpop.trf.xlu0
        %v1221 = vpop.trf.xlu0
        %v1222 = vpop.trf.xlu0
        %v1223 = vpop.trf.xlu0
        %v1224 = vpop.trf.xlu0
        %v1225 = vpop.trf.xlu0
        %v1226 = vpop.trf.xlu0
        %v1227 = vpop.trf.xlu0
        %1229 = vset.pattern.permute.xlu0 0
        %1230 = vperm.xlu0 %1229, %v1212
        %v1231 = vpop.permute.xlu0 %1230
        %1234 = vset.pattern.permute.xlu0 0
        %1235 = vperm.xlu0 %1234, %v1213
        %v1236 = vpop.permute.xlu0 %1235
        %1239 = vset.pattern.permute.xlu0 0
        %1240 = vperm.xlu0 %1239, %v1214
        %v1241 = vpop.permute.xlu0 %1240
        %1244 = vset.pattern.permute.xlu0 0
        %1245 = vperm.xlu0 %1244, %v1215
        %v1246 = vpop.permute.xlu0 %1245
        %1249 = vset.pattern.permute.xlu0 0
        %1250 = vperm.xlu0 %1249, %v1216
        %v1251 = vpop.permute.xlu0 %1250
        %1254 = vset.pattern.permute.xlu0 0
        %1255 = vperm.xlu0 %1254, %v1217
        %v1256 = vpop.permute.xlu0 %1255
        %1259 = vset.pattern.permute.xlu0 0
        %1260 = vperm.xlu0 %1259, %v1218
        %v1261 = vpop.permute.xlu0 %1260
        %1264 = vset.pattern.permute.xlu0 0
        %1265 = vperm.xlu0 %1264, %v1219
        %v1266 = vpop.permute.xlu0 %1265
        %v1268 = vlaneseq
        %v1269 = vshrl.u32 %v1268, 7
        %v1270 = vsub.s32 3, %v1269
        %v1271 = vrot.slane %v424, %v1270
        %v1272 = vmul.f32 %v1231, %v1271
        %v1273 = vmul.f32 %v1236, %v1271
        %v1274 = vmul.f32 %v1241, %v1271
        %v1275 = vmul.f32 %v1246, %v1271
        %v1276 = vmul.f32 %v1251, %v1271
        %v1277 = vmul.f32 %v1256, %v1271
        %v1278 = vmul.f32 %v1261, %v1271
        %v1279 = vmul.f32 %v1266, %v1271
        %v1280 = vadd.f32 %v1186, %v1272
        %v1281 = vadd.f32 %v1187, %v1273
        %v1282 = vadd.f32 %v1188, %v1274
        %v1283 = vadd.f32 %v1189, %v1275
        %v1284 = vadd.f32 %v1190, %v1276
        %v1285 = vadd.f32 %v1191, %v1277
        %v1286 = vadd.f32 %v1192, %v1278
        %v1287 = vadd.f32 %v1193, %v1279
        %v1288 = vlaneseq
        %v1289 = vshrl.u32 %v1288, 7
        %v1290 = vsub.s32 3, %v1289
        %v1291 = vrot.slane %v423, %v1290
        %v1292 = vmul.f32 %v1280, %v1291
        %v1293 = vmul.f32 %v1281, %v1291
        %v1294 = vmul.f32 %v1282, %v1291
        %v1295 = vmul.f32 %v1283, %v1291
        %v1296 = vmul.f32 %v1284, %v1291
        %v1297 = vmul.f32 %v1285, %v1291
        %v1298 = vmul.f32 %v1286, %v1291
        %v1299 = vmul.f32 %v1287, %v1291
        %v1300 = vsel %vm448, %v1292, 0.0
        %1301 = vadd.xlane.f32.xlu0 %v1300
        %v1302 = vpop.xlane.xlu0 %1301
        %v1303 = vsel %vm448, %v1293, 0.0
        %1304 = vadd.xlane.f32.xlu0 %v1303
        %v1305 = vpop.xlane.xlu0 %1304
        %v1306 = vsel %vm448, %v1294, 0.0
        %1307 = vadd.xlane.f32.xlu0 %v1306
        %v1308 = vpop.xlane.xlu0 %1307
        %v1309 = vsel %vm448, %v1295, 0.0
        %1310 = vadd.xlane.f32.xlu0 %v1309
        %v1311 = vpop.xlane.xlu0 %1310
        %v1312 = vsel %vm448, %v1296, 0.0
        %1313 = vadd.xlane.f32.xlu0 %v1312
        %v1314 = vpop.xlane.xlu0 %1313
        %v1315 = vsel %vm448, %v1297, 0.0
        %1316 = vadd.xlane.f32.xlu0 %v1315
        %v1317 = vpop.xlane.xlu0 %1316
        %v1318 = vsel %vm448, %v1298, 0.0
        %1319 = vadd.xlane.f32.xlu0 %v1318
        %v1320 = vpop.xlane.xlu0 %1319
        %v1321 = vsel %vm448, %v1299, 0.0
        %1322 = vadd.xlane.f32.xlu0 %v1321
        %v1323 = vpop.xlane.xlu0 %1322
        %1324 = vxpose.xlu0.b32.start [1/16] %v1302, 128
        %1325 = vxpose.xlu0.b32.cont [2/16] %v1305, 128
        %1326 = vxpose.xlu0.b32.cont [3/16] %v1308, 128
        %1327 = vxpose.xlu0.b32.cont [4/16] %v1311, 128
        %1328 = vxpose.xlu0.b32.cont [5/16] %v1314, 128
        %1329 = vxpose.xlu0.b32.cont [6/16] %v1317, 128
        %1330 = vxpose.xlu0.b32.cont [7/16] %v1320, 128
        %1331 = vxpose.xlu0.b32.cont [8/16] %v1323, 128
        %1332 = vxpose.xlu0.b32.cont [9/16] 0.0, 128
        %1333 = vxpose.xlu0.b32.cont [10/16] 0.0, 128
        %1334 = vxpose.xlu0.b32.cont [11/16] 0.0, 128
        %1335 = vxpose.xlu0.b32.cont [12/16] 0.0, 128
        %1336 = vxpose.xlu0.b32.cont [13/16] 0.0, 128
        %1337 = vxpose.xlu0.b32.cont [14/16] 0.0, 128
        %1338 = vxpose.xlu0.b32.cont [15/16] 0.0, 128
        %1339 = vxpose.xlu0.b32.end [16/16] 0.0, 128
        %v1340 = vpop.trf.xlu0
        %v1341 = vpop.trf.xlu0
        %v1342 = vpop.trf.xlu0
        %v1343 = vpop.trf.xlu0
        %v1344 = vpop.trf.xlu0
        %v1345 = vpop.trf.xlu0
        %v1346 = vpop.trf.xlu0
        %v1347 = vpop.trf.xlu0
        %v1348 = vpop.trf.xlu0
        %v1349 = vpop.trf.xlu0
        %v1350 = vpop.trf.xlu0
        %v1351 = vpop.trf.xlu0
        %v1352 = vpop.trf.xlu0
        %v1353 = vpop.trf.xlu0
        %v1354 = vpop.trf.xlu0
        %v1355 = vpop.trf.xlu0
        %v1356 = vlaneseq
        %v1357 = vshrl.u32 %v1356, 7
        %v1358 = vsub.s32 4, %v1357
        %v1359 = vrot.slane %v426, %v1358
        %v1360 = vmul.f32 %v1280, %v1359
        %v1361 = vmul.f32 %v1281, %v1359
        %v1362 = vmul.f32 %v1282, %v1359
        %v1363 = vmul.f32 %v1283, %v1359
        %v1364 = vmul.f32 %v1284, %v1359
        %v1365 = vmul.f32 %v1285, %v1359
        %v1366 = vmul.f32 %v1286, %v1359
        %v1367 = vmul.f32 %v1287, %v1359
        %v1368 = vsel %vm448, %v1360, 0.0
        %1369 = vadd.xlane.f32.xlu0 %v1368
        %v1370 = vpop.xlane.xlu0 %1369
        %v1371 = vsel %vm448, %v1361, 0.0
        %1372 = vadd.xlane.f32.xlu0 %v1371
        %v1373 = vpop.xlane.xlu0 %1372
        %v1374 = vsel %vm448, %v1362, 0.0
        %1375 = vadd.xlane.f32.xlu0 %v1374
        %v1376 = vpop.xlane.xlu0 %1375
        %v1377 = vsel %vm448, %v1363, 0.0
        %1378 = vadd.xlane.f32.xlu0 %v1377
        %v1379 = vpop.xlane.xlu0 %1378
        %v1380 = vsel %vm448, %v1364, 0.0
        %1381 = vadd.xlane.f32.xlu0 %v1380
        %v1382 = vpop.xlane.xlu0 %1381
        %v1383 = vsel %vm448, %v1365, 0.0
        %1384 = vadd.xlane.f32.xlu0 %v1383
        %v1385 = vpop.xlane.xlu0 %1384
        %v1386 = vsel %vm448, %v1366, 0.0
        %1387 = vadd.xlane.f32.xlu0 %v1386
        %v1388 = vpop.xlane.xlu0 %1387
        %v1389 = vsel %vm448, %v1367, 0.0
        %1390 = vadd.xlane.f32.xlu0 %v1389
        %v1391 = vpop.xlane.xlu0 %1390
        %v1392 = vlaneseq
        %v1393 = vshrl.u32 %v1392, 7
        %v1394 = vsub.s32 4, %v1393
        %v1395 = vrot.slane %v422, %v1394
        %v1396 = vmul.f32 %v1280, %v1395
        %v1397 = vmul.f32 %v1281, %v1395
        %v1398 = vmul.f32 %v1282, %v1395
        %v1399 = vmul.f32 %v1283, %v1395
        %v1400 = vmul.f32 %v1284, %v1395
        %v1401 = vmul.f32 %v1285, %v1395
        %v1402 = vmul.f32 %v1286, %v1395
        %v1403 = vmul.f32 %v1287, %v1395
        %v1404 = vlaneseq
        %v1405 = vshrl.u32 %v1404, 7
        %v1406 = vsub.s32 4, %v1405
        %v1407 = vrot.slane %v427, %v1406
        %v1408 = vmul.f32 %v1370, %v1407
        %v1409 = vmul.f32 %v1373, %v1407
        %v1410 = vmul.f32 %v1376, %v1407
        %v1411 = vmul.f32 %v1379, %v1407
        %v1412 = vmul.f32 %v1382, %v1407
        %v1413 = vmul.f32 %v1385, %v1407
        %v1414 = vmul.f32 %v1388, %v1407
        %v1415 = vmul.f32 %v1391, %v1407
        %v1416 = vadd.f32 %v1396, %v1408
        %v1417 = vadd.f32 %v1397, %v1409
        %v1418 = vadd.f32 %v1398, %v1410
        %v1419 = vadd.f32 %v1399, %v1411
        %v1420 = vadd.f32 %v1400, %v1412
        %v1421 = vadd.f32 %v1401, %v1413
        %v1422 = vadd.f32 %v1402, %v1414
        %v1423 = vadd.f32 %v1403, %v1415
        %v1424 = vrot.slane %v425, 4
        %1426 = vxpose.xlu0.b32.start [1/16] %v1424, 128
        %1427 = vxpose.xlu0.b32.cont [2/16] 0.0, 128
        %1428 = vxpose.xlu0.b32.cont [3/16] 0.0, 128
        %1429 = vxpose.xlu0.b32.cont [4/16] 0.0, 128
        %1430 = vxpose.xlu0.b32.cont [5/16] 0.0, 128
        %1431 = vxpose.xlu0.b32.cont [6/16] 0.0, 128
        %1432 = vxpose.xlu0.b32.cont [7/16] 0.0, 128
        %1433 = vxpose.xlu0.b32.cont [8/16] 0.0, 128
        %1434 = vxpose.xlu0.b32.cont [9/16] 0.0, 128
        %1435 = vxpose.xlu0.b32.cont [10/16] 0.0, 128
        %1436 = vxpose.xlu0.b32.cont [11/16] 0.0, 128
        %1437 = vxpose.xlu0.b32.cont [12/16] 0.0, 128
        %1438 = vxpose.xlu0.b32.cont [13/16] 0.0, 128
        %1439 = vxpose.xlu0.b32.cont [14/16] 0.0, 128
        %1440 = vxpose.xlu0.b32.cont [15/16] 0.0, 128
        %1441 = vxpose.xlu0.b32.end [16/16] 0.0, 128
        %v1442 = vpop.trf.xlu0
        %v1443 = vpop.trf.xlu0
        %v1444 = vpop.trf.xlu0
        %v1445 = vpop.trf.xlu0
        %v1446 = vpop.trf.xlu0
        %v1447 = vpop.trf.xlu0
        %v1448 = vpop.trf.xlu0
        %v1449 = vpop.trf.xlu0
        %v1450 = vpop.trf.xlu0
        %v1451 = vpop.trf.xlu0
        %v1452 = vpop.trf.xlu0
        %v1453 = vpop.trf.xlu0
        %v1454 = vpop.trf.xlu0
        %v1455 = vpop.trf.xlu0
        %v1456 = vpop.trf.xlu0
        %v1457 = vpop.trf.xlu0
        %1459 = vset.pattern.permute.xlu0 0
        %1460 = vperm.xlu0 %1459, %v1442
        %v1461 = vpop.permute.xlu0 %1460
        %1464 = vset.pattern.permute.xlu0 0
        %1465 = vperm.xlu0 %1464, %v1443
        %v1466 = vpop.permute.xlu0 %1465
        %1469 = vset.pattern.permute.xlu0 0
        %1470 = vperm.xlu0 %1469, %v1444
        %v1471 = vpop.permute.xlu0 %1470
        %1474 = vset.pattern.permute.xlu0 0
        %1475 = vperm.xlu0 %1474, %v1445
        %v1476 = vpop.permute.xlu0 %1475
        %1479 = vset.pattern.permute.xlu0 0
        %1480 = vperm.xlu0 %1479, %v1446
        %v1481 = vpop.permute.xlu0 %1480
        %1484 = vset.pattern.permute.xlu0 0
        %1485 = vperm.xlu0 %1484, %v1447
        %v1486 = vpop.permute.xlu0 %1485
        %1489 = vset.pattern.permute.xlu0 0
        %1490 = vperm.xlu0 %1489, %v1448
        %v1491 = vpop.permute.xlu0 %1490
        %1494 = vset.pattern.permute.xlu0 0
        %1495 = vperm.xlu0 %1494, %v1449
        %v1496 = vpop.permute.xlu0 %1495
        %v1498 = vlaneseq
        %v1499 = vshrl.u32 %v1498, 7
        %v1500 = vsub.s32 4, %v1499
        %v1501 = vrot.slane %v424, %v1500
        %v1502 = vmul.f32 %v1461, %v1501
        %v1503 = vmul.f32 %v1466, %v1501
        %v1504 = vmul.f32 %v1471, %v1501
        %v1505 = vmul.f32 %v1476, %v1501
        %v1506 = vmul.f32 %v1481, %v1501
        %v1507 = vmul.f32 %v1486, %v1501
        %v1508 = vmul.f32 %v1491, %v1501
        %v1509 = vmul.f32 %v1496, %v1501
        %v1510 = vadd.f32 %v1416, %v1502
        %v1511 = vadd.f32 %v1417, %v1503
        %v1512 = vadd.f32 %v1418, %v1504
        %v1513 = vadd.f32 %v1419, %v1505
        %v1514 = vadd.f32 %v1420, %v1506
        %v1515 = vadd.f32 %v1421, %v1507
        %v1516 = vadd.f32 %v1422, %v1508
        %v1517 = vadd.f32 %v1423, %v1509
        %v1518 = vlaneseq
        %v1519 = vshrl.u32 %v1518, 7
        %v1520 = vsub.s32 4, %v1519
        %v1521 = vrot.slane %v423, %v1520
        %v1522 = vmul.f32 %v1510, %v1521
        %v1523 = vmul.f32 %v1511, %v1521
        %v1524 = vmul.f32 %v1512, %v1521
        %v1525 = vmul.f32 %v1513, %v1521
        %v1526 = vmul.f32 %v1514, %v1521
        %v1527 = vmul.f32 %v1515, %v1521
        %v1528 = vmul.f32 %v1516, %v1521
        %v1529 = vmul.f32 %v1517, %v1521
        %v1530 = vsel %vm448, %v1522, 0.0
        %1531 = vadd.xlane.f32.xlu0 %v1530
        %v1532 = vpop.xlane.xlu0 %1531
        %v1533 = vsel %vm448, %v1523, 0.0
        %1534 = vadd.xlane.f32.xlu0 %v1533
        %v1535 = vpop.xlane.xlu0 %1534
        %v1536 = vsel %vm448, %v1524, 0.0
        %1537 = vadd.xlane.f32.xlu0 %v1536
        %v1538 = vpop.xlane.xlu0 %1537
        %v1539 = vsel %vm448, %v1525, 0.0
        %1540 = vadd.xlane.f32.xlu0 %v1539
        %v1541 = vpop.xlane.xlu0 %1540
        %v1542 = vsel %vm448, %v1526, 0.0
        %1543 = vadd.xlane.f32.xlu0 %v1542
        %v1544 = vpop.xlane.xlu0 %1543
        %v1545 = vsel %vm448, %v1527, 0.0
        %1546 = vadd.xlane.f32.xlu0 %v1545
        %v1547 = vpop.xlane.xlu0 %1546
        %v1548 = vsel %vm448, %v1528, 0.0
        %1549 = vadd.xlane.f32.xlu0 %v1548
        %v1550 = vpop.xlane.xlu0 %1549
        %v1551 = vsel %vm448, %v1529, 0.0
        %1552 = vadd.xlane.f32.xlu0 %v1551
        %v1553 = vpop.xlane.xlu0 %1552
        %1554 = vxpose.xlu0.b32.start [1/16] %v1532, 128
        %1555 = vxpose.xlu0.b32.cont [2/16] %v1535, 128
        %1556 = vxpose.xlu0.b32.cont [3/16] %v1538, 128
        %1557 = vxpose.xlu0.b32.cont [4/16] %v1541, 128
        %1558 = vxpose.xlu0.b32.cont [5/16] %v1544, 128
        %1559 = vxpose.xlu0.b32.cont [6/16] %v1547, 128
        %1560 = vxpose.xlu0.b32.cont [7/16] %v1550, 128
        %1561 = vxpose.xlu0.b32.cont [8/16] %v1553, 128
        %1562 = vxpose.xlu0.b32.cont [9/16] 0.0, 128
        %1563 = vxpose.xlu0.b32.cont [10/16] 0.0, 128
        %1564 = vxpose.xlu0.b32.cont [11/16] 0.0, 128
        %1565 = vxpose.xlu0.b32.cont [12/16] 0.0, 128
        %1566 = vxpose.xlu0.b32.cont [13/16] 0.0, 128
        %1567 = vxpose.xlu0.b32.cont [14/16] 0.0, 128
        %1568 = vxpose.xlu0.b32.cont [15/16] 0.0, 128
        %1569 = vxpose.xlu0.b32.end [16/16] 0.0, 128
        %v1570 = vpop.trf.xlu0
        %v1571 = vpop.trf.xlu0
        %v1572 = vpop.trf.xlu0
        %v1573 = vpop.trf.xlu0
        %v1574 = vpop.trf.xlu0
        %v1575 = vpop.trf.xlu0
        %v1576 = vpop.trf.xlu0
        %v1577 = vpop.trf.xlu0
        %v1578 = vpop.trf.xlu0
        %v1579 = vpop.trf.xlu0
        %v1580 = vpop.trf.xlu0
        %v1581 = vpop.trf.xlu0
        %v1582 = vpop.trf.xlu0
        %v1583 = vpop.trf.xlu0
        %v1584 = vpop.trf.xlu0
        %v1585 = vpop.trf.xlu0
        %v1586 = vlaneseq
        %v1587 = vshrl.u32 %v1586, 7
        %v1588 = vsub.s32 5, %v1587
        %v1589 = vrot.slane %v426, %v1588
        %v1590 = vmul.f32 %v1510, %v1589
        %v1591 = vmul.f32 %v1511, %v1589
        %v1592 = vmul.f32 %v1512, %v1589
        %v1593 = vmul.f32 %v1513, %v1589
        %v1594 = vmul.f32 %v1514, %v1589
        %v1595 = vmul.f32 %v1515, %v1589
        %v1596 = vmul.f32 %v1516, %v1589
        %v1597 = vmul.f32 %v1517, %v1589
        %v1598 = vsel %vm448, %v1590, 0.0
        %1599 = vadd.xlane.f32.xlu0 %v1598
        %v1600 = vpop.xlane.xlu0 %1599
        %v1601 = vsel %vm448, %v1591, 0.0
        %1602 = vadd.xlane.f32.xlu0 %v1601
        %v1603 = vpop.xlane.xlu0 %1602
        %v1604 = vsel %vm448, %v1592, 0.0
        %1605 = vadd.xlane.f32.xlu0 %v1604
        %v1606 = vpop.xlane.xlu0 %1605
        %v1607 = vsel %vm448, %v1593, 0.0
        %1608 = vadd.xlane.f32.xlu0 %v1607
        %v1609 = vpop.xlane.xlu0 %1608
        %v1610 = vsel %vm448, %v1594, 0.0
        %1611 = vadd.xlane.f32.xlu0 %v1610
        %v1612 = vpop.xlane.xlu0 %1611
        %v1613 = vsel %vm448, %v1595, 0.0
        %1614 = vadd.xlane.f32.xlu0 %v1613
        %v1615 = vpop.xlane.xlu0 %1614
        %v1616 = vsel %vm448, %v1596, 0.0
        %1617 = vadd.xlane.f32.xlu0 %v1616
        %v1618 = vpop.xlane.xlu0 %1617
        %v1619 = vsel %vm448, %v1597, 0.0
        %1620 = vadd.xlane.f32.xlu0 %v1619
        %v1621 = vpop.xlane.xlu0 %1620
        %v1622 = vlaneseq
        %v1623 = vshrl.u32 %v1622, 7
        %v1624 = vsub.s32 5, %v1623
        %v1625 = vrot.slane %v422, %v1624
        %v1626 = vmul.f32 %v1510, %v1625
        %v1627 = vmul.f32 %v1511, %v1625
        %v1628 = vmul.f32 %v1512, %v1625
        %v1629 = vmul.f32 %v1513, %v1625
        %v1630 = vmul.f32 %v1514, %v1625
        %v1631 = vmul.f32 %v1515, %v1625
        %v1632 = vmul.f32 %v1516, %v1625
        %v1633 = vmul.f32 %v1517, %v1625
        %v1634 = vlaneseq
        %v1635 = vshrl.u32 %v1634, 7
        %v1636 = vsub.s32 5, %v1635
        %v1637 = vrot.slane %v427, %v1636
        %v1638 = vmul.f32 %v1600, %v1637
        %v1639 = vmul.f32 %v1603, %v1637
        %v1640 = vmul.f32 %v1606, %v1637
        %v1641 = vmul.f32 %v1609, %v1637
        %v1642 = vmul.f32 %v1612, %v1637
        %v1643 = vmul.f32 %v1615, %v1637
        %v1644 = vmul.f32 %v1618, %v1637
        %v1645 = vmul.f32 %v1621, %v1637
        %v1646 = vadd.f32 %v1626, %v1638
        %v1647 = vadd.f32 %v1627, %v1639
        %v1648 = vadd.f32 %v1628, %v1640
        %v1649 = vadd.f32 %v1629, %v1641
        %v1650 = vadd.f32 %v1630, %v1642
        %v1651 = vadd.f32 %v1631, %v1643
        %v1652 = vadd.f32 %v1632, %v1644
        %v1653 = vadd.f32 %v1633, %v1645
        %v1654 = vrot.slane %v425, 5
        %1656 = vxpose.xlu0.b32.start [1/16] %v1654, 128
        %1657 = vxpose.xlu0.b32.cont [2/16] 0.0, 128
        %1658 = vxpose.xlu0.b32.cont [3/16] 0.0, 128
        %1659 = vxpose.xlu0.b32.cont [4/16] 0.0, 128
        %1660 = vxpose.xlu0.b32.cont [5/16] 0.0, 128
        %1661 = vxpose.xlu0.b32.cont [6/16] 0.0, 128
        %1662 = vxpose.xlu0.b32.cont [7/16] 0.0, 128
        %1663 = vxpose.xlu0.b32.cont [8/16] 0.0, 128
        %1664 = vxpose.xlu0.b32.cont [9/16] 0.0, 128
        %1665 = vxpose.xlu0.b32.cont [10/16] 0.0, 128
        %1666 = vxpose.xlu0.b32.cont [11/16] 0.0, 128
        %1667 = vxpose.xlu0.b32.cont [12/16] 0.0, 128
        %1668 = vxpose.xlu0.b32.cont [13/16] 0.0, 128
        %1669 = vxpose.xlu0.b32.cont [14/16] 0.0, 128
        %1670 = vxpose.xlu0.b32.cont [15/16] 0.0, 128
        %1671 = vxpose.xlu0.b32.end [16/16] 0.0, 128
        %v1672 = vpop.trf.xlu0
        %v1673 = vpop.trf.xlu0
        %v1674 = vpop.trf.xlu0
        %v1675 = vpop.trf.xlu0
        %v1676 = vpop.trf.xlu0
        %v1677 = vpop.trf.xlu0
        %v1678 = vpop.trf.xlu0
        %v1679 = vpop.trf.xlu0
        %v1680 = vpop.trf.xlu0
        %v1681 = vpop.trf.xlu0
        %v1682 = vpop.trf.xlu0
        %v1683 = vpop.trf.xlu0
        %v1684 = vpop.trf.xlu0
        %v1685 = vpop.trf.xlu0
        %v1686 = vpop.trf.xlu0
        %v1687 = vpop.trf.xlu0
        %1689 = vset.pattern.permute.xlu0 0
        %1690 = vperm.xlu0 %1689, %v1672
        %v1691 = vpop.permute.xlu0 %1690
        %1694 = vset.pattern.permute.xlu0 0
        %1695 = vperm.xlu0 %1694, %v1673
        %v1696 = vpop.permute.xlu0 %1695
        %1699 = vset.pattern.permute.xlu0 0
        %1700 = vperm.xlu0 %1699, %v1674
        %v1701 = vpop.permute.xlu0 %1700
        %1704 = vset.pattern.permute.xlu0 0
        %1705 = vperm.xlu0 %1704, %v1675
        %v1706 = vpop.permute.xlu0 %1705
        %1709 = vset.pattern.permute.xlu0 0
        %1710 = vperm.xlu0 %1709, %v1676
        %v1711 = vpop.permute.xlu0 %1710
        %1714 = vset.pattern.permute.xlu0 0
        %1715 = vperm.xlu0 %1714, %v1677
        %v1716 = vpop.permute.xlu0 %1715
        %1719 = vset.pattern.permute.xlu0 0
        %1720 = vperm.xlu0 %1719, %v1678
        %v1721 = vpop.permute.xlu0 %1720
        %1724 = vset.pattern.permute.xlu0 0
        %1725 = vperm.xlu0 %1724, %v1679
        %v1726 = vpop.permute.xlu0 %1725
        %v1728 = vlaneseq
        %v1729 = vshrl.u32 %v1728, 7
        %v1730 = vsub.s32 5, %v1729
        %v1731 = vrot.slane %v424, %v1730
        %v1732 = vmul.f32 %v1691, %v1731
        %v1733 = vmul.f32 %v1696, %v1731
        %v1734 = vmul.f32 %v1701, %v1731
        %v1735 = vmul.f32 %v1706, %v1731
        %v1736 = vmul.f32 %v1711, %v1731
        %v1737 = vmul.f32 %v1716, %v1731
        %v1738 = vmul.f32 %v1721, %v1731
        %v1739 = vmul.f32 %v1726, %v1731
        %v1740 = vadd.f32 %v1646, %v1732
        %v1741 = vadd.f32 %v1647, %v1733
        %v1742 = vadd.f32 %v1648, %v1734
        %v1743 = vadd.f32 %v1649, %v1735
        %v1744 = vadd.f32 %v1650, %v1736
        %v1745 = vadd.f32 %v1651, %v1737
        %v1746 = vadd.f32 %v1652, %v1738
        %v1747 = vadd.f32 %v1653, %v1739
        %v1748 = vlaneseq
        %v1749 = vshrl.u32 %v1748, 7
        %v1750 = vsub.s32 5, %v1749
        %v1751 = vrot.slane %v423, %v1750
        %v1752 = vmul.f32 %v1740, %v1751
        %v1753 = vmul.f32 %v1741, %v1751
        %v1754 = vmul.f32 %v1742, %v1751
        %v1755 = vmul.f32 %v1743, %v1751
        %v1756 = vmul.f32 %v1744, %v1751
        %v1757 = vmul.f32 %v1745, %v1751
        %v1758 = vmul.f32 %v1746, %v1751
        %v1759 = vmul.f32 %v1747, %v1751
        %v1760 = vsel %vm448, %v1752, 0.0
        %1761 = vadd.xlane.f32.xlu0 %v1760
        %v1762 = vpop.xlane.xlu0 %1761
        %v1763 = vsel %vm448, %v1753, 0.0
        %1764 = vadd.xlane.f32.xlu0 %v1763
        %v1765 = vpop.xlane.xlu0 %1764
        %v1766 = vsel %vm448, %v1754, 0.0
        %1767 = vadd.xlane.f32.xlu0 %v1766
        %v1768 = vpop.xlane.xlu0 %1767
        %v1769 = vsel %vm448, %v1755, 0.0
        %1770 = vadd.xlane.f32.xlu0 %v1769
        %v1771 = vpop.xlane.xlu0 %1770
        %v1772 = vsel %vm448, %v1756, 0.0
        %1773 = vadd.xlane.f32.xlu0 %v1772
        %v1774 = vpop.xlane.xlu0 %1773
        %v1775 = vsel %vm448, %v1757, 0.0
        %1776 = vadd.xlane.f32.xlu0 %v1775
        %v1777 = vpop.xlane.xlu0 %1776
        %v1778 = vsel %vm448, %v1758, 0.0
        %1779 = vadd.xlane.f32.xlu0 %v1778
        %v1780 = vpop.xlane.xlu0 %1779
        %v1781 = vsel %vm448, %v1759, 0.0
        %1782 = vadd.xlane.f32.xlu0 %v1781
        %v1783 = vpop.xlane.xlu0 %1782
        %1784 = vxpose.xlu0.b32.start [1/16] %v1762, 128
        %1785 = vxpose.xlu0.b32.cont [2/16] %v1765, 128
        %1786 = vxpose.xlu0.b32.cont [3/16] %v1768, 128
        %1787 = vxpose.xlu0.b32.cont [4/16] %v1771, 128
        %1788 = vxpose.xlu0.b32.cont [5/16] %v1774, 128
        %1789 = vxpose.xlu0.b32.cont [6/16] %v1777, 128
        %1790 = vxpose.xlu0.b32.cont [7/16] %v1780, 128
        %1791 = vxpose.xlu0.b32.cont [8/16] %v1783, 128
        %1792 = vxpose.xlu0.b32.cont [9/16] 0.0, 128
        %1793 = vxpose.xlu0.b32.cont [10/16] 0.0, 128
        %1794 = vxpose.xlu0.b32.cont [11/16] 0.0, 128
        %1795 = vxpose.xlu0.b32.cont [12/16] 0.0, 128
        %1796 = vxpose.xlu0.b32.cont [13/16] 0.0, 128
        %1797 = vxpose.xlu0.b32.cont [14/16] 0.0, 128
        %1798 = vxpose.xlu0.b32.cont [15/16] 0.0, 128
        %1799 = vxpose.xlu0.b32.end [16/16] 0.0, 128
        %v1800 = vpop.trf.xlu0
        %v1801 = vpop.trf.xlu0
        %v1802 = vpop.trf.xlu0
        %v1803 = vpop.trf.xlu0
        %v1804 = vpop.trf.xlu0
        %v1805 = vpop.trf.xlu0
        %v1806 = vpop.trf.xlu0
        %v1807 = vpop.trf.xlu0
        %v1808 = vpop.trf.xlu0
        %v1809 = vpop.trf.xlu0
        %v1810 = vpop.trf.xlu0
        %v1811 = vpop.trf.xlu0
        %v1812 = vpop.trf.xlu0
        %v1813 = vpop.trf.xlu0
        %v1814 = vpop.trf.xlu0
        %v1815 = vpop.trf.xlu0
        %v1816 = vlaneseq
        %v1817 = vshrl.u32 %v1816, 7
        %v1818 = vsub.s32 6, %v1817
        %v1819 = vrot.slane %v426, %v1818
        %v1820 = vmul.f32 %v1740, %v1819
        %v1821 = vmul.f32 %v1741, %v1819
        %v1822 = vmul.f32 %v1742, %v1819
        %v1823 = vmul.f32 %v1743, %v1819
        %v1824 = vmul.f32 %v1744, %v1819
        %v1825 = vmul.f32 %v1745, %v1819
        %v1826 = vmul.f32 %v1746, %v1819
        %v1827 = vmul.f32 %v1747, %v1819
        %v1828 = vsel %vm448, %v1820, 0.0
        %1829 = vadd.xlane.f32.xlu0 %v1828
        %v1830 = vpop.xlane.xlu0 %1829
        %v1831 = vsel %vm448, %v1821, 0.0
        %1832 = vadd.xlane.f32.xlu0 %v1831
        %v1833 = vpop.xlane.xlu0 %1832
        %v1834 = vsel %vm448, %v1822, 0.0
        %1835 = vadd.xlane.f32.xlu0 %v1834
        %v1836 = vpop.xlane.xlu0 %1835
        %v1837 = vsel %vm448, %v1823, 0.0
        %1838 = vadd.xlane.f32.xlu0 %v1837
        %v1839 = vpop.xlane.xlu0 %1838
        %v1840 = vsel %vm448, %v1824, 0.0
        %1841 = vadd.xlane.f32.xlu0 %v1840
        %v1842 = vpop.xlane.xlu0 %1841
        %v1843 = vsel %vm448, %v1825, 0.0
        %1844 = vadd.xlane.f32.xlu0 %v1843
        %v1845 = vpop.xlane.xlu0 %1844
        %v1846 = vsel %vm448, %v1826, 0.0
        %1847 = vadd.xlane.f32.xlu0 %v1846
        %v1848 = vpop.xlane.xlu0 %1847
        %v1849 = vsel %vm448, %v1827, 0.0
        %1850 = vadd.xlane.f32.xlu0 %v1849
        %v1851 = vpop.xlane.xlu0 %1850
        %v1852 = vlaneseq
        %v1853 = vshrl.u32 %v1852, 7
        %v1854 = vsub.s32 6, %v1853
        %v1855 = vrot.slane %v422, %v1854
        %v1856 = vmul.f32 %v1740, %v1855
        %v1857 = vmul.f32 %v1741, %v1855
        %v1858 = vmul.f32 %v1742, %v1855
        %v1859 = vmul.f32 %v1743, %v1855
        %v1860 = vmul.f32 %v1744, %v1855
        %v1861 = vmul.f32 %v1745, %v1855
        %v1862 = vmul.f32 %v1746, %v1855
        %v1863 = vmul.f32 %v1747, %v1855
        %v1864 = vlaneseq
        %v1865 = vshrl.u32 %v1864, 7
        %v1866 = vsub.s32 6, %v1865
        %v1867 = vrot.slane %v427, %v1866
        %v1868 = vmul.f32 %v1830, %v1867
        %v1869 = vmul.f32 %v1833, %v1867
        %v1870 = vmul.f32 %v1836, %v1867
        %v1871 = vmul.f32 %v1839, %v1867
        %v1872 = vmul.f32 %v1842, %v1867
        %v1873 = vmul.f32 %v1845, %v1867
        %v1874 = vmul.f32 %v1848, %v1867
        %v1875 = vmul.f32 %v1851, %v1867
        %v1876 = vadd.f32 %v1856, %v1868
        %v1877 = vadd.f32 %v1857, %v1869
        %v1878 = vadd.f32 %v1858, %v1870
        %v1879 = vadd.f32 %v1859, %v1871
        %v1880 = vadd.f32 %v1860, %v1872
        %v1881 = vadd.f32 %v1861, %v1873
        %v1882 = vadd.f32 %v1862, %v1874
        %v1883 = vadd.f32 %v1863, %v1875
        %v1884 = vrot.slane %v425, 6
        %1886 = vxpose.xlu0.b32.start [1/16] %v1884, 128
        %1887 = vxpose.xlu0.b32.cont [2/16] 0.0, 128
        %1888 = vxpose.xlu0.b32.cont [3/16] 0.0, 128
        %1889 = vxpose.xlu0.b32.cont [4/16] 0.0, 128
        %1890 = vxpose.xlu0.b32.cont [5/16] 0.0, 128
        %1891 = vxpose.xlu0.b32.cont [6/16] 0.0, 128
        %1892 = vxpose.xlu0.b32.cont [7/16] 0.0, 128
        %1893 = vxpose.xlu0.b32.cont [8/16] 0.0, 128
        %1894 = vxpose.xlu0.b32.cont [9/16] 0.0, 128
        %1895 = vxpose.xlu0.b32.cont [10/16] 0.0, 128
        %1896 = vxpose.xlu0.b32.cont [11/16] 0.0, 128
        %1897 = vxpose.xlu0.b32.cont [12/16] 0.0, 128
        %1898 = vxpose.xlu0.b32.cont [13/16] 0.0, 128
        %1899 = vxpose.xlu0.b32.cont [14/16] 0.0, 128
        %1900 = vxpose.xlu0.b32.cont [15/16] 0.0, 128
        %1901 = vxpose.xlu0.b32.end [16/16] 0.0, 128
        %v1902 = vpop.trf.xlu0
        %v1903 = vpop.trf.xlu0
        %v1904 = vpop.trf.xlu0
        %v1905 = vpop.trf.xlu0
        %v1906 = vpop.trf.xlu0
        %v1907 = vpop.trf.xlu0
        %v1908 = vpop.trf.xlu0
        %v1909 = vpop.trf.xlu0
        %v1910 = vpop.trf.xlu0
        %v1911 = vpop.trf.xlu0
        %v1912 = vpop.trf.xlu0
        %v1913 = vpop.trf.xlu0
        %v1914 = vpop.trf.xlu0
        %v1915 = vpop.trf.xlu0
        %v1916 = vpop.trf.xlu0
        %v1917 = vpop.trf.xlu0
        %1919 = vset.pattern.permute.xlu0 0
        %1920 = vperm.xlu0 %1919, %v1902
        %v1921 = vpop.permute.xlu0 %1920
        %1924 = vset.pattern.permute.xlu0 0
        %1925 = vperm.xlu0 %1924, %v1903
        %v1926 = vpop.permute.xlu0 %1925
        %1929 = vset.pattern.permute.xlu0 0
        %1930 = vperm.xlu0 %1929, %v1904
        %v1931 = vpop.permute.xlu0 %1930
        %1934 = vset.pattern.permute.xlu0 0
        %1935 = vperm.xlu0 %1934, %v1905
        %v1936 = vpop.permute.xlu0 %1935
        %1939 = vset.pattern.permute.xlu0 0
        %1940 = vperm.xlu0 %1939, %v1906
        %v1941 = vpop.permute.xlu0 %1940
        %1944 = vset.pattern.permute.xlu0 0
        %1945 = vperm.xlu0 %1944, %v1907
        %v1946 = vpop.permute.xlu0 %1945
        %1949 = vset.pattern.permute.xlu0 0
        %1950 = vperm.xlu0 %1949, %v1908
        %v1951 = vpop.permute.xlu0 %1950
        %1954 = vset.pattern.permute.xlu0 0
        %1955 = vperm.xlu0 %1954, %v1909
        %v1956 = vpop.permute.xlu0 %1955
        %v1958 = vlaneseq
        %v1959 = vshrl.u32 %v1958, 7
        %v1960 = vsub.s32 6, %v1959
        %v1961 = vrot.slane %v424, %v1960
        %v1962 = vmul.f32 %v1921, %v1961
        %v1963 = vmul.f32 %v1926, %v1961
        %v1964 = vmul.f32 %v1931, %v1961
        %v1965 = vmul.f32 %v1936, %v1961
        %v1966 = vmul.f32 %v1941, %v1961
        %v1967 = vmul.f32 %v1946, %v1961
        %v1968 = vmul.f32 %v1951, %v1961
        %v1969 = vmul.f32 %v1956, %v1961
        %v1970 = vadd.f32 %v1876, %v1962
        %v1971 = vadd.f32 %v1877, %v1963
        %v1972 = vadd.f32 %v1878, %v1964
        %v1973 = vadd.f32 %v1879, %v1965
        %v1974 = vadd.f32 %v1880, %v1966
        %v1975 = vadd.f32 %v1881, %v1967
        %v1976 = vadd.f32 %v1882, %v1968
        %v1977 = vadd.f32 %v1883, %v1969
        %v1978 = vlaneseq
        %v1979 = vshrl.u32 %v1978, 7
        %v1980 = vsub.s32 6, %v1979
        %v1981 = vrot.slane %v423, %v1980
        %v1982 = vmul.f32 %v1970, %v1981
        %v1983 = vmul.f32 %v1971, %v1981
        %v1984 = vmul.f32 %v1972, %v1981
        %v1985 = vmul.f32 %v1973, %v1981
        %v1986 = vmul.f32 %v1974, %v1981
        %v1987 = vmul.f32 %v1975, %v1981
        %v1988 = vmul.f32 %v1976, %v1981
        %v1989 = vmul.f32 %v1977, %v1981
        %v1990 = vsel %vm448, %v1982, 0.0
        %1991 = vadd.xlane.f32.xlu0 %v1990
        %v1992 = vpop.xlane.xlu0 %1991
        %v1993 = vsel %vm448, %v1983, 0.0
        %1994 = vadd.xlane.f32.xlu0 %v1993
        %v1995 = vpop.xlane.xlu0 %1994
        %v1996 = vsel %vm448, %v1984, 0.0
        %1997 = vadd.xlane.f32.xlu0 %v1996
        %v1998 = vpop.xlane.xlu0 %1997
        %v1999 = vsel %vm448, %v1985, 0.0
        %2000 = vadd.xlane.f32.xlu0 %v1999
        %v2001 = vpop.xlane.xlu0 %2000
        %v2002 = vsel %vm448, %v1986, 0.0
        %2003 = vadd.xlane.f32.xlu0 %v2002
        %v2004 = vpop.xlane.xlu0 %2003
        %v2005 = vsel %vm448, %v1987, 0.0
        %2006 = vadd.xlane.f32.xlu0 %v2005
        %v2007 = vpop.xlane.xlu0 %2006
        %v2008 = vsel %vm448, %v1988, 0.0
        %2009 = vadd.xlane.f32.xlu0 %v2008
        %v2010 = vpop.xlane.xlu0 %2009
        %v2011 = vsel %vm448, %v1989, 0.0
        %2012 = vadd.xlane.f32.xlu0 %v2011
        %v2013 = vpop.xlane.xlu0 %2012
        %2014 = vxpose.xlu0.b32.start [1/16] %v1992, 128
        %2015 = vxpose.xlu0.b32.cont [2/16] %v1995, 128
        %2016 = vxpose.xlu0.b32.cont [3/16] %v1998, 128
        %2017 = vxpose.xlu0.b32.cont [4/16] %v2001, 128
        %2018 = vxpose.xlu0.b32.cont [5/16] %v2004, 128
        %2019 = vxpose.xlu0.b32.cont [6/16] %v2007, 128
        %2020 = vxpose.xlu0.b32.cont [7/16] %v2010, 128
        %2021 = vxpose.xlu0.b32.cont [8/16] %v2013, 128
        %2022 = vxpose.xlu0.b32.cont [9/16] 0.0, 128
        %2023 = vxpose.xlu0.b32.cont [10/16] 0.0, 128
        %2024 = vxpose.xlu0.b32.cont [11/16] 0.0, 128
        %2025 = vxpose.xlu0.b32.cont [12/16] 0.0, 128
        %2026 = vxpose.xlu0.b32.cont [13/16] 0.0, 128
        %2027 = vxpose.xlu0.b32.cont [14/16] 0.0, 128
        %2028 = vxpose.xlu0.b32.cont [15/16] 0.0, 128
        %2029 = vxpose.xlu0.b32.end [16/16] 0.0, 128
        %v2030 = vpop.trf.xlu0
        %v2031 = vpop.trf.xlu0
        %v2032 = vpop.trf.xlu0
        %v2033 = vpop.trf.xlu0
        %v2034 = vpop.trf.xlu0
        %v2035 = vpop.trf.xlu0
        %v2036 = vpop.trf.xlu0
        %v2037 = vpop.trf.xlu0
        %v2038 = vpop.trf.xlu0
        %v2039 = vpop.trf.xlu0
        %v2040 = vpop.trf.xlu0
        %v2041 = vpop.trf.xlu0
        %v2042 = vpop.trf.xlu0
        %v2043 = vpop.trf.xlu0
        %v2044 = vpop.trf.xlu0
        %v2045 = vpop.trf.xlu0
        %v2046 = vlaneseq
        %v2047 = vshrl.u32 %v2046, 7
        %v2048 = vsub.s32 7, %v2047
        %v2049 = vrot.slane %v426, %v2048
        %v2050 = vmul.f32 %v1970, %v2049
        %v2051 = vmul.f32 %v1971, %v2049
        %v2052 = vmul.f32 %v1972, %v2049
        %v2053 = vmul.f32 %v1973, %v2049
        %v2054 = vmul.f32 %v1974, %v2049
        %v2055 = vmul.f32 %v1975, %v2049
        %v2056 = vmul.f32 %v1976, %v2049
        %v2057 = vmul.f32 %v1977, %v2049
        %v2058 = vsel %vm448, %v2050, 0.0
        %2059 = vadd.xlane.f32.xlu0 %v2058
        %v2060 = vpop.xlane.xlu0 %2059
        %v2061 = vsel %vm448, %v2051, 0.0
        %2062 = vadd.xlane.f32.xlu0 %v2061
        %v2063 = vpop.xlane.xlu0 %2062
        %v2064 = vsel %vm448, %v2052, 0.0
        %2065 = vadd.xlane.f32.xlu0 %v2064
        %v2066 = vpop.xlane.xlu0 %2065
        %v2067 = vsel %vm448, %v2053, 0.0
        %2068 = vadd.xlane.f32.xlu0 %v2067
        %v2069 = vpop.xlane.xlu0 %2068
        %v2070 = vsel %vm448, %v2054, 0.0
        %2071 = vadd.xlane.f32.xlu0 %v2070
        %v2072 = vpop.xlane.xlu0 %2071
        %v2073 = vsel %vm448, %v2055, 0.0
        %2074 = vadd.xlane.f32.xlu0 %v2073
        %v2075 = vpop.xlane.xlu0 %2074
        %v2076 = vsel %vm448, %v2056, 0.0
        %2077 = vadd.xlane.f32.xlu0 %v2076
        %v2078 = vpop.xlane.xlu0 %2077
        %v2079 = vsel %vm448, %v2057, 0.0
        %2080 = vadd.xlane.f32.xlu0 %v2079
        %v2081 = vpop.xlane.xlu0 %2080
        %v2082 = vlaneseq
        %v2083 = vshrl.u32 %v2082, 7
        %v2084 = vsub.s32 7, %v2083
        %v2085 = vrot.slane %v422, %v2084
        %v2086 = vmul.f32 %v1970, %v2085
        %v2087 = vmul.f32 %v1971, %v2085
        %v2088 = vmul.f32 %v1972, %v2085
        %v2089 = vmul.f32 %v1973, %v2085
        %v2090 = vmul.f32 %v1974, %v2085
        %v2091 = vmul.f32 %v1975, %v2085
        %v2092 = vmul.f32 %v1976, %v2085
        %v2093 = vmul.f32 %v1977, %v2085
        %v2094 = vlaneseq
        %v2095 = vshrl.u32 %v2094, 7
        %v2096 = vsub.s32 7, %v2095
        %v2097 = vrot.slane %v427, %v2096
        %v2098 = vmul.f32 %v2060, %v2097
        %v2099 = vmul.f32 %v2063, %v2097
        %v2100 = vmul.f32 %v2066, %v2097
        %v2101 = vmul.f32 %v2069, %v2097
        %v2102 = vmul.f32 %v2072, %v2097
        %v2103 = vmul.f32 %v2075, %v2097
        %v2104 = vmul.f32 %v2078, %v2097
        %v2105 = vmul.f32 %v2081, %v2097
        %v2106 = vadd.f32 %v2086, %v2098
        %v2107 = vadd.f32 %v2087, %v2099
        %v2108 = vadd.f32 %v2088, %v2100
        %v2109 = vadd.f32 %v2089, %v2101
        %v2110 = vadd.f32 %v2090, %v2102
        %v2111 = vadd.f32 %v2091, %v2103
        %v2112 = vadd.f32 %v2092, %v2104
        %v2113 = vadd.f32 %v2093, %v2105
        %v2114 = vrot.slane %v425, 7
        %2116 = vxpose.xlu0.b32.start [1/16] %v2114, 128
        %2117 = vxpose.xlu0.b32.cont [2/16] 0.0, 128
        %2118 = vxpose.xlu0.b32.cont [3/16] 0.0, 128
        %2119 = vxpose.xlu0.b32.cont [4/16] 0.0, 128
        %2120 = vxpose.xlu0.b32.cont [5/16] 0.0, 128
        %2121 = vxpose.xlu0.b32.cont [6/16] 0.0, 128
        %2122 = vxpose.xlu0.b32.cont [7/16] 0.0, 128
        %2123 = vxpose.xlu0.b32.cont [8/16] 0.0, 128
        %2124 = vxpose.xlu0.b32.cont [9/16] 0.0, 128
        %2125 = vxpose.xlu0.b32.cont [10/16] 0.0, 128
        %2126 = vxpose.xlu0.b32.cont [11/16] 0.0, 128
        %2127 = vxpose.xlu0.b32.cont [12/16] 0.0, 128
        %2128 = vxpose.xlu0.b32.cont [13/16] 0.0, 128
        %2129 = vxpose.xlu0.b32.cont [14/16] 0.0, 128
        %2130 = vxpose.xlu0.b32.cont [15/16] 0.0, 128
        %2131 = vxpose.xlu0.b32.end [16/16] 0.0, 128
        %v2132 = vpop.trf.xlu0
        %v2133 = vpop.trf.xlu0
        %v2134 = vpop.trf.xlu0
        %v2135 = vpop.trf.xlu0
        %v2136 = vpop.trf.xlu0
        %v2137 = vpop.trf.xlu0
        %v2138 = vpop.trf.xlu0
        %v2139 = vpop.trf.xlu0
        %v2140 = vpop.trf.xlu0
        %v2141 = vpop.trf.xlu0
        %v2142 = vpop.trf.xlu0
        %v2143 = vpop.trf.xlu0
        %v2144 = vpop.trf.xlu0
        %v2145 = vpop.trf.xlu0
        %v2146 = vpop.trf.xlu0
        %v2147 = vpop.trf.xlu0
        %2149 = vset.pattern.permute.xlu0 0
        %2150 = vperm.xlu0 %2149, %v2132
        %v2151 = vpop.permute.xlu0 %2150
        %2154 = vset.pattern.permute.xlu0 0
        %2155 = vperm.xlu0 %2154, %v2133
        %v2156 = vpop.permute.xlu0 %2155
        %2159 = vset.pattern.permute.xlu0 0
        %2160 = vperm.xlu0 %2159, %v2134
        %v2161 = vpop.permute.xlu0 %2160
        %2164 = vset.pattern.permute.xlu0 0
        %2165 = vperm.xlu0 %2164, %v2135
        %v2166 = vpop.permute.xlu0 %2165
        %2169 = vset.pattern.permute.xlu0 0
        %2170 = vperm.xlu0 %2169, %v2136
        %v2171 = vpop.permute.xlu0 %2170
        %2174 = vset.pattern.permute.xlu0 0
        %2175 = vperm.xlu0 %2174, %v2137
        %v2176 = vpop.permute.xlu0 %2175
        %2179 = vset.pattern.permute.xlu0 0
        %2180 = vperm.xlu0 %2179, %v2138
        %v2181 = vpop.permute.xlu0 %2180
        %2184 = vset.pattern.permute.xlu0 0
        %2185 = vperm.xlu0 %2184, %v2139
        %v2186 = vpop.permute.xlu0 %2185
        %v2188 = vlaneseq
        %v2189 = vshrl.u32 %v2188, 7
        %v2190 = vsub.s32 7, %v2189
        %v2191 = vrot.slane %v424, %v2190
        %v2192 = vmul.f32 %v2151, %v2191
        %v2193 = vmul.f32 %v2156, %v2191
        %v2194 = vmul.f32 %v2161, %v2191
        %v2195 = vmul.f32 %v2166, %v2191
        %v2196 = vmul.f32 %v2171, %v2191
        %v2197 = vmul.f32 %v2176, %v2191
        %v2198 = vmul.f32 %v2181, %v2191
        %v2199 = vmul.f32 %v2186, %v2191
        %v2200 = vadd.f32 %v2106, %v2192
        %v2201 = vadd.f32 %v2107, %v2193
        %v2202 = vadd.f32 %v2108, %v2194
        %v2203 = vadd.f32 %v2109, %v2195
        %v2204 = vadd.f32 %v2110, %v2196
        %v2205 = vadd.f32 %v2111, %v2197
        %v2206 = vadd.f32 %v2112, %v2198
        %v2207 = vadd.f32 %v2113, %v2199
        %v2208 = vlaneseq
        %v2209 = vshrl.u32 %v2208, 7
        %v2210 = vsub.s32 7, %v2209
        %v2211 = vrot.slane %v423, %v2210
        %v2212 = vmul.f32 %v2200, %v2211
        %v2213 = vmul.f32 %v2201, %v2211
        %v2214 = vmul.f32 %v2202, %v2211
        %v2215 = vmul.f32 %v2203, %v2211
        %v2216 = vmul.f32 %v2204, %v2211
        %v2217 = vmul.f32 %v2205, %v2211
        %v2218 = vmul.f32 %v2206, %v2211
        %v2219 = vmul.f32 %v2207, %v2211
        %v2220 = vsel %vm448, %v2212, 0.0
        %2221 = vadd.xlane.f32.xlu0 %v2220
        %v2222 = vpop.xlane.xlu0 %2221
        %v2223 = vsel %vm448, %v2213, 0.0
        %2224 = vadd.xlane.f32.xlu0 %v2223
        %v2225 = vpop.xlane.xlu0 %2224
        %v2226 = vsel %vm448, %v2214, 0.0
        %2227 = vadd.xlane.f32.xlu0 %v2226
        %v2228 = vpop.xlane.xlu0 %2227
        %v2229 = vsel %vm448, %v2215, 0.0
        %2230 = vadd.xlane.f32.xlu0 %v2229
        %v2231 = vpop.xlane.xlu0 %2230
        %v2232 = vsel %vm448, %v2216, 0.0
        %2233 = vadd.xlane.f32.xlu0 %v2232
        %v2234 = vpop.xlane.xlu0 %2233
        %v2235 = vsel %vm448, %v2217, 0.0
        %2236 = vadd.xlane.f32.xlu0 %v2235
        %v2237 = vpop.xlane.xlu0 %2236
        %v2238 = vsel %vm448, %v2218, 0.0
        %2239 = vadd.xlane.f32.xlu0 %v2238
        %v2240 = vpop.xlane.xlu0 %2239
        %v2241 = vsel %vm448, %v2219, 0.0
        %2242 = vadd.xlane.f32.xlu0 %v2241
        %v2243 = vpop.xlane.xlu0 %2242
        %2244 = vxpose.xlu0.b32.start [1/16] %v2222, 128
        %2245 = vxpose.xlu0.b32.cont [2/16] %v2225, 128
        %2246 = vxpose.xlu0.b32.cont [3/16] %v2228, 128
        %2247 = vxpose.xlu0.b32.cont [4/16] %v2231, 128
        %2248 = vxpose.xlu0.b32.cont [5/16] %v2234, 128
        %2249 = vxpose.xlu0.b32.cont [6/16] %v2237, 128
        %2250 = vxpose.xlu0.b32.cont [7/16] %v2240, 128
        %2251 = vxpose.xlu0.b32.cont [8/16] %v2243, 128
        %2252 = vxpose.xlu0.b32.cont [9/16] 0.0, 128
        %2253 = vxpose.xlu0.b32.cont [10/16] 0.0, 128
        %2254 = vxpose.xlu0.b32.cont [11/16] 0.0, 128
        %2255 = vxpose.xlu0.b32.cont [12/16] 0.0, 128
        %2256 = vxpose.xlu0.b32.cont [13/16] 0.0, 128
        %2257 = vxpose.xlu0.b32.cont [14/16] 0.0, 128
        %2258 = vxpose.xlu0.b32.cont [15/16] 0.0, 128
        %2259 = vxpose.xlu0.b32.end [16/16] 0.0, 128
        %v2260 = vpop.trf.xlu0
        %v2261 = vpop.trf.xlu0
        %v2262 = vpop.trf.xlu0
        %v2263 = vpop.trf.xlu0
        %v2264 = vpop.trf.xlu0
        %v2265 = vpop.trf.xlu0
        %v2266 = vpop.trf.xlu0
        %v2267 = vpop.trf.xlu0
        %v2268 = vpop.trf.xlu0
        %v2269 = vpop.trf.xlu0
        %v2270 = vpop.trf.xlu0
        %v2271 = vpop.trf.xlu0
        %v2272 = vpop.trf.xlu0
        %v2273 = vpop.trf.xlu0
        %v2274 = vpop.trf.xlu0
        %v2275 = vpop.trf.xlu0
        %v2277 = vrot.slane %v880, 7
        %v2280 = vrot.slane %v1110, 6
        %v2283 = vrot.slane %v1340, 5
        %v2286 = vrot.slane %v1570, 4
        %v2289 = vrot.slane %v1800, 3
        %v2292 = vrot.slane %v2030, 2
        %v2295 = vrot.slane %v2260, 1
        %vm2297 = vcmask 1040384
        %v2298 = vsel %vm2297, %v649, %v2277
        %vm2299 = vcmask 1041408
        %v2300 = vsel %vm2299, %v2298, %v2280
        %vm2301 = vcmask 1042432
        %v2302 = vsel %vm2301, %v2300, %v2283
        %vm2303 = vcmask 1043456
        %v2304 = vsel %vm2303, %v2302, %v2286
        %vm2305 = vcmask 1044480
        %v2306 = vsel %vm2305, %v2304, %v2289
        %vm2307 = vcmask 1045504
        %v2308 = vsel %vm2307, %v2306, %v2292
        %vm2309 = vcmask 1046528
        %v2310 = vsel %vm2309, %v2308, %v2295
        %2311 = vst.msk [vmem:[%s416] sm:$0xff] %vm448, %v2310
        %2312 = vst.msk [vmem:[%s383] sm:$0xff] %vm448, %v2200
        %2313 = vst.msk [vmem:[%s383 + $0x8] sm:$0xff] %vm448, %v2201
        %2314 = vst.msk [vmem:[%s383 + $0x10] sm:$0xff] %vm448, %v2202
        %2315 = vst.msk [vmem:[%s383 + $0x18] sm:$0xff] %vm448, %v2203
        %2316 = vst.msk [vmem:[%s383 + $0x20] sm:$0xff] %vm448, %v2204
        %2317 = vst.msk [vmem:[%s383 + $0x28] sm:$0xff] %vm448, %v2205
        %2318 = vst.msk [vmem:[%s383 + $0x30] sm:$0xff] %vm448, %v2206
        %2319 = vst.msk [vmem:[%s383 + $0x38] sm:$0xff] %vm448, %v2207
        %p2320 = scmp.lt.s32.totalorder %s23, 3
        %s2321 = scalar_select %p2320, %s23, 3
        %s2322 = smul.addr %s2321, 8
        %s2323 = scalar_lea.vmem %s7, %s2322
        %s2324 = sand.u32 %s239, 1
        %s2325 = scalar_lea.sflag [#allocation3], %s2324
        %s2326 = sand.u32 %s239, 1
        %s2327 = smul.addr %s2326, 64
        %s2328 = scalar_lea.vmem [#allocation2], %s2327
        // Predicated region
        $region49: #{rwkv7_block_forward.18} parent=47 // pred_check
          %p2329 = pneg %p223
        $region50: #{rwkv7_block_forward.18} parent=47 // pred_check_branch
          %2331 = sbr.rel (%p2329) target = $region52
        $region51: #{rwkv7_block_forward.18} parent=47 // pred_region
          _
        $region52: #{rwkv7_block_forward.18} parent=47 // pred_fallthru
          _
        // Predicated region
        $region53: #{rwkv7_block_forward.18} parent=47 // pred_check
          %p2332 = pneg %p249
        $region54: #{rwkv7_block_forward.18} parent=47 // pred_check_branch
          %2334 = sbr.rel (%p2332) target = $region56
        $region55: #{rwkv7_block_forward.18} parent=47 // pred_region
          %s2336 = ssub.s32 1024, 1024
          %2337 = vsyncadd %s2325, %s2336
          %s2338 = smul.addr %s23, 8
          %s2339 = smul.addr %s2338, 128
          %s2340 = scalar_lea.hbm %s8, %s2339
          %s2341 = sshll.u32 %s2328, 4
          %s2342 = int_to_ptr.vmem [resolvable:$true] %s2341
          %2347 = dma.vmem_to_hbm [thread:$0]  %s2342, 1024, %s2340, %s2325, 128, 128, 8
        $region56: #{rwkv7_block_forward.18} parent=47 // pred_fallthru
          _
      $region48: #{rwkv7_block_forward.18} parent=5 // pred_fallthru
        _
      %p2348 = scmp.le.s32.totalorder 2, %s18
      // Predicated region
      $region57: #{rwkv7_block_forward.18} parent=5 // pred_check
        %p2349 = pneg %p2348
      $region58: #{rwkv7_block_forward.18} parent=5 // pred_check_branch
        %2351 = sbr.rel (%p2349) target = $region60
      $region59: #{rwkv7_block_forward.18} parent=5 // pred_region
        %s2352 = ssub.s32 %s18, 2
        // Predicated region
        $region61: #{rwkv7_block_forward.18} parent=59 // pred_check
          %p2353 = pneg %p229
        $region62: #{rwkv7_block_forward.18} parent=59 // pred_check_branch
          %2355 = sbr.rel (%p2353) target = $region64
        $region63: #{rwkv7_block_forward.18} parent=59 // pred_region
          %p2356 = scmp.lt.s32.totalorder %s24, 3
          %s2357 = scalar_select %p2356, %s24, 3
          %s2358 = smul.addr %s2357, 8
          %s2359 = scalar_lea.vmem %s7, %s2358
        $region64: #{rwkv7_block_forward.18} parent=59 // pred_fallthru
          _
        // Predicated region
        $region65: #{rwkv7_block_forward.18} parent=59 // pred_check
          %p2360 = pneg %p255
        $region66: #{rwkv7_block_forward.18} parent=59 // pred_check_branch
          %2362 = sbr.rel (%p2360) target = $region68
        $region67: #{rwkv7_block_forward.18} parent=59 // pred_region
          %s2363 = sand.u32 %s240, 1
          %s2364 = scalar_lea.sflag [#allocation3], %s2363
          %s2365 = sand.u32 %s240, 1
          %s2366 = smul.addr %s2365, 64
          %s2367 = scalar_lea.vmem [#allocation2], %s2366
          %2368 = dma.done %s2364, 1024
        $region68: #{rwkv7_block_forward.18} parent=59 // pred_fallthru
          _
      $region60: #{rwkv7_block_forward.18} parent=5 // pred_fallthru
        _
    $region6: #{rwkv7_block_forward.18} parent=1 // loop_footer
      %s22 = sadd.s32 1, %s18
    $region7: #{rwkv7_block_forward.18} parent=1 // loop_footer_branch
      %17 = sbr.rel target = $region3
    $region8: #{rwkv7_block_forward.18} parent=1 // loop_exit
      _
    %2369 = vsyncpa [#allocation3], 1
    %s2370 = scalar_lea.sflag [#allocation3], 1
    %2371 = vsyncpa %s2370, 1

// kernel: rwkv7_block_forward.23
$region0: #{rwkv7_block_forward.23}
  #allocation0 [shape = 'u32[]', space=smem, size = 0x4, offset = 0x4, fixed_abs, tag = 'smem constant byte address 0x4 - core index']
  #allocation1 [shape = 'u32[144,128]{1,0:T(1,128)}', space=vmem, size = 0x12000, scoped, tag = 'internal scratch']
  #allocation2 [shape = 'f32[16,128]{1,0:T(8,128)}', space=vmem, size = 0x2000, scoped, tag = 'scratch operand']
  %s0 = inlined_call_operand.vmem [shape: bf16[16,512], index: 0, kind: input, shape index: {}]
  %s1 = inlined_call_operand.vmem [shape: bf16[512,128], index: 1, kind: input, shape index: {}]
  %s2 = inlined_call_operand.vmem [shape: f32[16,128], index: 2, kind: output, shape index: {}]
  %s3 = sld [smem:[#allocation0]]
  $region26: #{rwkv7_block_forward.23} parent=0
    _
  %s5 = ssub.s32 1, %s3
  %s6 = scalar_select 0, %s5, %s3
  // Predicated region
  $region2: #{rwkv7_block_forward.23} parent=0 // pred_check
    _
  $region3: #{rwkv7_block_forward.23} parent=0 // pred_check_branch
    %8 = sbr.rel (0) target = $region5
  $region4: #{rwkv7_block_forward.23} parent=0 // pred_region
    _
  $region5: #{rwkv7_block_forward.23} parent=0 // pred_fallthru
    _
  // Predicated region
  $region6: #{rwkv7_block_forward.23} parent=0 // pred_check
    _
  $region7: #{rwkv7_block_forward.23} parent=0 // pred_check_branch
    %10 = sbr.rel (0) target = $region9
  $region8: #{rwkv7_block_forward.23} parent=0 // pred_region
    _
  $region9: #{rwkv7_block_forward.23} parent=0 // pred_fallthru
    _
  %p12 = scmp.eq.s32.totalorder 0, 0
  // Predicated region
  $region10: #{rwkv7_block_forward.23} parent=0 // pred_check
    %p13 = pneg %p12
  $region11: #{rwkv7_block_forward.23} parent=0 // pred_check_branch
    %15 = sbr.rel (%p13) target = $region13
  $region12: #{rwkv7_block_forward.23} parent=0 // pred_region
    %16 = vst [vmem:[#allocation2] sm:$0xff] 0.0
    %17 = vst [vmem:[#allocation2 + $0x8] sm:$0xff] 0.0
  $region13: #{rwkv7_block_forward.23} parent=0 // pred_fallthru
    _
  %v18 = vld [vmem:[#allocation2] sm:$0xff]
  %v19 = vld [vmem:[#allocation2 + $0x8] sm:$0xff]
  %v20 = vld [vmem:[%s0] sm:$0xff]
  %v21 = vld [vmem:[%s0 + $0x8] sm:$0xff]
  %v22 = vld [vmem:[%s0 + $0x10] sm:$0xff]
  %v23 = vld [vmem:[%s0 + $0x18] sm:$0xff]
  %v24 = vld [vmem:[%s1] sm:$0xf]
  %v25 = vld [vmem:[%s1 + $0x4] sm:$0xf]
  %v26 = vld [vmem:[%s1 + $0x8] sm:$0xf]
  %v27 = vld [vmem:[%s1 + $0xc] sm:$0xf]
  %v28 = vld [vmem:[%s1 + $0x10] sm:$0xf]
  %v29 = vld [vmem:[%s1 + $0x14] sm:$0xf]
  %v30 = vld [vmem:[%s1 + $0x18] sm:$0xf]
  %v31 = vld [vmem:[%s1 + $0x1c] sm:$0xf]
  %v32 = vld [vmem:[%s1 + $0x20] sm:$0xf]
  %v33 = vld [vmem:[%s1 + $0x24] sm:$0xf]
  %v34 = vld [vmem:[%s1 + $0x28] sm:$0xf]
  %v35 = vld [vmem:[%s1 + $0x2c] sm:$0xf]
  %v36 = vld [vmem:[%s1 + $0x30] sm:$0xf]
  %v37 = vld [vmem:[%s1 + $0x34] sm:$0xf]
  %v38 = vld [vmem:[%s1 + $0x38] sm:$0xf]
  %v39 = vld [vmem:[%s1 + $0x3c] sm:$0xf]
  %v40 = vld [vmem:[%s1 + $0x40] sm:$0xf]
  %v41 = vld [vmem:[%s1 + $0x44] sm:$0xf]
  %v42 = vld [vmem:[%s1 + $0x48] sm:$0xf]
  %v43 = vld [vmem:[%s1 + $0x4c] sm:$0xf]
  %v44 = vld [vmem:[%s1 + $0x50] sm:$0xf]
  %v45 = vld [vmem:[%s1 + $0x54] sm:$0xf]
  %v46 = vld [vmem:[%s1 + $0x58] sm:$0xf]
  %v47 = vld [vmem:[%s1 + $0x5c] sm:$0xf]
  %v48 = vld [vmem:[%s1 + $0x60] sm:$0xf]
  %v49 = vld [vmem:[%s1 + $0x64] sm:$0xf]
  %v50 = vld [vmem:[%s1 + $0x68] sm:$0xf]
  %v51 = vld [vmem:[%s1 + $0x6c] sm:$0xf]
  %v52 = vld [vmem:[%s1 + $0x70] sm:$0xf]
  %v53 = vld [vmem:[%s1 + $0x74] sm:$0xf]
  %v54 = vld [vmem:[%s1 + $0x78] sm:$0xf]
  %v55 = vld [vmem:[%s1 + $0x7c] sm:$0xf]
  %v56 = vld [vmem:[%s1 + $0x80] sm:$0xf]
  %v57 = vld [vmem:[%s1 + $0x84] sm:$0xf]
  %v58 = vld [vmem:[%s1 + $0x88] sm:$0xf]
  %v59 = vld [vmem:[%s1 + $0x8c] sm:$0xf]
  %v60 = vld [vmem:[%s1 + $0x90] sm:$0xf]
  %v61 = vld [vmem:[%s1 + $0x94] sm:$0xf]
  %v62 = vld [vmem:[%s1 + $0x98] sm:$0xf]
  %v63 = vld [vmem:[%s1 + $0x9c] sm:$0xf]
  %v64 = vld [vmem:[%s1 + $0xa0] sm:$0xf]
  %v65 = vld [vmem:[%s1 + $0xa4] sm:$0xf]
  %v66 = vld [vmem:[%s1 + $0xa8] sm:$0xf]
  %v67 = vld [vmem:[%s1 + $0xac] sm:$0xf]
  %v68 = vld [vmem:[%s1 + $0xb0] sm:$0xf]
  %v69 = vld [vmem:[%s1 + $0xb4] sm:$0xf]
  %v70 = vld [vmem:[%s1 + $0xb8] sm:$0xf]
  %v71 = vld [vmem:[%s1 + $0xbc] sm:$0xf]
  %v72 = vld [vmem:[%s1 + $0xc0] sm:$0xf]
  %v73 = vld [vmem:[%s1 + $0xc4] sm:$0xf]
  %v74 = vld [vmem:[%s1 + $0xc8] sm:$0xf]
  %v75 = vld [vmem:[%s1 + $0xcc] sm:$0xf]
  %v76 = vld [vmem:[%s1 + $0xd0] sm:$0xf]
  %v77 = vld [vmem:[%s1 + $0xd4] sm:$0xf]
  %v78 = vld [vmem:[%s1 + $0xd8] sm:$0xf]
  %v79 = vld [vmem:[%s1 + $0xdc] sm:$0xf]
  %v80 = vld [vmem:[%s1 + $0xe0] sm:$0xf]
  %v81 = vld [vmem:[%s1 + $0xe4] sm:$0xf]
  %v82 = vld [vmem:[%s1 + $0xe8] sm:$0xf]
  %v83 = vld [vmem:[%s1 + $0xec] sm:$0xf]
  %v84 = vld [vmem:[%s1 + $0xf0] sm:$0xf]
  %v85 = vld [vmem:[%s1 + $0xf4] sm:$0xf]
  %v86 = vld [vmem:[%s1 + $0xf8] sm:$0xf]
  %v87 = vld [vmem:[%s1 + $0xfc] sm:$0xf]
  %v92 = vunpack.c.l.b16 %v20
  %v93 = vunpack.c.h.b16 %v20
  %v94 = vunpack.c.l.b16 %v21
  %v95 = vunpack.c.h.b16 %v21
  %v96 = vunpack.c.l.b16 %v22
  %v97 = vunpack.c.h.b16 %v22
  %v98 = vunpack.c.l.b16 %v23
  %v99 = vunpack.c.h.b16 %v23
  %v100 = vpack.c.b16 %v96, %v92
  %v101 = vpack.c.b16 %v97, %v93
  %v102 = vpack.c.b16 %v98, %v94
  %v103 = vpack.c.b16 %v99, %v95
  %v172 = vunpack.c.l.b16 %v24
  %v173 = vunpack.c.l.b16 %v25
  %v174 = vunpack.c.l.b16 %v26
  %v175 = vunpack.c.l.b16 %v27
  %v176 = vunpack.c.l.b16 %v28
  %v177 = vunpack.c.l.b16 %v29
  %v178 = vunpack.c.l.b16 %v30
  %v179 = vunpack.c.l.b16 %v31
  %v180 = vunpack.c.l.b16 %v32
  %v181 = vunpack.c.l.b16 %v33
  %v182 = vunpack.c.l.b16 %v34
  %v183 = vunpack.c.l.b16 %v35
  %v184 = vunpack.c.l.b16 %v36
  %v185 = vunpack.c.l.b16 %v37
  %v186 = vunpack.c.l.b16 %v38
  %v187 = vunpack.c.l.b16 %v39
  %v188 = vunpack.c.l.b16 %v40
  %v189 = vunpack.c.l.b16 %v41
  %v190 = vunpack.c.l.b16 %v42
  %v191 = vunpack.c.l.b16 %v43
  %v192 = vunpack.c.l.b16 %v44
  %v193 = vunpack.c.l.b16 %v45
  %v194 = vunpack.c.l.b16 %v46
  %v195 = vunpack.c.l.b16 %v47
  %v196 = vunpack.c.l.b16 %v48
  %v197 = vunpack.c.l.b16 %v49
  %v198 = vunpack.c.l.b16 %v50
  %v199 = vunpack.c.l.b16 %v51
  %v200 = vunpack.c.l.b16 %v52
  %v201 = vunpack.c.l.b16 %v53
  %v202 = vunpack.c.l.b16 %v54
  %v203 = vunpack.c.l.b16 %v55
  %v204 = vunpack.c.l.b16 %v56
  %v205 = vunpack.c.l.b16 %v57
  %v206 = vunpack.c.l.b16 %v58
  %v207 = vunpack.c.l.b16 %v59
  %v208 = vunpack.c.l.b16 %v60
  %v209 = vunpack.c.l.b16 %v61
  %v210 = vunpack.c.l.b16 %v62
  %v211 = vunpack.c.l.b16 %v63
  %v212 = vunpack.c.l.b16 %v64
  %v213 = vunpack.c.l.b16 %v65
  %v214 = vunpack.c.l.b16 %v66
  %v215 = vunpack.c.l.b16 %v67
  %v216 = vunpack.c.l.b16 %v68
  %v217 = vunpack.c.l.b16 %v69
  %v218 = vunpack.c.l.b16 %v70
  %v219 = vunpack.c.l.b16 %v71
  %v220 = vunpack.c.l.b16 %v72
  %v221 = vunpack.c.l.b16 %v73
  %v222 = vunpack.c.l.b16 %v74
  %v223 = vunpack.c.l.b16 %v75
  %v224 = vunpack.c.l.b16 %v76
  %v225 = vunpack.c.l.b16 %v77
  %v226 = vunpack.c.l.b16 %v78
  %v227 = vunpack.c.l.b16 %v79
  %v228 = vunpack.c.l.b16 %v80
  %v229 = vunpack.c.l.b16 %v81
  %v230 = vunpack.c.l.b16 %v82
  %v231 = vunpack.c.l.b16 %v83
  %v232 = vunpack.c.l.b16 %v84
  %v233 = vunpack.c.l.b16 %v85
  %v234 = vunpack.c.l.b16 %v86
  %v235 = vunpack.c.l.b16 %v87
  %v236 = vpack.c.b16 %v173, %v172
  %v237 = vpack.c.b16 %v175, %v174
  %v238 = vpack.c.b16 %v177, %v176
  %v239 = vpack.c.b16 %v179, %v178
  %v240 = vpack.c.b16 %v181, %v180
  %v241 = vpack.c.b16 %v183, %v182
  %v242 = vpack.c.b16 %v185, %v184
  %v243 = vpack.c.b16 %v187, %v186
  %v244 = vpack.c.b16 %v189, %v188
  %v245 = vpack.c.b16 %v191, %v190
  %v246 = vpack.c.b16 %v193, %v192
  %v247 = vpack.c.b16 %v195, %v194
  %v248 = vpack.c.b16 %v197, %v196
  %v249 = vpack.c.b16 %v199, %v198
  %v250 = vpack.c.b16 %v201, %v200
  %v251 = vpack.c.b16 %v203, %v202
  %v252 = vpack.c.b16 %v205, %v204
  %v253 = vpack.c.b16 %v207, %v206
  %v254 = vpack.c.b16 %v209, %v208
  %v255 = vpack.c.b16 %v211, %v210
  %v256 = vpack.c.b16 %v213, %v212
  %v257 = vpack.c.b16 %v215, %v214
  %v258 = vpack.c.b16 %v217, %v216
  %v259 = vpack.c.b16 %v219, %v218
  %v260 = vpack.c.b16 %v221, %v220
  %v261 = vpack.c.b16 %v223, %v222
  %v262 = vpack.c.b16 %v225, %v224
  %v263 = vpack.c.b16 %v227, %v226
  %v264 = vpack.c.b16 %v229, %v228
  %v265 = vpack.c.b16 %v231, %v230
  %v266 = vpack.c.b16 %v233, %v232
  %v267 = vpack.c.b16 %v235, %v234
  %300 = vmatprep.subr.bf16.mxu0 0
  %301 = vmatpush1.bf16.msra.mxu0 %v236
  %302 = vmatprep.subr.bf16.mxu0 0
  %303 = vmatpush1.bf16.msra.mxu0 %v237
  %304 = vmatprep.subr.bf16.mxu0 0
  %305 = vmatpush1.bf16.msra.mxu0 %v238
  %306 = vmatprep.subr.bf16.mxu0 0
  %307 = vmatpush1.bf16.msra.mxu0 %v239
  %308 = vmatprep.subr.bf16.mxu0 0
  %309 = vmatpush1.bf16.msra.mxu0 %v240
  %310 = vmatprep.subr.bf16.mxu0 0
  %311 = vmatpush1.bf16.msra.mxu0 %v241
  %312 = vmatprep.subr.bf16.mxu0 0
  %313 = vmatpush1.bf16.msra.mxu0 %v242
  %314 = vmatprep.subr.bf16.mxu0 0
  %315 = vmatpush1.bf16.msra.mxu0 %v243
  %316 = vmatprep.subr.bf16.mxu0 0
  %317 = vmatpush1.bf16.msra.mxu0 %v244
  %318 = vmatprep.subr.bf16.mxu0 0
  %319 = vmatpush1.bf16.msra.mxu0 %v245
  %320 = vmatprep.subr.bf16.mxu0 0
  %321 = vmatpush1.bf16.msra.mxu0 %v246
  %322 = vmatprep.subr.bf16.mxu0 0
  %323 = vmatpush1.bf16.msra.mxu0 %v247
  %324 = vmatprep.subr.bf16.mxu0 0
  %325 = vmatpush1.bf16.msra.mxu0 %v248
  %326 = vmatprep.subr.bf16.mxu0 0
  %327 = vmatpush1.bf16.msra.mxu0 %v249
  %328 = vmatprep.subr.bf16.mxu0 0
  %329 = vmatpush1.bf16.msra.mxu0 %v250
  %330 = vmatprep.subr.bf16.mxu0 0
  %331 = vmatpush1.bf16.msra.mxu0 %v251
  %332 = vmatprep.mubr.bf16.mxu0 %v101
  %333 = vmatmul.mubr.bf16.gmra.mrb[0].mxu0 %v100
  %v334 = vpop.f32.mrb[0].mxu0
  %v335 = vadd.f32 0.0, %v334
  %v336 = vpop.f32.mrb[0].mxu0
  %v337 = vpop.f32.mrb[0].mxu0
  %v338 = vadd.f32 0.0, %v337
  %v339 = vpop.f32.mrb[0].mxu0
  %340 = vdwg.mxu0
  %341 = vmatprep.subr.bf16.mxu0 0
  %342 = vmatpush1.bf16.msra.mxu0 %v252
  %343 = vmatprep.subr.bf16.mxu0 0
  %344 = vmatpush1.bf16.msra.mxu0 %v253
  %345 = vmatprep.subr.bf16.mxu0 0
  %346 = vmatpush1.bf16.msra.mxu0 %v254
  %347 = vmatprep.subr.bf16.mxu0 0
  %348 = vmatpush1.bf16.msra.mxu0 %v255
  %349 = vmatprep.subr.bf16.mxu0 0
  %350 = vmatpush1.bf16.msra.mxu0 %v256
  %351 = vmatprep.subr.bf16.mxu0 0
  %352 = vmatpush1.bf16.msra.mxu0 %v257
  %353 = vmatprep.subr.bf16.mxu0 0
  %354 = vmatpush1.bf16.msra.mxu0 %v258
  %355 = vmatprep.subr.bf16.mxu0 0
  %356 = vmatpush1.bf16.msra.mxu0 %v259
  %357 = vmatprep.subr.bf16.mxu0 0
  %358 = vmatpush1.bf16.msra.mxu0 %v260
  %359 = vmatprep.subr.bf16.mxu0 0
  %360 = vmatpush1.bf16.msra.mxu0 %v261
  %361 = vmatprep.subr.bf16.mxu0 0
  %362 = vmatpush1.bf16.msra.mxu0 %v262
  %363 = vmatprep.subr.bf16.mxu0 0
  %364 = vmatpush1.bf16.msra.mxu0 %v263
  %365 = vmatprep.subr.bf16.mxu0 0
  %366 = vmatpush1.bf16.msra.mxu0 %v264
  %367 = vmatprep.subr.bf16.mxu0 0
  %368 = vmatpush1.bf16.msra.mxu0 %v265
  %369 = vmatprep.subr.bf16.mxu0 0
  %370 = vmatpush1.bf16.msra.mxu0 %v266
  %371 = vmatprep.subr.bf16.mxu0 0
  %372 = vmatpush1.bf16.msra.mxu0 %v267
  %373 = vmatprep.mubr.bf16.mxu0 %v103
  %374 = vmatmul.mubr.bf16.gmra.mrb[0].mxu0 %v102
  %v375 = vpop.f32.mrb[0].mxu0
  %v376 = vadd.f32 %v335, %v375
  %v377 = vpop.f32.mrb[0].mxu0
  %v378 = vpop.f32.mrb[0].mxu0
  %v379 = vadd.f32 %v338, %v378
  %v380 = vpop.f32.mrb[0].mxu0
  %381 = vdwg.mxu0
  %v382 = vadd.f32 %v18, %v376
  %v383 = vadd.f32 %v19, %v379
  %384 = vst [vmem:[#allocation2] sm:$0xff] %v382
  %385 = vst [vmem:[#allocation2 + $0x8] sm:$0xff] %v383
  // Predicated region
  $region14: #{rwkv7_block_forward.23} parent=0 // pred_check
    %p386 = pneg %p12
  $region15: #{rwkv7_block_forward.23} parent=0 // pred_check_branch
    %388 = sbr.rel (%p386) target = $region17
  $region16: #{rwkv7_block_forward.23} parent=0 // pred_region
    %v389 = vld [vmem:[#allocation2] sm:$0xff]
    %v390 = vld [vmem:[#allocation2 + $0x8] sm:$0xff]
    %391 = vst [vmem:[%s2] sm:$0xff] %v389
    %392 = vst [vmem:[%s2 + $0x8] sm:$0xff] %v390
  $region17: #{rwkv7_block_forward.23} parent=0 // pred_fallthru
    _
  // Predicated region
  $region18: #{rwkv7_block_forward.23} parent=0 // pred_check
    _
  $region19: #{rwkv7_block_forward.23} parent=0 // pred_check_branch
    %394 = sbr.rel (0) target = $region21
  $region20: #{rwkv7_block_forward.23} parent=0 // pred_region
    _
  $region21: #{rwkv7_block_forward.23} parent=0 // pred_fallthru
    _
  // Predicated region
  $region22: #{rwkv7_block_forward.23} parent=0 // pred_check
    _
  $region23: #{rwkv7_block_forward.23} parent=0 // pred_check_branch
    %396 = sbr.rel (0) target = $region25
  $region24: #{rwkv7_block_forward.23} parent=0 // pred_region
    _
  $region25: #{rwkv7_block_forward.23} parent=0 // pred_fallthru
    _

</llo_original>
